<compile_context>
chip_gen: v7x
topology: tpu7x:2x2x1
jax: 0.10.0
libtpu: 0.0.40
codegen_flags: <defaults>
</compile_context>

<pallas_src>
import functools

import jax
import jax.numpy as jnp
from jax import lax
from jax.experimental import pallas as pl
from jax.experimental.pallas import tpu as pltpu


def _round_up(x, m):
    return (x + m - 1) // m * m


# ----------------------------------------------------------------------------
# Fused DRRN kernel (one grid step == one image, whole network in VMEM)
# ----------------------------------------------------------------------------
def _make_drrn_kernel(n_rb, n_ru, Cm, H, W, BASE, TOTI):
    H_p, W_p = H + 2, W + 2
    PER = H_p * W_p                      # flattened padded plane length
    RB1, RB2, EXIT = n_rb, n_rb + 1, n_rb + 2

    def kernel(x_ref, w_ref, b_ref, m_ref, o_ref, a_ref, t_ref):
        # Current image (halo + guards already zero) into scratch A; zero B.
        a_ref[...] = x_ref[0]
        t_ref[...] = jnp.zeros((Cm, TOTI), jnp.float32)
        interior = m_ref[...] > 0.5                         # (1, PER) bool

        def conv(src_ref, widx, relu):
            # 9 lane-shifted views of the padded flat plane (spatial on lanes)
            slabs = []
            for dy in range(3):
                for dx in range(3):
                    off = (dy - 1) * W_p + (dx - 1)
                    slabs.append(src_ref[:, BASE + off:BASE + off + PER])
            xcol = jnp.concatenate(slabs, axis=0)           # (9*Cm, PER)
            acc = jnp.dot(w_ref[widx], xcol,                # (Cm, 9*Cm)@(9*Cm, PER)
                          preferred_element_type=jnp.float32)
            acc = acc + b_ref[widx]                         # (Cm, 1) broadcast
            if relu:
                acc = jnp.maximum(acc, 0.0)
            return acc                                      # (Cm, PER)

        def store(dst_ref, val):
            # Keep the 1-pixel halo exactly zero so the next conv sees SAME pad.
            dst_ref[:, BASE:BASE + PER] = jnp.where(interior, val, 0.0)

        cur, other = a_ref, t_ref
        for i in range(n_rb):
            store(other, conv(cur, i, relu=True))           # entry_i + relu
            cur, other = other, cur                         # y lives in `cur`
            for _ in range(n_ru):                           # shared residual block
                store(other, conv(cur, RB1, relu=True))     # t = relu(conv1(y))
                v2 = conv(other, RB2, relu=False)           # conv2(t)
                store(cur, v2 + cur[:, BASE:BASE + PER])    # y = y + conv2(t)
        store(other, conv(cur, EXIT, relu=False))           # exit conv
        o_ref[0, :, :] = other[...]

    return kernel


def drrn_forward(x_nchw, params, n_rb, n_ru, filters):
    N, channel, H, W = x_nchw.shape
    Cm = max(channel, filters)                  # unified channel count (8)
    H_p, W_p = H + 2, W + 2
    PER = H_p * W_p                             # 324
    BASE = _round_up(W_p + 1, 128)              # left guard (>= max tap shift)
    TOTI = _round_up(BASE + PER + W_p + 1, 128) # flat buffer width (512)
    n_conv = n_rb + 3                           # entries + rb1 + rb2 + exit

    # ---- pack weights: HWIO -> (Cout, dy, dx, Cin) -> (Cm, 9*Cm), zero-padded
    def prep(wb):
        w, b = wb
        cin, cout = w.shape[2], w.shape[3]
        wp = jnp.zeros((3, 3, Cm, Cm), jnp.float32).at[:, :, :cin, :cout].set(w)
        wm = jnp.transpose(wp, (3, 0, 1, 2)).reshape(Cm, 9 * Cm)
        bp = jnp.zeros((Cm,), jnp.float32).at[:cout].set(b).reshape(Cm, 1)
        return wm, bp

    packed = [prep(params[f"entry{i}"]) for i in range(n_rb)]
    packed.append(prep(params["rb_conv1"]))
    packed.append(prep(params["rb_conv2"]))
    packed.append(prep(params["exit"]))
    w_all = jnp.stack([p[0] for p in packed])   # (n_conv, Cm, 9*Cm)
    b_all = jnp.stack([p[1] for p in packed])   # (n_conv, Cm, 1)

    # ---- interior mask over the flattened padded plane
    f = jnp.arange(PER)
    hh, ww = f // W_p, f % W_p
    mask = ((hh >= 1) & (hh <= H) & (ww >= 1) & (ww <= W))
    mask = mask.astype(jnp.float32).reshape(1, PER)

    # ---- pack input once: pad channels to Cm, 1-px halo, flatten, add guards
    xp = jnp.pad(x_nchw.astype(jnp.float32),
                 ((0, 0), (0, Cm - channel), (1, 1), (1, 1)))
    xf = xp.reshape(N, Cm, PER)
    xf = jnp.pad(xf, ((0, 0), (0, 0), (BASE, TOTI - BASE - PER)))

    kernel = _make_drrn_kernel(n_rb, n_ru, Cm, H, W, BASE, TOTI)
    out_flat = pl.pallas_call(
        kernel,
        out_shape=jax.ShapeDtypeStruct((N, Cm, TOTI), jnp.float32),
        grid=(N,),
        in_specs=[
            pl.BlockSpec((1, Cm, TOTI), lambda n: (n, 0, 0)),        # image
            pl.BlockSpec((n_conv, Cm, 9 * Cm), lambda n: (0, 0, 0)),  # weights
            pl.BlockSpec((n_conv, Cm, 1), lambda n: (0, 0, 0)),       # biases
            pl.BlockSpec((1, PER), lambda n: (0, 0)),                 # mask
        ],
        out_specs=pl.BlockSpec((1, Cm, TOTI), lambda n: (n, 0, 0)),
        scratch_shapes=[pltpu.VMEM((Cm, TOTI), jnp.float32),
                        pltpu.VMEM((Cm, TOTI), jnp.float32)],
        compiler_params=pltpu.CompilerParams(
            dimension_semantics=("parallel",)),
    )(xf, w_all, b_all, mask)

    out = out_flat[:, :channel, BASE:BASE + PER].reshape(N, channel, H_p, W_p)
    return out[:, :, 1:H + 1, 1:W + 1]          # interior, already NCHW


# ----------------------------------------------------------------------------
# Pure-JAX reference (lax.conv) for correctness checking
# ----------------------------------------------------------------------------
def _ref_conv(x_nhwc, w, b, relu=False, residual=None):
    out = lax.conv_general_dilated(
        x_nhwc, w, window_strides=(1, 1), padding="SAME",
        dimension_numbers=("NHWC", "HWIO", "NHWC"))
    out = out + b.reshape(1, 1, 1, -1)
    if relu:
        out = jnp.maximum(out, 0.0)
    if residual is not None:
        out = out + residual
    return out


def drrn_reference(x_nchw, params, n_rb, n_ru):
    x = jnp.transpose(x_nchw, (0, 2, 3, 1))
    w1, b1 = params["rb_conv1"]
    w2, b2 = params["rb_conv2"]
    for i in range(n_rb):
        we, be = params[f"entry{i}"]
        y = _ref_conv(x, we, be, relu=True)
        for _ in range(n_ru):
            t = _ref_conv(y, w1, b1, relu=True)
            y = _ref_conv(t, w2, b2, relu=False, residual=y)
        x = y
    wx, bx = params["exit"]
    out = _ref_conv(x, wx, bx, relu=False)
    return jnp.transpose(out, (0, 3, 1, 2))


# ----------------------------------------------------------------------------
# Deterministic parameter init (shapes follow the module's __init__)
# ----------------------------------------------------------------------------
def init_params(key, channel, n_rb, filters):
    params = {}

    def conv_p(k, cin, cout):
        kw, kb = jax.random.split(k)
        scale = 1.0 / jnp.sqrt(cin * 9.0)
        w = jax.random.normal(kw, (3, 3, cin, cout), jnp.float32) * scale
        b = jax.random.normal(kb, (cout,), jnp.float32) * 0.01
        return w, b

    keys = jax.random.split(key, n_rb + 3)
    params["entry0"] = conv_p(keys[0], channel, filters)
    for i in range(1, n_rb):
        params[f"entry{i}"] = conv_p(keys[i], filters, filters)
    params["rb_conv1"] = conv_p(keys[n_rb], filters, filters)
    params["rb_conv2"] = conv_p(keys[n_rb + 1], filters, filters)
    params["exit"] = conv_p(keys[n_rb + 2], filters, channel)
    return params


if __name__ == "__main__":
    # Drrn(channel=4, n_ru=2, n_rb=2, filters=8); input (2, 4, 16, 16) NCHW
    channel, n_ru, n_rb, filters = 4, 2, 2, 8
    N, H, W = 2, 16, 16

    key = jax.random.PRNGKey(0)
    kx, kp = jax.random.split(key)
    x = jax.random.normal(kx, (N, channel, H, W), jnp.float32)
    params = init_params(kp, channel, n_rb, filters)

    fwd = functools.partial(drrn_forward, n_rb=n_rb, n_ru=n_ru, filters=filters)
    out = jax.jit(fwd)(x, params)
    out = jax.block_until_ready(out)

    ref = drrn_reference(x, params, n_rb, n_ru)
    assert out.shape == (N, channel, H, W)
    err = float(jnp.max(jnp.abs(out - ref)))
    assert err < 1e-4, f"Pallas kernel mismatch vs reference: {err}"

    print("KERNEL_OK")
</pallas_src>

<mosaic_0001>
module attributes {stable_mosaic.version = 11 : i64} {
  func.func @kernel(%arg0: i32, %arg1: memref<1x8x512xf32, #tpu.memory_space<vmem>>, %arg2: memref<5x8x72xf32, #tpu.memory_space<vmem>>, %arg3: memref<5x8x1xf32, #tpu.memory_space<vmem>>, %arg4: memref<1x324xf32, #tpu.memory_space<vmem>>, %arg5: memref<1x8x512xf32, #tpu.memory_space<vmem>>, %arg6: memref<8x512xf32, #tpu.memory_space<vmem>>, %arg7: memref<8x512xf32, #tpu.memory_space<vmem>>) attributes {dimension_semantics = [#tpu.dimension_semantics<parallel>], iteration_bounds = array<i64: 2>, scalar_prefetch = 0 : i64, scratch_operands = 2 : i64, tpu.core_type = #tpu.core_type<tc>, window_params = [{transform_indices = @transform_0, window_bounds = array<i64: 1, 8, 512>}, {pipeline_mode = #tpu.pipeline_mode<synchronous>, transform_indices = @transform_1, window_bounds = array<i64: 5, 8, 72>}, {pipeline_mode = #tpu.pipeline_mode<synchronous>, transform_indices = @transform_2, window_bounds = array<i64: 5, 8, 1>}, {pipeline_mode = #tpu.pipeline_mode<synchronous>, transform_indices = @transform_3, window_bounds = array<i64: 1, 324>}, {transform_indices = @transform_4, window_bounds = array<i64: 1, 8, 512>}]} {
    %c0 = arith.constant 0 : index
    %c0_0 = arith.constant 0 : index
    %c0_1 = arith.constant 0 : index
    %0 = vector.load %arg1[%c0, %c0_0, %c0_1] : memref<1x8x512xf32, #tpu.memory_space<vmem>>, vector<1x8x512xf32>
    %1 = vector.shape_cast %0 : vector<1x8x512xf32> to vector<8x512xf32>
    %c0_2 = arith.constant 0 : index
    %c0_3 = arith.constant 0 : index
    %2 = vector.load %arg6[%c0_2, %c0_3] : memref<8x512xf32, #tpu.memory_space<vmem>>, vector<8x512xf32>
    tpu.vector_store %arg6[%c0_2, %c0_3], %1 {strides = array<i32>} : memref<8x512xf32, #tpu.memory_space<vmem>>, vector<8x512xf32>,
    %cst = arith.constant 0.000000e+00 : f32
    %3 = vector.broadcast %cst : f32 to vector<8x512xf32>
    %c0_4 = arith.constant 0 : index
    %c0_5 = arith.constant 0 : index
    %4 = vector.load %arg7[%c0_4, %c0_5] : memref<8x512xf32, #tpu.memory_space<vmem>>, vector<8x512xf32>
    tpu.vector_store %arg7[%c0_4, %c0_5], %3 {strides = array<i32>} : memref<8x512xf32, #tpu.memory_space<vmem>>, vector<8x512xf32>,
    %c0_6 = arith.constant 0 : index
    %c0_7 = arith.constant 0 : index
    %5 = vector.load %arg4[%c0_6, %c0_7] : memref<1x324xf32, #tpu.memory_space<vmem>>, vector<1x324xf32>
    %cst_8 = arith.constant 5.000000e-01 : f32
    %6 = vector.broadcast %cst_8 : f32 to vector<1x324xf32>
    %7 = arith.cmpf ogt, %5, %6 : vector<1x324xf32>
    %c0_9 = arith.constant 0 : index
    %c109 = arith.constant 109 : index
    %8 = vector.load %arg6[%c0_9, %c109] : memref<8x512xf32, #tpu.memory_space<vmem>>, vector<8x324xf32>
    %c0_10 = arith.constant 0 : index
    %c110 = arith.constant 110 : index
    %9 = vector.load %arg6[%c0_10, %c110] : memref<8x512xf32, #tpu.memory_space<vmem>>, vector<8x324xf32>
    %c0_11 = arith.constant 0 : index
    %c111 = arith.constant 111 : index
    %10 = vector.load %arg6[%c0_11, %c111] : memref<8x512xf32, #tpu.memory_space<vmem>>, vector<8x324xf32>
    %c0_12 = arith.constant 0 : index
    %c127 = arith.constant 127 : index
    %11 = vector.load %arg6[%c0_12, %c127] : memref<8x512xf32, #tpu.memory_space<vmem>>, vector<8x324xf32>
    %c0_13 = arith.constant 0 : index
    %c128 = arith.constant 128 : index
    %12 = vector.load %arg6[%c0_13, %c128] : memref<8x512xf32, #tpu.memory_space<vmem>>, vector<8x324xf32>
    %c0_14 = arith.constant 0 : index
    %c129 = arith.constant 129 : index
    %13 = vector.load %arg6[%c0_14, %c129] : memref<8x512xf32, #tpu.memory_space<vmem>>, vector<8x324xf32>
    %c0_15 = arith.constant 0 : index
    %c145 = arith.constant 145 : index
    %14 = vector.load %arg6[%c0_15, %c145] : memref<8x512xf32, #tpu.memory_space<vmem>>, vector<8x324xf32>
    %c0_16 = arith.constant 0 : index
    %c146 = arith.constant 146 : index
    %15 = vector.load %arg6[%c0_16, %c146] : memref<8x512xf32, #tpu.memory_space<vmem>>, vector<8x324xf32>
    %c0_17 = arith.constant 0 : index
    %c147 = arith.constant 147 : index
    %16 = vector.load %arg6[%c0_17, %c147] : memref<8x512xf32, #tpu.memory_space<vmem>>, vector<8x324xf32>
    %17 = tpu.concatenate %8, %9, %10, %11, %12, %13, %14, %15, %16 in 0 : vector<8x324xf32>, vector<8x324xf32>, vector<8x324xf32>, vector<8x324xf32>, vector<8x324xf32>, vector<8x324xf32>, vector<8x324xf32>, vector<8x324xf32>, vector<8x324xf32> -> vector<72x324xf32>
    %c0_18 = arith.constant 0 : index
    %c0_19 = arith.constant 0 : index
    %c0_20 = arith.constant 0 : index
    %18 = vector.load %arg2[%c0_18, %c0_19, %c0_20] : memref<5x8x72xf32, #tpu.memory_space<vmem>>, vector<1x8x72xf32>
    %19 = vector.shape_cast %18 : vector<1x8x72xf32> to vector<8x72xf32>
    %cst_21 = arith.constant dense<0.000000e+00> : vector<8x324xf32>
    %20 = tpu.matmul %19, %17, %cst_21 {dimension_numbers = #tpu.dot_dimension_numbers<[1], [0], [0], [1], [0, 0, 1, 1], [], []>} : vector<8x72xf32>, vector<72x324xf32>, vector<8x324xf32> -> vector<8x324xf32>
    %c0_22 = arith.constant 0 : index
    %c0_23 = arith.constant 0 : index
    %c0_24 = arith.constant 0 : index
    %21 = vector.load %arg3[%c0_22, %c0_23, %c0_24] : memref<5x8x1xf32, #tpu.memory_space<vmem>>, vector<1x8x1xf32>
    %22 = vector.shape_cast %21 : vector<1x8x1xf32> to vector<8x1xf32>
    %23 = vector.broadcast %22 : vector<8x1xf32> to vector<8x324xf32>
    %24 = arith.addf %20, %23 : vector<8x324xf32>
    %cst_25 = arith.constant 0.000000e+00 : f32
    %25 = vector.broadcast %cst_25 : f32 to vector<8x324xf32>
    %26 = arith.maximumf %24, %25 : vector<8x324xf32>
    %cst_26 = arith.constant 0.000000e+00 : f32
    %27 = vector.shape_cast %7 : vector<1x324xi1> to vector<1x324xi1>
    %28 = vector.broadcast %27 : vector<1x324xi1> to vector<8x324xi1>
    %29 = vector.broadcast %cst_26 : f32 to vector<8x324xf32>
    %30 = arith.select %28, %26, %29 : vector<8x324xi1>, vector<8x324xf32>
    %c0_27 = arith.constant 0 : index
    %c128_28 = arith.constant 128 : index
    %31 = vector.load %arg7[%c0_27, %c128_28] : memref<8x512xf32, #tpu.memory_space<vmem>>, vector<8x324xf32>
    tpu.vector_store %arg7[%c0_27, %c128_28], %30 {strides = array<i32>} : memref<8x512xf32, #tpu.memory_space<vmem>>, vector<8x324xf32>,
    %c0_29 = arith.constant 0 : index
    %c109_30 = arith.constant 109 : index
    %32 = vector.load %arg7[%c0_29, %c109_30] : memref<8x512xf32, #tpu.memory_space<vmem>>, vector<8x324xf32>
    %c0_31 = arith.constant 0 : index
    %c110_32 = arith.constant 110 : index
    %33 = vector.load %arg7[%c0_31, %c110_32] : memref<8x512xf32, #tpu.memory_space<vmem>>, vector<8x324xf32>
    %c0_33 = arith.constant 0 : index
    %c111_34 = arith.constant 111 : index
    %34 = vector.load %arg7[%c0_33, %c111_34] : memref<8x512xf32, #tpu.memory_space<vmem>>, vector<8x324xf32>
    %c0_35 = arith.constant 0 : index
    %c127_36 = arith.constant 127 : index
    %35 = vector.load %arg7[%c0_35, %c127_36] : memref<8x512xf32, #tpu.memory_space<vmem>>, vector<8x324xf32>
    %c0_37 = arith.constant 0 : index
    %c128_38 = arith.constant 128 : index
    %36 = vector.load %arg7[%c0_37, %c128_38] : memref<8x512xf32, #tpu.memory_space<vmem>>, vector<8x324xf32>
    %c0_39 = arith.constant 0 : index
    %c129_40 = arith.constant 129 : index
    %37 = vector.load %arg7[%c0_39, %c129_40] : memref<8x512xf32, #tpu.memory_space<vmem>>, vector<8x324xf32>
    %c0_41 = arith.constant 0 : index
    %c145_42 = arith.constant 145 : index
    %38 = vector.load %arg7[%c0_41, %c145_42] : memref<8x512xf32, #tpu.memory_space<vmem>>, vector<8x324xf32>
    %c0_43 = arith.constant 0 : index
    %c146_44 = arith.constant 146 : index
    %39 = vector.load %arg7[%c0_43, %c146_44] : memref<8x512xf32, #tpu.memory_space<vmem>>, vector<8x324xf32>
    %c0_45 = arith.constant 0 : index
    %c147_46 = arith.constant 147 : index
    %40 = vector.load %arg7[%c0_45, %c147_46] : memref<8x512xf32, #tpu.memory_space<vmem>>, vector<8x324xf32>
    %41 = tpu.concatenate %32, %33, %34, %35, %36, %37, %38, %39, %40 in 0 : vector<8x324xf32>, vector<8x324xf32>, vector<8x324xf32>, vector<8x324xf32>, vector<8x324xf32>, vector<8x324xf32>, vector<8x324xf32>, vector<8x324xf32>, vector<8x324xf32> -> vector<72x324xf32>
    %c2 = arith.constant 2 : index
    %c0_47 = arith.constant 0 : index
    %c0_48 = arith.constant 0 : index
    %42 = vector.load %arg2[%c2, %c0_47, %c0_48] : memref<5x8x72xf32, #tpu.memory_space<vmem>>, vector<1x8x72xf32>
    %43 = vector.shape_cast %42 : vector<1x8x72xf32> to vector<8x72xf32>
    %cst_49 = arith.constant dense<0.000000e+00> : vector<8x324xf32>
    %44 = tpu.matmul %43, %41, %cst_49 {dimension_numbers = #tpu.dot_dimension_numbers<[1], [0], [0], [1], [0, 0, 1, 1], [], []>} : vector<8x72xf32>, vector<72x324xf32>, vector<8x324xf32> -> vector<8x324xf32>
    %c2_50 = arith.constant 2 : index
    %c0_51 = arith.constant 0 : index
    %c0_52 = arith.constant 0 : index
    %45 = vector.load %arg3[%c2_50, %c0_51, %c0_52] : memref<5x8x1xf32, #tpu.memory_space<vmem>>, vector<1x8x1xf32>
    %46 = vector.shape_cast %45 : vector<1x8x1xf32> to vector<8x1xf32>
    %47 = vector.broadcast %46 : vector<8x1xf32> to vector<8x324xf32>
    %48 = arith.addf %44, %47 : vector<8x324xf32>
    %cst_53 = arith.constant 0.000000e+00 : f32
    %49 = vector.broadcast %cst_53 : f32 to vector<8x324xf32>
    %50 = arith.maximumf %48, %49 : vector<8x324xf32>
    %cst_54 = arith.constant 0.000000e+00 : f32
    %51 = vector.shape_cast %7 : vector<1x324xi1> to vector<1x324xi1>
    %52 = vector.broadcast %51 : vector<1x324xi1> to vector<8x324xi1>
    %53 = vector.broadcast %cst_54 : f32 to vector<8x324xf32>
    %54 = arith.select %52, %50, %53 : vector<8x324xi1>, vector<8x324xf32>
    %c0_55 = arith.constant 0 : index
    %c128_56 = arith.constant 128 : index
    %55 = vector.load %arg6[%c0_55, %c128_56] : memref<8x512xf32, #tpu.memory_space<vmem>>, vector<8x324xf32>
    tpu.vector_store %arg6[%c0_55, %c128_56], %54 {strides = array<i32>} : memref<8x512xf32, #tpu.memory_space<vmem>>, vector<8x324xf32>,
    %c0_57 = arith.constant 0 : index
    %c109_58 = arith.constant 109 : index
    %56 = vector.load %arg6[%c0_57, %c109_58] : memref<8x512xf32, #tpu.memory_space<vmem>>, vector<8x324xf32>
    %c0_59 = arith.constant 0 : index
    %c110_60 = arith.constant 110 : index
    %57 = vector.load %arg6[%c0_59, %c110_60] : memref<8x512xf32, #tpu.memory_space<vmem>>, vector<8x324xf32>
    %c0_61 = arith.constant 0 : index
    %c111_62 = arith.constant 111 : index
    %58 = vector.load %arg6[%c0_61, %c111_62] : memref<8x512xf32, #tpu.memory_space<vmem>>, vector<8x324xf32>
    %c0_63 = arith.constant 0 : index
    %c127_64 = arith.constant 127 : index
    %59 = vector.load %arg6[%c0_63, %c127_64] : memref<8x512xf32, #tpu.memory_space<vmem>>, vector<8x324xf32>
    %c0_65 = arith.constant 0 : index
    %c128_66 = arith.constant 128 : index
    %60 = vector.load %arg6[%c0_65, %c128_66] : memref<8x512xf32, #tpu.memory_space<vmem>>, vector<8x324xf32>
    %c0_67 = arith.constant 0 : index
    %c129_68 = arith.constant 129 : index
    %61 = vector.load %arg6[%c0_67, %c129_68] : memref<8x512xf32, #tpu.memory_space<vmem>>, vector<8x324xf32>
    %c0_69 = arith.constant 0 : index
    %c145_70 = arith.constant 145 : index
    %62 = vector.load %arg6[%c0_69, %c145_70] : memref<8x512xf32, #tpu.memory_space<vmem>>, vector<8x324xf32>
    %c0_71 = arith.constant 0 : index
    %c146_72 = arith.constant 146 : index
    %63 = vector.load %arg6[%c0_71, %c146_72] : memref<8x512xf32, #tpu.memory_space<vmem>>, vector<8x324xf32>
    %c0_73 = arith.constant 0 : index
    %c147_74 = arith.constant 147 : index
    %64 = vector.load %arg6[%c0_73, %c147_74] : memref<8x512xf32, #tpu.memory_space<vmem>>, vector<8x324xf32>
    %65 = tpu.concatenate %56, %57, %58, %59, %60, %61, %62, %63, %64 in 0 : vector<8x324xf32>, vector<8x324xf32>, vector<8x324xf32>, vector<8x324xf32>, vector<8x324xf32>, vector<8x324xf32>, vector<8x324xf32>, vector<8x324xf32>, vector<8x324xf32> -> vector<72x324xf32>
    %c3 = arith.constant 3 : index
    %c0_75 = arith.constant 0 : index
    %c0_76 = arith.constant 0 : index
    %66 = vector.load %arg2[%c3, %c0_75, %c0_76] : memref<5x8x72xf32, #tpu.memory_space<vmem>>, vector<1x8x72xf32>
    %67 = vector.shape_cast %66 : vector<1x8x72xf32> to vector<8x72xf32>
    %cst_77 = arith.constant dense<0.000000e+00> : vector<8x324xf32>
    %68 = tpu.matmul %67, %65, %cst_77 {dimension_numbers = #tpu.dot_dimension_numbers<[1], [0], [0], [1], [0, 0, 1, 1], [], []>} : vector<8x72xf32>, vector<72x324xf32>, vector<8x324xf32> -> vector<8x324xf32>
    %c3_78 = arith.constant 3 : index
    %c0_79 = arith.constant 0 : index
    %c0_80 = arith.constant 0 : index
    %69 = vector.load %arg3[%c3_78, %c0_79, %c0_80] : memref<5x8x1xf32, #tpu.memory_space<vmem>>, vector<1x8x1xf32>
    %70 = vector.shape_cast %69 : vector<1x8x1xf32> to vector<8x1xf32>
    %71 = vector.broadcast %70 : vector<8x1xf32> to vector<8x324xf32>
    %72 = arith.addf %68, %71 : vector<8x324xf32>
    %c0_81 = arith.constant 0 : index
    %c128_82 = arith.constant 128 : index
    %73 = vector.load %arg7[%c0_81, %c128_82] : memref<8x512xf32, #tpu.memory_space<vmem>>, vector<8x324xf32>
    %74 = arith.addf %72, %73 : vector<8x324xf32>
    %cst_83 = arith.constant 0.000000e+00 : f32
    %75 = vector.shape_cast %7 : vector<1x324xi1> to vector<1x324xi1>
    %76 = vector.broadcast %75 : vector<1x324xi1> to vector<8x324xi1>
    %77 = vector.broadcast %cst_83 : f32 to vector<8x324xf32>
    %78 = arith.select %76, %74, %77 : vector<8x324xi1>, vector<8x324xf32>
    %c0_84 = arith.constant 0 : index
    %c128_85 = arith.constant 128 : index
    %79 = vector.load %arg7[%c0_84, %c128_85] : memref<8x512xf32, #tpu.memory_space<vmem>>, vector<8x324xf32>
    tpu.vector_store %arg7[%c0_84, %c128_85], %78 {strides = array<i32>} : memref<8x512xf32, #tpu.memory_space<vmem>>, vector<8x324xf32>,
    %c0_86 = arith.constant 0 : index
    %c109_87 = arith.constant 109 : index
    %80 = vector.load %arg7[%c0_86, %c109_87] : memref<8x512xf32, #tpu.memory_space<vmem>>, vector<8x324xf32>
    %c0_88 = arith.constant 0 : index
    %c110_89 = arith.constant 110 : index
    %81 = vector.load %arg7[%c0_88, %c110_89] : memref<8x512xf32, #tpu.memory_space<vmem>>, vector<8x324xf32>
    %c0_90 = arith.constant 0 : index
    %c111_91 = arith.constant 111 : index
    %82 = vector.load %arg7[%c0_90, %c111_91] : memref<8x512xf32, #tpu.memory_space<vmem>>, vector<8x324xf32>
    %c0_92 = arith.constant 0 : index
    %c127_93 = arith.constant 127 : index
    %83 = vector.load %arg7[%c0_92, %c127_93] : memref<8x512xf32, #tpu.memory_space<vmem>>, vector<8x324xf32>
    %c0_94 = arith.constant 0 : index
    %c128_95 = arith.constant 128 : index
    %84 = vector.load %arg7[%c0_94, %c128_95] : memref<8x512xf32, #tpu.memory_space<vmem>>, vector<8x324xf32>
    %c0_96 = arith.constant 0 : index
    %c129_97 = arith.constant 129 : index
    %85 = vector.load %arg7[%c0_96, %c129_97] : memref<8x512xf32, #tpu.memory_space<vmem>>, vector<8x324xf32>
    %c0_98 = arith.constant 0 : index
    %c145_99 = arith.constant 145 : index
    %86 = vector.load %arg7[%c0_98, %c145_99] : memref<8x512xf32, #tpu.memory_space<vmem>>, vector<8x324xf32>
    %c0_100 = arith.constant 0 : index
    %c146_101 = arith.constant 146 : index
    %87 = vector.load %arg7[%c0_100, %c146_101] : memref<8x512xf32, #tpu.memory_space<vmem>>, vector<8x324xf32>
    %c0_102 = arith.constant 0 : index
    %c147_103 = arith.constant 147 : index
    %88 = vector.load %arg7[%c0_102, %c147_103] : memref<8x512xf32, #tpu.memory_space<vmem>>, vector<8x324xf32>
    %89 = tpu.concatenate %80, %81, %82, %83, %84, %85, %86, %87, %88 in 0 : vector<8x324xf32>, vector<8x324xf32>, vector<8x324xf32>, vector<8x324xf32>, vector<8x324xf32>, vector<8x324xf32>, vector<8x324xf32>, vector<8x324xf32>, vector<8x324xf32> -> vector<72x324xf32>
    %c2_104 = arith.constant 2 : index
    %c0_105 = arith.constant 0 : index
    %c0_106 = arith.constant 0 : index
    %90 = vector.load %arg2[%c2_104, %c0_105, %c0_106] : memref<5x8x72xf32, #tpu.memory_space<vmem>>, vector<1x8x72xf32>
    %91 = vector.shape_cast %90 : vector<1x8x72xf32> to vector<8x72xf32>
    %cst_107 = arith.constant dense<0.000000e+00> : vector<8x324xf32>
    %92 = tpu.matmul %91, %89, %cst_107 {dimension_numbers = #tpu.dot_dimension_numbers<[1], [0], [0], [1], [0, 0, 1, 1], [], []>} : vector<8x72xf32>, vector<72x324xf32>, vector<8x324xf32> -> vector<8x324xf32>
    %c2_108 = arith.constant 2 : index
    %c0_109 = arith.constant 0 : index
    %c0_110 = arith.constant 0 : index
    %93 = vector.load %arg3[%c2_108, %c0_109, %c0_110] : memref<5x8x1xf32, #tpu.memory_space<vmem>>, vector<1x8x1xf32>
    %94 = vector.shape_cast %93 : vector<1x8x1xf32> to vector<8x1xf32>
    %95 = vector.broadcast %94 : vector<8x1xf32> to vector<8x324xf32>
    %96 = arith.addf %92, %95 : vector<8x324xf32>
    %cst_111 = arith.constant 0.000000e+00 : f32
    %97 = vector.broadcast %cst_111 : f32 to vector<8x324xf32>
    %98 = arith.maximumf %96, %97 : vector<8x324xf32>
    %cst_112 = arith.constant 0.000000e+00 : f32
    %99 = vector.shape_cast %7 : vector<1x324xi1> to vector<1x324xi1>
    %100 = vector.broadcast %99 : vector<1x324xi1> to vector<8x324xi1>
    %101 = vector.broadcast %cst_112 : f32 to vector<8x324xf32>
    %102 = arith.select %100, %98, %101 : vector<8x324xi1>, vector<8x324xf32>
    %c0_113 = arith.constant 0 : index
    %c128_114 = arith.constant 128 : index
    %103 = vector.load %arg6[%c0_113, %c128_114] : memref<8x512xf32, #tpu.memory_space<vmem>>, vector<8x324xf32>
    tpu.vector_store %arg6[%c0_113, %c128_114], %102 {strides = array<i32>} : memref<8x512xf32, #tpu.memory_space<vmem>>, vector<8x324xf32>,
    %c0_115 = arith.constant 0 : index
    %c109_116 = arith.constant 109 : index
    %104 = vector.load %arg6[%c0_115, %c109_116] : memref<8x512xf32, #tpu.memory_space<vmem>>, vector<8x324xf32>
    %c0_117 = arith.constant 0 : index
    %c110_118 = arith.constant 110 : index
    %105 = vector.load %arg6[%c0_117, %c110_118] : memref<8x512xf32, #tpu.memory_space<vmem>>, vector<8x324xf32>
    %c0_119 = arith.constant 0 : index
    %c111_120 = arith.constant 111 : index
    %106 = vector.load %arg6[%c0_119, %c111_120] : memref<8x512xf32, #tpu.memory_space<vmem>>, vector<8x324xf32>
    %c0_121 = arith.constant 0 : index
    %c127_122 = arith.constant 127 : index
    %107 = vector.load %arg6[%c0_121, %c127_122] : memref<8x512xf32, #tpu.memory_space<vmem>>, vector<8x324xf32>
    %c0_123 = arith.constant 0 : index
    %c128_124 = arith.constant 128 : index
    %108 = vector.load %arg6[%c0_123, %c128_124] : memref<8x512xf32, #tpu.memory_space<vmem>>, vector<8x324xf32>
    %c0_125 = arith.constant 0 : index
    %c129_126 = arith.constant 129 : index
    %109 = vector.load %arg6[%c0_125, %c129_126] : memref<8x512xf32, #tpu.memory_space<vmem>>, vector<8x324xf32>
    %c0_127 = arith.constant 0 : index
    %c145_128 = arith.constant 145 : index
    %110 = vector.load %arg6[%c0_127, %c145_128] : memref<8x512xf32, #tpu.memory_space<vmem>>, vector<8x324xf32>
    %c0_129 = arith.constant 0 : index
    %c146_130 = arith.constant 146 : index
    %111 = vector.load %arg6[%c0_129, %c146_130] : memref<8x512xf32, #tpu.memory_space<vmem>>, vector<8x324xf32>
    %c0_131 = arith.constant 0 : index
    %c147_132 = arith.constant 147 : index
    %112 = vector.load %arg6[%c0_131, %c147_132] : memref<8x512xf32, #tpu.memory_space<vmem>>, vector<8x324xf32>
    %113 = tpu.concatenate %104, %105, %106, %107, %108, %109, %110, %111, %112 in 0 : vector<8x324xf32>, vector<8x324xf32>, vector<8x324xf32>, vector<8x324xf32>, vector<8x324xf32>, vector<8x324xf32>, vector<8x324xf32>, vector<8x324xf32>, vector<8x324xf32> -> vector<72x324xf32>
    %c3_133 = arith.constant 3 : index
    %c0_134 = arith.constant 0 : index
    %c0_135 = arith.constant 0 : index
    %114 = vector.load %arg2[%c3_133, %c0_134, %c0_135] : memref<5x8x72xf32, #tpu.memory_space<vmem>>, vector<1x8x72xf32>
    %115 = vector.shape_cast %114 : vector<1x8x72xf32> to vector<8x72xf32>
    %cst_136 = arith.constant dense<0.000000e+00> : vector<8x324xf32>
    %116 = tpu.matmul %115, %113, %cst_136 {dimension_numbers = #tpu.dot_dimension_numbers<[1], [0], [0], [1], [0, 0, 1, 1], [], []>} : vector<8x72xf32>, vector<72x324xf32>, vector<8x324xf32> -> vector<8x324xf32>
    %c3_137 = arith.constant 3 : index
    %c0_138 = arith.constant 0 : index
    %c0_139 = arith.constant 0 : index
    %117 = vector.load %arg3[%c3_137, %c0_138, %c0_139] : memref<5x8x1xf32, #tpu.memory_space<vmem>>, vector<1x8x1xf32>
    %118 = vector.shape_cast %117 : vector<1x8x1xf32> to vector<8x1xf32>
    %119 = vector.broadcast %118 : vector<8x1xf32> to vector<8x324xf32>
    %120 = arith.addf %116, %119 : vector<8x324xf32>
    %c0_140 = arith.constant 0 : index
    %c128_141 = arith.constant 128 : index
    %121 = vector.load %arg7[%c0_140, %c128_141] : memref<8x512xf32, #tpu.memory_space<vmem>>, vector<8x324xf32>
    %122 = arith.addf %120, %121 : vector<8x324xf32>
    %cst_142 = arith.constant 0.000000e+00 : f32
    %123 = vector.shape_cast %7 : vector<1x324xi1> to vector<1x324xi1>
    %124 = vector.broadcast %123 : vector<1x324xi1> to vector<8x324xi1>
    %125 = vector.broadcast %cst_142 : f32 to vector<8x324xf32>
    %126 = arith.select %124, %122, %125 : vector<8x324xi1>, vector<8x324xf32>
    %c0_143 = arith.constant 0 : index
    %c128_144 = arith.constant 128 : index
    %127 = vector.load %arg7[%c0_143, %c128_144] : memref<8x512xf32, #tpu.memory_space<vmem>>, vector<8x324xf32>
    tpu.vector_store %arg7[%c0_143, %c128_144], %126 {strides = array<i32>} : memref<8x512xf32, #tpu.memory_space<vmem>>, vector<8x324xf32>,
    %c0_145 = arith.constant 0 : index
    %c109_146 = arith.constant 109 : index
    %128 = vector.load %arg7[%c0_145, %c109_146] : memref<8x512xf32, #tpu.memory_space<vmem>>, vector<8x324xf32>
    %c0_147 = arith.constant 0 : index
    %c110_148 = arith.constant 110 : index
    %129 = vector.load %arg7[%c0_147, %c110_148] : memref<8x512xf32, #tpu.memory_space<vmem>>, vector<8x324xf32>
    %c0_149 = arith.constant 0 : index
    %c111_150 = arith.constant 111 : index
    %130 = vector.load %arg7[%c0_149, %c111_150] : memref<8x512xf32, #tpu.memory_space<vmem>>, vector<8x324xf32>
    %c0_151 = arith.constant 0 : index
    %c127_152 = arith.constant 127 : index
    %131 = vector.load %arg7[%c0_151, %c127_152] : memref<8x512xf32, #tpu.memory_space<vmem>>, vector<8x324xf32>
    %c0_153 = arith.constant 0 : index
    %c128_154 = arith.constant 128 : index
    %132 = vector.load %arg7[%c0_153, %c128_154] : memref<8x512xf32, #tpu.memory_space<vmem>>, vector<8x324xf32>
    %c0_155 = arith.constant 0 : index
    %c129_156 = arith.constant 129 : index
    %133 = vector.load %arg7[%c0_155, %c129_156] : memref<8x512xf32, #tpu.memory_space<vmem>>, vector<8x324xf32>
    %c0_157 = arith.constant 0 : index
    %c145_158 = arith.constant 145 : index
    %134 = vector.load %arg7[%c0_157, %c145_158] : memref<8x512xf32, #tpu.memory_space<vmem>>, vector<8x324xf32>
    %c0_159 = arith.constant 0 : index
    %c146_160 = arith.constant 146 : index
    %135 = vector.load %arg7[%c0_159, %c146_160] : memref<8x512xf32, #tpu.memory_space<vmem>>, vector<8x324xf32>
    %c0_161 = arith.constant 0 : index
    %c147_162 = arith.constant 147 : index
    %136 = vector.load %arg7[%c0_161, %c147_162] : memref<8x512xf32, #tpu.memory_space<vmem>>, vector<8x324xf32>
    %137 = tpu.concatenate %128, %129, %130, %131, %132, %133, %134, %135, %136 in 0 : vector<8x324xf32>, vector<8x324xf32>, vector<8x324xf32>, vector<8x324xf32>, vector<8x324xf32>, vector<8x324xf32>, vector<8x324xf32>, vector<8x324xf32>, vector<8x324xf32> -> vector<72x324xf32>
    %c1 = arith.constant 1 : index
    %c0_163 = arith.constant 0 : index
    %c0_164 = arith.constant 0 : index
    %138 = vector.load %arg2[%c1, %c0_163, %c0_164] : memref<5x8x72xf32, #tpu.memory_space<vmem>>, vector<1x8x72xf32>
    %139 = vector.shape_cast %138 : vector<1x8x72xf32> to vector<8x72xf32>
    %cst_165 = arith.constant dense<0.000000e+00> : vector<8x324xf32>
    %140 = tpu.matmul %139, %137, %cst_165 {dimension_numbers = #tpu.dot_dimension_numbers<[1], [0], [0], [1], [0, 0, 1, 1], [], []>} : vector<8x72xf32>, vector<72x324xf32>, vector<8x324xf32> -> vector<8x324xf32>
    %c1_166 = arith.constant 1 : index
    %c0_167 = arith.constant 0 : index
    %c0_168 = arith.constant 0 : index
    %141 = vector.load %arg3[%c1_166, %c0_167, %c0_168] : memref<5x8x1xf32, #tpu.memory_space<vmem>>, vector<1x8x1xf32>
    %142 = vector.shape_cast %141 : vector<1x8x1xf32> to vector<8x1xf32>
    %143 = vector.broadcast %142 : vector<8x1xf32> to vector<8x324xf32>
    %144 = arith.addf %140, %143 : vector<8x324xf32>
    %cst_169 = arith.constant 0.000000e+00 : f32
    %145 = vector.broadcast %cst_169 : f32 to vector<8x324xf32>
    %146 = arith.maximumf %144, %145 : vector<8x324xf32>
    %cst_170 = arith.constant 0.000000e+00 : f32
    %147 = vector.shape_cast %7 : vector<1x324xi1> to vector<1x324xi1>
    %148 = vector.broadcast %147 : vector<1x324xi1> to vector<8x324xi1>
    %149 = vector.broadcast %cst_170 : f32 to vector<8x324xf32>
    %150 = arith.select %148, %146, %149 : vector<8x324xi1>, vector<8x324xf32>
    %c0_171 = arith.constant 0 : index
    %c128_172 = arith.constant 128 : index
    %151 = vector.load %arg6[%c0_171, %c128_172] : memref<8x512xf32, #tpu.memory_space<vmem>>, vector<8x324xf32>
    tpu.vector_store %arg6[%c0_171, %c128_172], %150 {strides = array<i32>} : memref<8x512xf32, #tpu.memory_space<vmem>>, vector<8x324xf32>,
    %c0_173 = arith.constant 0 : index
    %c109_174 = arith.constant 109 : index
    %152 = vector.load %arg6[%c0_173, %c109_174] : memref<8x512xf32, #tpu.memory_space<vmem>>, vector<8x324xf32>
    %c0_175 = arith.constant 0 : index
    %c110_176 = arith.constant 110 : index
    %153 = vector.load %arg6[%c0_175, %c110_176] : memref<8x512xf32, #tpu.memory_space<vmem>>, vector<8x324xf32>
    %c0_177 = arith.constant 0 : index
    %c111_178 = arith.constant 111 : index
    %154 = vector.load %arg6[%c0_177, %c111_178] : memref<8x512xf32, #tpu.memory_space<vmem>>, vector<8x324xf32>
    %c0_179 = arith.constant 0 : index
    %c127_180 = arith.constant 127 : index
    %155 = vector.load %arg6[%c0_179, %c127_180] : memref<8x512xf32, #tpu.memory_space<vmem>>, vector<8x324xf32>
    %c0_181 = arith.constant 0 : index
    %c128_182 = arith.constant 128 : index
    %156 = vector.load %arg6[%c0_181, %c128_182] : memref<8x512xf32, #tpu.memory_space<vmem>>, vector<8x324xf32>
    %c0_183 = arith.constant 0 : index
    %c129_184 = arith.constant 129 : index
    %157 = vector.load %arg6[%c0_183, %c129_184] : memref<8x512xf32, #tpu.memory_space<vmem>>, vector<8x324xf32>
    %c0_185 = arith.constant 0 : index
    %c145_186 = arith.constant 145 : index
    %158 = vector.load %arg6[%c0_185, %c145_186] : memref<8x512xf32, #tpu.memory_space<vmem>>, vector<8x324xf32>
    %c0_187 = arith.constant 0 : index
    %c146_188 = arith.constant 146 : index
    %159 = vector.load %arg6[%c0_187, %c146_188] : memref<8x512xf32, #tpu.memory_space<vmem>>, vector<8x324xf32>
    %c0_189 = arith.constant 0 : index
    %c147_190 = arith.constant 147 : index
    %160 = vector.load %arg6[%c0_189, %c147_190] : memref<8x512xf32, #tpu.memory_space<vmem>>, vector<8x324xf32>
    %161 = tpu.concatenate %152, %153, %154, %155, %156, %157, %158, %159, %160 in 0 : vector<8x324xf32>, vector<8x324xf32>, vector<8x324xf32>, vector<8x324xf32>, vector<8x324xf32>, vector<8x324xf32>, vector<8x324xf32>, vector<8x324xf32>, vector<8x324xf32> -> vector<72x324xf32>
    %c2_191 = arith.constant 2 : index
    %c0_192 = arith.constant 0 : index
    %c0_193 = arith.constant 0 : index
    %162 = vector.load %arg2[%c2_191, %c0_192, %c0_193] : memref<5x8x72xf32, #tpu.memory_space<vmem>>, vector<1x8x72xf32>
    %163 = vector.shape_cast %162 : vector<1x8x72xf32> to vector<8x72xf32>
    %cst_194 = arith.constant dense<0.000000e+00> : vector<8x324xf32>
    %164 = tpu.matmul %163, %161, %cst_194 {dimension_numbers = #tpu.dot_dimension_numbers<[1], [0], [0], [1], [0, 0, 1, 1], [], []>} : vector<8x72xf32>, vector<72x324xf32>, vector<8x324xf32> -> vector<8x324xf32>
    %c2_195 = arith.constant 2 : index
    %c0_196 = arith.constant 0 : index
    %c0_197 = arith.constant 0 : index
    %165 = vector.load %arg3[%c2_195, %c0_196, %c0_197] : memref<5x8x1xf32, #tpu.memory_space<vmem>>, vector<1x8x1xf32>
    %166 = vector.shape_cast %165 : vector<1x8x1xf32> to vector<8x1xf32>
    %167 = vector.broadcast %166 : vector<8x1xf32> to vector<8x324xf32>
    %168 = arith.addf %164, %167 : vector<8x324xf32>
    %cst_198 = arith.constant 0.000000e+00 : f32
    %169 = vector.broadcast %cst_198 : f32 to vector<8x324xf32>
    %170 = arith.maximumf %168, %169 : vector<8x324xf32>
    %cst_199 = arith.constant 0.000000e+00 : f32
    %171 = vector.shape_cast %7 : vector<1x324xi1> to vector<1x324xi1>
    %172 = vector.broadcast %171 : vector<1x324xi1> to vector<8x324xi1>
    %173 = vector.broadcast %cst_199 : f32 to vector<8x324xf32>
    %174 = arith.select %172, %170, %173 : vector<8x324xi1>, vector<8x324xf32>
    %c0_200 = arith.constant 0 : index
    %c128_201 = arith.constant 128 : index
    %175 = vector.load %arg7[%c0_200, %c128_201] : memref<8x512xf32, #tpu.memory_space<vmem>>, vector<8x324xf32>
    tpu.vector_store %arg7[%c0_200, %c128_201], %174 {strides = array<i32>} : memref<8x512xf32, #tpu.memory_space<vmem>>, vector<8x324xf32>,
    %c0_202 = arith.constant 0 : index
    %c109_203 = arith.constant 109 : index
    %176 = vector.load %arg7[%c0_202, %c109_203] : memref<8x512xf32, #tpu.memory_space<vmem>>, vector<8x324xf32>
    %c0_204 = arith.constant 0 : index
    %c110_205 = arith.constant 110 : index
    %177 = vector.load %arg7[%c0_204, %c110_205] : memref<8x512xf32, #tpu.memory_space<vmem>>, vector<8x324xf32>
    %c0_206 = arith.constant 0 : index
    %c111_207 = arith.constant 111 : index
    %178 = vector.load %arg7[%c0_206, %c111_207] : memref<8x512xf32, #tpu.memory_space<vmem>>, vector<8x324xf32>
    %c0_208 = arith.constant 0 : index
    %c127_209 = arith.constant 127 : index
    %179 = vector.load %arg7[%c0_208, %c127_209] : memref<8x512xf32, #tpu.memory_space<vmem>>, vector<8x324xf32>
    %c0_210 = arith.constant 0 : index
    %c128_211 = arith.constant 128 : index
    %180 = vector.load %arg7[%c0_210, %c128_211] : memref<8x512xf32, #tpu.memory_space<vmem>>, vector<8x324xf32>
    %c0_212 = arith.constant 0 : index
    %c129_213 = arith.constant 129 : index
    %181 = vector.load %arg7[%c0_212, %c129_213] : memref<8x512xf32, #tpu.memory_space<vmem>>, vector<8x324xf32>
    %c0_214 = arith.constant 0 : index
    %c145_215 = arith.constant 145 : index
    %182 = vector.load %arg7[%c0_214, %c145_215] : memref<8x512xf32, #tpu.memory_space<vmem>>, vector<8x324xf32>
    %c0_216 = arith.constant 0 : index
    %c146_217 = arith.constant 146 : index
    %183 = vector.load %arg7[%c0_216, %c146_217] : memref<8x512xf32, #tpu.memory_space<vmem>>, vector<8x324xf32>
    %c0_218 = arith.constant 0 : index
    %c147_219 = arith.constant 147 : index
    %184 = vector.load %arg7[%c0_218, %c147_219] : memref<8x512xf32, #tpu.memory_space<vmem>>, vector<8x324xf32>
    %185 = tpu.concatenate %176, %177, %178, %179, %180, %181, %182, %183, %184 in 0 : vector<8x324xf32>, vector<8x324xf32>, vector<8x324xf32>, vector<8x324xf32>, vector<8x324xf32>, vector<8x324xf32>, vector<8x324xf32>, vector<8x324xf32>, vector<8x324xf32> -> vector<72x324xf32>
    %c3_220 = arith.constant 3 : index
    %c0_221 = arith.constant 0 : index
    %c0_222 = arith.constant 0 : index
    %186 = vector.load %arg2[%c3_220, %c0_221, %c0_222] : memref<5x8x72xf32, #tpu.memory_space<vmem>>, vector<1x8x72xf32>
    %187 = vector.shape_cast %186 : vector<1x8x72xf32> to vector<8x72xf32>
    %cst_223 = arith.constant dense<0.000000e+00> : vector<8x324xf32>
    %188 = tpu.matmul %187, %185, %cst_223 {dimension_numbers = #tpu.dot_dimension_numbers<[1], [0], [0], [1], [0, 0, 1, 1], [], []>} : vector<8x72xf32>, vector<72x324xf32>, vector<8x324xf32> -> vector<8x324xf32>
    %c3_224 = arith.constant 3 : index
    %c0_225 = arith.constant 0 : index
    %c0_226 = arith.constant 0 : index
    %189 = vector.load %arg3[%c3_224, %c0_225, %c0_226] : memref<5x8x1xf32, #tpu.memory_space<vmem>>, vector<1x8x1xf32>
    %190 = vector.shape_cast %189 : vector<1x8x1xf32> to vector<8x1xf32>
    %191 = vector.broadcast %190 : vector<8x1xf32> to vector<8x324xf32>
    %192 = arith.addf %188, %191 : vector<8x324xf32>
    %c0_227 = arith.constant 0 : index
    %c128_228 = arith.constant 128 : index
    %193 = vector.load %arg6[%c0_227, %c128_228] : memref<8x512xf32, #tpu.memory_space<vmem>>, vector<8x324xf32>
    %194 = arith.addf %192, %193 : vector<8x324xf32>
    %cst_229 = arith.constant 0.000000e+00 : f32
    %195 = vector.shape_cast %7 : vector<1x324xi1> to vector<1x324xi1>
    %196 = vector.broadcast %195 : vector<1x324xi1> to vector<8x324xi1>
    %197 = vector.broadcast %cst_229 : f32 to vector<8x324xf32>
    %198 = arith.select %196, %194, %197 : vector<8x324xi1>, vector<8x324xf32>
    %c0_230 = arith.constant 0 : index
    %c128_231 = arith.constant 128 : index
    %199 = vector.load %arg6[%c0_230, %c128_231] : memref<8x512xf32, #tpu.memory_space<vmem>>, vector<8x324xf32>
    tpu.vector_store %arg6[%c0_230, %c128_231], %198 {strides = array<i32>} : memref<8x512xf32, #tpu.memory_space<vmem>>, vector<8x324xf32>,
    %c0_232 = arith.constant 0 : index
    %c109_233 = arith.constant 109 : index
    %200 = vector.load %arg6[%c0_232, %c109_233] : memref<8x512xf32, #tpu.memory_space<vmem>>, vector<8x324xf32>
    %c0_234 = arith.constant 0 : index
    %c110_235 = arith.constant 110 : index
    %201 = vector.load %arg6[%c0_234, %c110_235] : memref<8x512xf32, #tpu.memory_space<vmem>>, vector<8x324xf32>
    %c0_236 = arith.constant 0 : index
    %c111_237 = arith.constant 111 : index
    %202 = vector.load %arg6[%c0_236, %c111_237] : memref<8x512xf32, #tpu.memory_space<vmem>>, vector<8x324xf32>
    %c0_238 = arith.constant 0 : index
    %c127_239 = arith.constant 127 : index
    %203 = vector.load %arg6[%c0_238, %c127_239] : memref<8x512xf32, #tpu.memory_space<vmem>>, vector<8x324xf32>
    %c0_240 = arith.constant 0 : index
    %c128_241 = arith.constant 128 : index
    %204 = vector.load %arg6[%c0_240, %c128_241] : memref<8x512xf32, #tpu.memory_space<vmem>>, vector<8x324xf32>
    %c0_242 = arith.constant 0 : index
    %c129_243 = arith.constant 129 : index
    %205 = vector.load %arg6[%c0_242, %c129_243] : memref<8x512xf32, #tpu.memory_space<vmem>>, vector<8x324xf32>
    %c0_244 = arith.constant 0 : index
    %c145_245 = arith.constant 145 : index
    %206 = vector.load %arg6[%c0_244, %c145_245] : memref<8x512xf32, #tpu.memory_space<vmem>>, vector<8x324xf32>
    %c0_246 = arith.constant 0 : index
    %c146_247 = arith.constant 146 : index
    %207 = vector.load %arg6[%c0_246, %c146_247] : memref<8x512xf32, #tpu.memory_space<vmem>>, vector<8x324xf32>
    %c0_248 = arith.constant 0 : index
    %c147_249 = arith.constant 147 : index
    %208 = vector.load %arg6[%c0_248, %c147_249] : memref<8x512xf32, #tpu.memory_space<vmem>>, vector<8x324xf32>
    %209 = tpu.concatenate %200, %201, %202, %203, %204, %205, %206, %207, %208 in 0 : vector<8x324xf32>, vector<8x324xf32>, vector<8x324xf32>, vector<8x324xf32>, vector<8x324xf32>, vector<8x324xf32>, vector<8x324xf32>, vector<8x324xf32>, vector<8x324xf32> -> vector<72x324xf32>
    %c2_250 = arith.constant 2 : index
    %c0_251 = arith.constant 0 : index
    %c0_252 = arith.constant 0 : index
    %210 = vector.load %arg2[%c2_250, %c0_251, %c0_252] : memref<5x8x72xf32, #tpu.memory_space<vmem>>, vector<1x8x72xf32>
    %211 = vector.shape_cast %210 : vector<1x8x72xf32> to vector<8x72xf32>
    %cst_253 = arith.constant dense<0.000000e+00> : vector<8x324xf32>
    %212 = tpu.matmul %211, %209, %cst_253 {dimension_numbers = #tpu.dot_dimension_numbers<[1], [0], [0], [1], [0, 0, 1, 1], [], []>} : vector<8x72xf32>, vector<72x324xf32>, vector<8x324xf32> -> vector<8x324xf32>
    %c2_254 = arith.constant 2 : index
    %c0_255 = arith.constant 0 : index
    %c0_256 = arith.constant 0 : index
    %213 = vector.load %arg3[%c2_254, %c0_255, %c0_256] : memref<5x8x1xf32, #tpu.memory_space<vmem>>, vector<1x8x1xf32>
    %214 = vector.shape_cast %213 : vector<1x8x1xf32> to vector<8x1xf32>
    %215 = vector.broadcast %214 : vector<8x1xf32> to vector<8x324xf32>
    %216 = arith.addf %212, %215 : vector<8x324xf32>
    %cst_257 = arith.constant 0.000000e+00 : f32
    %217 = vector.broadcast %cst_257 : f32 to vector<8x324xf32>
    %218 = arith.maximumf %216, %217 : vector<8x324xf32>
    %cst_258 = arith.constant 0.000000e+00 : f32
    %219 = vector.shape_cast %7 : vector<1x324xi1> to vector<1x324xi1>
    %220 = vector.broadcast %219 : vector<1x324xi1> to vector<8x324xi1>
    %221 = vector.broadcast %cst_258 : f32 to vector<8x324xf32>
    %222 = arith.select %220, %218, %221 : vector<8x324xi1>, vector<8x324xf32>
    %c0_259 = arith.constant 0 : index
    %c128_260 = arith.constant 128 : index
    %223 = vector.load %arg7[%c0_259, %c128_260] : memref<8x512xf32, #tpu.memory_space<vmem>>, vector<8x324xf32>
    tpu.vector_store %arg7[%c0_259, %c128_260], %222 {strides = array<i32>} : memref<8x512xf32, #tpu.memory_space<vmem>>, vector<8x324xf32>,
    %c0_261 = arith.constant 0 : index
    %c109_262 = arith.constant 109 : index
    %224 = vector.load %arg7[%c0_261, %c109_262] : memref<8x512xf32, #tpu.memory_space<vmem>>, vector<8x324xf32>
    %c0_263 = arith.constant 0 : index
    %c110_264 = arith.constant 110 : index
    %225 = vector.load %arg7[%c0_263, %c110_264] : memref<8x512xf32, #tpu.memory_space<vmem>>, vector<8x324xf32>
    %c0_265 = arith.constant 0 : index
    %c111_266 = arith.constant 111 : index
    %226 = vector.load %arg7[%c0_265, %c111_266] : memref<8x512xf32, #tpu.memory_space<vmem>>, vector<8x324xf32>
    %c0_267 = arith.constant 0 : index
    %c127_268 = arith.constant 127 : index
    %227 = vector.load %arg7[%c0_267, %c127_268] : memref<8x512xf32, #tpu.memory_space<vmem>>, vector<8x324xf32>
    %c0_269 = arith.constant 0 : index
    %c128_270 = arith.constant 128 : index
    %228 = vector.load %arg7[%c0_269, %c128_270] : memref<8x512xf32, #tpu.memory_space<vmem>>, vector<8x324xf32>
    %c0_271 = arith.constant 0 : index
    %c129_272 = arith.constant 129 : index
    %229 = vector.load %arg7[%c0_271, %c129_272] : memref<8x512xf32, #tpu.memory_space<vmem>>, vector<8x324xf32>
    %c0_273 = arith.constant 0 : index
    %c145_274 = arith.constant 145 : index
    %230 = vector.load %arg7[%c0_273, %c145_274] : memref<8x512xf32, #tpu.memory_space<vmem>>, vector<8x324xf32>
    %c0_275 = arith.constant 0 : index
    %c146_276 = arith.constant 146 : index
    %231 = vector.load %arg7[%c0_275, %c146_276] : memref<8x512xf32, #tpu.memory_space<vmem>>, vector<8x324xf32>
    %c0_277 = arith.constant 0 : index
    %c147_278 = arith.constant 147 : index
    %232 = vector.load %arg7[%c0_277, %c147_278] : memref<8x512xf32, #tpu.memory_space<vmem>>, vector<8x324xf32>
    %233 = tpu.concatenate %224, %225, %226, %227, %228, %229, %230, %231, %232 in 0 : vector<8x324xf32>, vector<8x324xf32>, vector<8x324xf32>, vector<8x324xf32>, vector<8x324xf32>, vector<8x324xf32>, vector<8x324xf32>, vector<8x324xf32>, vector<8x324xf32> -> vector<72x324xf32>
    %c3_279 = arith.constant 3 : index
    %c0_280 = arith.constant 0 : index
    %c0_281 = arith.constant 0 : index
    %234 = vector.load %arg2[%c3_279, %c0_280, %c0_281] : memref<5x8x72xf32, #tpu.memory_space<vmem>>, vector<1x8x72xf32>
    %235 = vector.shape_cast %234 : vector<1x8x72xf32> to vector<8x72xf32>
    %cst_282 = arith.constant dense<0.000000e+00> : vector<8x324xf32>
    %236 = tpu.matmul %235, %233, %cst_282 {dimension_numbers = #tpu.dot_dimension_numbers<[1], [0], [0], [1], [0, 0, 1, 1], [], []>} : vector<8x72xf32>, vector<72x324xf32>, vector<8x324xf32> -> vector<8x324xf32>
    %c3_283 = arith.constant 3 : index
    %c0_284 = arith.constant 0 : index
    %c0_285 = arith.constant 0 : index
    %237 = vector.load %arg3[%c3_283, %c0_284, %c0_285] : memref<5x8x1xf32, #tpu.memory_space<vmem>>, vector<1x8x1xf32>
    %238 = vector.shape_cast %237 : vector<1x8x1xf32> to vector<8x1xf32>
    %239 = vector.broadcast %238 : vector<8x1xf32> to vector<8x324xf32>
    %240 = arith.addf %236, %239 : vector<8x324xf32>
    %c0_286 = arith.constant 0 : index
    %c128_287 = arith.constant 128 : index
    %241 = vector.load %arg6[%c0_286, %c128_287] : memref<8x512xf32, #tpu.memory_space<vmem>>, vector<8x324xf32>
    %242 = arith.addf %240, %241 : vector<8x324xf32>
    %cst_288 = arith.constant 0.000000e+00 : f32
    %243 = vector.shape_cast %7 : vector<1x324xi1> to vector<1x324xi1>
    %244 = vector.broadcast %243 : vector<1x324xi1> to vector<8x324xi1>
    %245 = vector.broadcast %cst_288 : f32 to vector<8x324xf32>
    %246 = arith.select %244, %242, %245 : vector<8x324xi1>, vector<8x324xf32>
    %c0_289 = arith.constant 0 : index
    %c128_290 = arith.constant 128 : index
    %247 = vector.load %arg6[%c0_289, %c128_290] : memref<8x512xf32, #tpu.memory_space<vmem>>, vector<8x324xf32>
    tpu.vector_store %arg6[%c0_289, %c128_290], %246 {strides = array<i32>} : memref<8x512xf32, #tpu.memory_space<vmem>>, vector<8x324xf32>,
    %c0_291 = arith.constant 0 : index
    %c109_292 = arith.constant 109 : index
    %248 = vector.load %arg6[%c0_291, %c109_292] : memref<8x512xf32, #tpu.memory_space<vmem>>, vector<8x324xf32>
    %c0_293 = arith.constant 0 : index
    %c110_294 = arith.constant 110 : index
    %249 = vector.load %arg6[%c0_293, %c110_294] : memref<8x512xf32, #tpu.memory_space<vmem>>, vector<8x324xf32>
    %c0_295 = arith.constant 0 : index
    %c111_296 = arith.constant 111 : index
    %250 = vector.load %arg6[%c0_295, %c111_296] : memref<8x512xf32, #tpu.memory_space<vmem>>, vector<8x324xf32>
    %c0_297 = arith.constant 0 : index
    %c127_298 = arith.constant 127 : index
    %251 = vector.load %arg6[%c0_297, %c127_298] : memref<8x512xf32, #tpu.memory_space<vmem>>, vector<8x324xf32>
    %c0_299 = arith.constant 0 : index
    %c128_300 = arith.constant 128 : index
    %252 = vector.load %arg6[%c0_299, %c128_300] : memref<8x512xf32, #tpu.memory_space<vmem>>, vector<8x324xf32>
    %c0_301 = arith.constant 0 : index
    %c129_302 = arith.constant 129 : index
    %253 = vector.load %arg6[%c0_301, %c129_302] : memref<8x512xf32, #tpu.memory_space<vmem>>, vector<8x324xf32>
    %c0_303 = arith.constant 0 : index
    %c145_304 = arith.constant 145 : index
    %254 = vector.load %arg6[%c0_303, %c145_304] : memref<8x512xf32, #tpu.memory_space<vmem>>, vector<8x324xf32>
    %c0_305 = arith.constant 0 : index
    %c146_306 = arith.constant 146 : index
    %255 = vector.load %arg6[%c0_305, %c146_306] : memref<8x512xf32, #tpu.memory_space<vmem>>, vector<8x324xf32>
    %c0_307 = arith.constant 0 : index
    %c147_308 = arith.constant 147 : index
    %256 = vector.load %arg6[%c0_307, %c147_308] : memref<8x512xf32, #tpu.memory_space<vmem>>, vector<8x324xf32>
    %257 = tpu.concatenate %248, %249, %250, %251, %252, %253, %254, %255, %256 in 0 : vector<8x324xf32>, vector<8x324xf32>, vector<8x324xf32>, vector<8x324xf32>, vector<8x324xf32>, vector<8x324xf32>, vector<8x324xf32>, vector<8x324xf32>, vector<8x324xf32> -> vector<72x324xf32>
    %c4 = arith.constant 4 : index
    %c0_309 = arith.constant 0 : index
    %c0_310 = arith.constant 0 : index
    %258 = vector.load %arg2[%c4, %c0_309, %c0_310] : memref<5x8x72xf32, #tpu.memory_space<vmem>>, vector<1x8x72xf32>
    %259 = vector.shape_cast %258 : vector<1x8x72xf32> to vector<8x72xf32>
    %cst_311 = arith.constant dense<0.000000e+00> : vector<8x324xf32>
    %260 = tpu.matmul %259, %257, %cst_311 {dimension_numbers = #tpu.dot_dimension_numbers<[1], [0], [0], [1], [0, 0, 1, 1], [], []>} : vector<8x72xf32>, vector<72x324xf32>, vector<8x324xf32> -> vector<8x324xf32>
    %c4_312 = arith.constant 4 : index
    %c0_313 = arith.constant 0 : index
    %c0_314 = arith.constant 0 : index
    %261 = vector.load %arg3[%c4_312, %c0_313, %c0_314] : memref<5x8x1xf32, #tpu.memory_space<vmem>>, vector<1x8x1xf32>
    %262 = vector.shape_cast %261 : vector<1x8x1xf32> to vector<8x1xf32>
    %263 = vector.broadcast %262 : vector<8x1xf32> to vector<8x324xf32>
    %264 = arith.addf %260, %263 : vector<8x324xf32>
    %cst_315 = arith.constant 0.000000e+00 : f32
    %265 = vector.shape_cast %7 : vector<1x324xi1> to vector<1x324xi1>
    %266 = vector.broadcast %265 : vector<1x324xi1> to vector<8x324xi1>
    %267 = vector.broadcast %cst_315 : f32 to vector<8x324xf32>
    %268 = arith.select %266, %264, %267 : vector<8x324xi1>, vector<8x324xf32>
    %c0_316 = arith.constant 0 : index
    %c128_317 = arith.constant 128 : index
    %269 = vector.load %arg7[%c0_316, %c128_317] : memref<8x512xf32, #tpu.memory_space<vmem>>, vector<8x324xf32>
    tpu.vector_store %arg7[%c0_316, %c128_317], %268 {strides = array<i32>} : memref<8x512xf32, #tpu.memory_space<vmem>>, vector<8x324xf32>,
    %c0_318 = arith.constant 0 : index
    %c0_319 = arith.constant 0 : index
    %270 = vector.load %arg7[%c0_318, %c0_319] : memref<8x512xf32, #tpu.memory_space<vmem>>, vector<8x512xf32>
    %c0_320 = arith.constant 0 : index
    %c0_321 = arith.constant 0 : index
    %c0_322 = arith.constant 0 : index
    %271 = vector.load %arg5[%c0_320, %c0_321, %c0_322] : memref<1x8x512xf32, #tpu.memory_space<vmem>>, vector<1x8x512xf32>
    %272 = vector.shape_cast %271 : vector<1x8x512xf32> to vector<8x512xf32>
    %273 = vector.shape_cast %270 : vector<8x512xf32> to vector<1x8x512xf32>
    tpu.vector_store %arg5[%c0_320, %c0_321, %c0_322], %273 {strides = array<i32>} : memref<1x8x512xf32, #tpu.memory_space<vmem>>, vector<1x8x512xf32>,
    return
  }
  func.func @transform_0(%arg0: i32) -> (i32, i32, i32) {
    %c0_i32 = arith.constant 0 : i32
    %c0_i32_0 = arith.constant 0 : i32
    %c0_i32_1 = arith.constant 0 : i32
    return %arg0, %c0_i32, %c0_i32_0 : i32, i32, i32
  }
  func.func @transform_1(%arg0: i32) -> (i32, i32, i32) {
    %c0_i32 = arith.constant 0 : i32
    %c0_i32_0 = arith.constant 0 : i32
    %c0_i32_1 = arith.constant 0 : i32
    %c0_i32_2 = arith.constant 0 : i32
    return %c0_i32, %c0_i32_0, %c0_i32_1 : i32, i32, i32
  }
  func.func @transform_2(%arg0: i32) -> (i32, i32, i32) {
    %c0_i32 = arith.constant 0 : i32
    %c0_i32_0 = arith.constant 0 : i32
    %c0_i32_1 = arith.constant 0 : i32
    %c0_i32_2 = arith.constant 0 : i32
    return %c0_i32, %c0_i32_0, %c0_i32_1 : i32, i32, i32
  }
  func.func @transform_3(%arg0: i32) -> (i32, i32) {
    %c0_i32 = arith.constant 0 : i32
    %c0_i32_0 = arith.constant 0 : i32
    %c0_i32_1 = arith.constant 0 : i32
    return %c0_i32, %c0_i32_0 : i32, i32
  }
  func.func @transform_4(%arg0: i32) -> (i32, i32, i32) {
    %c0_i32 = arith.constant 0 : i32
    %c0_i32_0 = arith.constant 0 : i32
    %c0_i32_1 = arith.constant 0 : i32
    return %arg0, %c0_i32, %c0_i32_0 : i32, i32, i32
  }
}

</mosaic_0001>

<llo_original>
// kernel: drrn_forward.1
$region0: #{drrn_forward.1}
  #allocation0 [shape = 'u32[]', space=smem, size = 0x4, offset = 0x4, fixed_abs, tag = 'smem constant byte address 0x4 - core index']
  #allocation1 [shape = 'u32[144,128]{1,0:T(1,128)}', space=vmem, size = 0x12000, scoped, tag = 'internal scratch']
  #allocation2 [shape = 'f32[8,512]{1,0:T(8,128)}', space=vmem, size = 0x4000, scoped, tag = 'scratch operand']
  #allocation3 [shape = 'f32[8,512]{1,0:T(8,128)}', space=vmem, size = 0x4000, scoped, tag = 'scratch operand']
  %s0 = inlined_call_operand.vmem [shape: f32[2,8,512], index: 0, kind: input, shape index: {}]
  %s1 = inlined_call_operand.vmem [shape: f32[5,8,72], index: 1, kind: input, shape index: {}]
  %s2 = inlined_call_operand.vmem [shape: f32[5,8,1], index: 2, kind: input, shape index: {}]
  %s3 = inlined_call_operand.vmem [shape: f32[1,324], index: 3, kind: input, shape index: {}]
  %s4 = inlined_call_operand.vmem [shape: f32[2,8,512], index: 4, kind: output, shape index: {}]
  %s5 = sld [smem:[#allocation0]]
  $region49: #{drrn_forward.1} parent=0
    _
  %s7 = ssub.s32 1, %s5
  %s8 = scalar_select 0, %s7, %s5
  loop: start=0, step=1, limit=4
  $region2: #{drrn_forward.1} parent=0 // loop_pre_header
    _
  $region3: #{drrn_forward.1} parent=0 // loop_header
    %s10 = sphi 0, %s14
    %p11 = scmp.ge.s32.totalorder %s10, 4
    %s20 = sphi 0, %s22
    %s23 = sphi 0, %s20
    %s24 = sphi 0, %s23
    %s40 = sphi 0, %s24
    %s44 = sphi 0, %s44
    %s46 = sphi 0, %s44
    %s47 = sphi 0, %s46
    %s61 = sphi 0, %s47
    %s65 = sphi 0, %s65
    %s67 = sphi 0, %s65
    %s68 = sphi 0, %s67
    %s82 = sphi 0, %s68
    %s86 = sphi 0, %s86
    %s88 = sphi 0, %s86
    %s89 = sphi 0, %s88
    %s103 = sphi 0, %s89
    %s109 = sphi 0, %s111
    %s112 = sphi 0, %s109
    %s113 = sphi 0, %s112
    %s129 = sphi 0, %s113
  $region4: #{drrn_forward.1} parent=0 // loop_header_branch
    %13 = sbr.rel (%p11) target = $region8
  $region5: #{drrn_forward.1} parent=0 // loop_body
    %s15 = ssub.s32 %s10, 1
    %s16 = ssub.s32 %s10, 2
    %s17 = sadd.s32 %s10, 1
    %s18 = ssub.s32 %s10, %s17
    %p19 = scmp.eq.s32.totalorder %s18, 0
    %s21 = sadd.s32 %s20, 1
    %s22 = scalar_select %p19, %s20, %s21
    %p25 = pneg %p19
    %p26 = scmp.eq.s32.totalorder %s10, 1
    %p27 = por %p25, %p26
    %p28 = scmp.ne.s32.totalorder %s20, %s23
    %p29 = scmp.eq.s32.totalorder %s10, 0
    %p30 = por %p28, %p29
    %p31 = scmp.ne.s32.totalorder %s20, %s23
    %p32 = scmp.eq.s32.totalorder %s15, 1
    %p33 = por %p31, %p32
    %p34 = scmp.ne.s32.totalorder %s23, %s24
    %p35 = scmp.eq.s32.totalorder %s15, 0
    %p36 = por %p34, %p35
    %p37 = scmp.ne.s32.totalorder %s23, %s24
    %p38 = scmp.eq.s32.totalorder %s16, 1
    %p39 = por %p37, %p38
    %p41 = scmp.ne.s32.totalorder %s24, %s40
    %p42 = scmp.eq.s32.totalorder %s16, 0
    %p43 = por %p41, %p42
    %s45 = sadd.s32 %s44, 1
    %p48 = scmp.eq.s32.totalorder %s10, 1
    %p49 = scmp.ne.s32.totalorder %s44, %s46
    %p50 = scmp.eq.s32.totalorder %s10, 0
    %p51 = por %p49, %p50
    %p52 = scmp.ne.s32.totalorder %s44, %s46
    %p53 = scmp.eq.s32.totalorder %s15, 1
    %p54 = por %p52, %p53
    %p55 = scmp.ne.s32.totalorder %s46, %s47
    %p56 = scmp.eq.s32.totalorder %s15, 0
    %p57 = por %p55, %p56
    %p58 = scmp.ne.s32.totalorder %s46, %s47
    %p59 = scmp.eq.s32.totalorder %s16, 1
    %p60 = por %p58, %p59
    %p62 = scmp.ne.s32.totalorder %s47, %s61
    %p63 = scmp.eq.s32.totalorder %s16, 0
    %p64 = por %p62, %p63
    %s66 = sadd.s32 %s65, 1
    %p69 = scmp.eq.s32.totalorder %s10, 1
    %p70 = scmp.ne.s32.totalorder %s65, %s67
    %p71 = scmp.eq.s32.totalorder %s10, 0
    %p72 = por %p70, %p71
    %p73 = scmp.ne.s32.totalorder %s65, %s67
    %p74 = scmp.eq.s32.totalorder %s15, 1
    %p75 = por %p73, %p74
    %p76 = scmp.ne.s32.totalorder %s67, %s68
    %p77 = scmp.eq.s32.totalorder %s15, 0
    %p78 = por %p76, %p77
    %p79 = scmp.ne.s32.totalorder %s67, %s68
    %p80 = scmp.eq.s32.totalorder %s16, 1
    %p81 = por %p79, %p80
    %p83 = scmp.ne.s32.totalorder %s68, %s82
    %p84 = scmp.eq.s32.totalorder %s16, 0
    %p85 = por %p83, %p84
    %s87 = sadd.s32 %s86, 1
    %p90 = scmp.eq.s32.totalorder %s10, 1
    %p91 = scmp.ne.s32.totalorder %s86, %s88
    %p92 = scmp.eq.s32.totalorder %s10, 0
    %p93 = por %p91, %p92
    %p94 = scmp.ne.s32.totalorder %s86, %s88
    %p95 = scmp.eq.s32.totalorder %s15, 1
    %p96 = por %p94, %p95
    %p97 = scmp.ne.s32.totalorder %s88, %s89
    %p98 = scmp.eq.s32.totalorder %s15, 0
    %p99 = por %p97, %p98
    %p100 = scmp.ne.s32.totalorder %s88, %s89
    %p101 = scmp.eq.s32.totalorder %s16, 1
    %p102 = por %p100, %p101
    %p104 = scmp.ne.s32.totalorder %s89, %s103
    %p105 = scmp.eq.s32.totalorder %s16, 0
    %p106 = por %p104, %p105
    %s107 = ssub.s32 %s10, %s17
    %p108 = scmp.eq.s32.totalorder %s107, 0
    %s110 = sadd.s32 %s109, 1
    %s111 = scalar_select %p108, %s109, %s110
    %p114 = pneg %p108
    %p115 = scmp.eq.s32.totalorder %s10, 1
    %p116 = por %p114, %p115
    %p117 = scmp.ne.s32.totalorder %s109, %s112
    %p118 = scmp.eq.s32.totalorder %s10, 0
    %p119 = por %p117, %p118
    %p120 = scmp.ne.s32.totalorder %s109, %s112
    %p121 = scmp.eq.s32.totalorder %s15, 1
    %p122 = por %p120, %p121
    %p123 = scmp.ne.s32.totalorder %s112, %s113
    %p124 = scmp.eq.s32.totalorder %s15, 0
    %p125 = por %p123, %p124
    %p126 = scmp.ne.s32.totalorder %s112, %s113
    %p127 = scmp.eq.s32.totalorder %s16, 1
    %p128 = por %p126, %p127
    %p130 = scmp.ne.s32.totalorder %s113, %s129
    %p131 = scmp.eq.s32.totalorder %s16, 0
    %p132 = por %p130, %p131
    %p133 = scmp.le.s32.totalorder 1, %s10
    %p134 = scmp.lt.s32.totalorder %s10, 3
    %p135 = pnand %p133, %p134
    %p136 = pneg %p135
    // Predicated region
    $region9: #{drrn_forward.1} parent=5 // pred_check
      _
    $region10: #{drrn_forward.1} parent=5 // pred_check_branch
      %138 = sbr.rel (%p135) target = $region12
    $region11: #{drrn_forward.1} parent=5 // pred_region
      %s139 = ssub.s32 %s10, 1
      // Predicated region
      $region13: #{drrn_forward.1} parent=11 // pred_check
        %p140 = pneg %p57
      $region14: #{drrn_forward.1} parent=11 // pred_check_branch
        %142 = sbr.rel (%p140) target = $region16
      $region15: #{drrn_forward.1} parent=11 // pred_region
        _
      $region16: #{drrn_forward.1} parent=11 // pred_fallthru
        _
      // Predicated region
      $region17: #{drrn_forward.1} parent=11 // pred_check
        %p143 = pneg %p78
      $region18: #{drrn_forward.1} parent=11 // pred_check_branch
        %145 = sbr.rel (%p143) target = $region20
      $region19: #{drrn_forward.1} parent=11 // pred_region
        _
      $region20: #{drrn_forward.1} parent=11 // pred_fallthru
        _
      // Predicated region
      $region21: #{drrn_forward.1} parent=11 // pred_check
        %p146 = pneg %p99
      $region22: #{drrn_forward.1} parent=11 // pred_check_branch
        %148 = sbr.rel (%p146) target = $region24
      $region23: #{drrn_forward.1} parent=11 // pred_region
        _
      $region24: #{drrn_forward.1} parent=11 // pred_fallthru
        _
    $region12: #{drrn_forward.1} parent=5 // pred_fallthru
      _
    %p149 = scmp.lt.s32.totalorder %s10, 2
    // Predicated region
    $region25: #{drrn_forward.1} parent=5 // pred_check
      %p150 = pneg %p149
    $region26: #{drrn_forward.1} parent=5 // pred_check_branch
      %152 = sbr.rel (%p150) target = $region28
    $region27: #{drrn_forward.1} parent=5 // pred_region
      // Predicated region
      $region29: #{drrn_forward.1} parent=27 // pred_check
        %p153 = pneg %p30
      $region30: #{drrn_forward.1} parent=27 // pred_check_branch
        %155 = sbr.rel (%p153) target = $region32
      $region31: #{drrn_forward.1} parent=27 // pred_region
        %p156 = scmp.lt.s32.totalorder %s10, 1
        %s157 = scalar_select %p156, %s10, 1
        %s158 = smul.addr %s157, 4
        %s159 = smul.addr %s158, 8
        %s160 = scalar_lea.vmem %s0, %s159
      $region32: #{drrn_forward.1} parent=27 // pred_fallthru
        _
    $region28: #{drrn_forward.1} parent=5 // pred_fallthru
      _
    %p161 = scmp.le.s32.totalorder 1, %s10
    %p162 = scmp.lt.s32.totalorder %s10, 3
    %p163 = pnand %p161, %p162
    %p164 = pneg %p163
    // Predicated region
    $region33: #{drrn_forward.1} parent=5 // pred_check
      _
    $region34: #{drrn_forward.1} parent=5 // pred_check_branch
      %166 = sbr.rel (%p163) target = $region36
    $region35: #{drrn_forward.1} parent=5 // pred_region
      %s167 = ssub.s32 %s10, 1
      %p168 = scmp.lt.s32.totalorder %s15, 1
      %s169 = scalar_select %p168, %s15, 1
      %s170 = smul.addr %s169, 4
      %s171 = smul.addr %s170, 8
      %s172 = scalar_lea.vmem %s0, %s171
      %p173 = pneg %p36
      %p174 = pneg %p33
      %p175 = pneg %p57
      %p176 = pneg %p54
      %p177 = pneg %p78
      %p178 = pneg %p75
      %p179 = pneg %p99
      %p180 = pneg %p96
      %p181 = pneg %p125
      %p182 = pneg %p122
      %p183 = scmp.lt.s32.totalorder %s15, 1
      %s184 = scalar_select %p183, %s15, 1
      %s185 = smul.addr %s184, 4
      %s186 = smul.addr %s185, 8
      %s187 = scalar_lea.vmem %s4, %s186
      %p188 = scmp.lt.s32.totalorder %s15, 1
      %s189 = scalar_select %p188, %s15, 1
      %s190 = smul.addr %s189, 4
      %s191 = smul.addr %s190, 8
      %s192 = scalar_lea.vmem %s0, %s191
      %p193 = scmp.lt.s32.totalorder %s15, 1
      %s194 = scalar_select %p193, %s15, 1
      %s195 = smul.addr %s194, 4
      %s196 = smul.addr %s195, 8
      %s197 = scalar_lea.vmem %s4, %s196
      %v198 = vld [vmem:[%s192] sm:$0xff]
      %v199 = vld [vmem:[%s192 + $0x8] sm:$0xff]
      %v200 = vld [vmem:[%s192 + $0x10] sm:$0xff]
      %v201 = vld [vmem:[%s192 + $0x18] sm:$0xff]
      %202 = vst [vmem:[#allocation2] sm:$0xff] %v198
      %203 = vst [vmem:[#allocation2 + $0x8] sm:$0xff] %v199
      %204 = vst [vmem:[#allocation2 + $0x10] sm:$0xff] %v200
      %205 = vst [vmem:[#allocation2 + $0x18] sm:$0xff] %v201
      %206 = vst [vmem:[#allocation3] sm:$0xff] 0.0
      %207 = vst [vmem:[#allocation3 + $0x8] sm:$0xff] 0.0
      %208 = vst [vmem:[#allocation3 + $0x10] sm:$0xff] 0.0
      %209 = vst [vmem:[#allocation3 + $0x18] sm:$0xff] 0.0
      %v210 = vld [vmem:[%s3] sm:$0x7]
      %vm211 = vcmp.gt.f32.partialorder %v210, 0.5
      %v212 = vld [vmem:[#allocation2] sm:$0xff]
      %v213 = vld [vmem:[#allocation2 + $0x8] sm:$0xff]
      %v214 = vld [vmem:[#allocation2 + $0x10] sm:$0xff]
      %v215 = vld [vmem:[#allocation2 + $0x18] sm:$0xff]
      %220 = vrot.lane.b32.xlu0 %v212, 127
      %v221 = vpop.permute.xlu0 %220
      %222 = vrot.lane.b32.xlu0 %v213, 127
      %v223 = vpop.permute.xlu0 %222
      %224 = vrot.lane.b32.xlu0 %v214, 127
      %v225 = vpop.permute.xlu0 %224
      %226 = vrot.lane.b32.xlu0 %v215, 127
      %v227 = vpop.permute.xlu0 %226
      %vm228 = vcmask 1039360
      %v229 = vsel %vm228, %v221, %v223
      %v230 = vsel %vm228, %v223, %v225
      %v231 = vsel %vm228, %v225, %v227
      %232 = vrot.lane.b32.xlu0 %v212, 126
      %v233 = vpop.permute.xlu0 %232
      %234 = vrot.lane.b32.xlu0 %v213, 126
      %v235 = vpop.permute.xlu0 %234
      %236 = vrot.lane.b32.xlu0 %v214, 126
      %v237 = vpop.permute.xlu0 %236
      %238 = vrot.lane.b32.xlu0 %v215, 126
      %v239 = vpop.permute.xlu0 %238
      %vm240 = vcmask 1031168
      %v241 = vsel %vm240, %v233, %v235
      %v242 = vsel %vm240, %v235, %v237
      %v243 = vsel %vm240, %v237, %v239
      %244 = vrot.lane.b32.xlu0 %v212, 110
      %v245 = vpop.permute.xlu0 %244
      %246 = vrot.lane.b32.xlu0 %v213, 110
      %v247 = vpop.permute.xlu0 %246
      %248 = vrot.lane.b32.xlu0 %v214, 110
      %v249 = vpop.permute.xlu0 %248
      %250 = vrot.lane.b32.xlu0 %v215, 110
      %v251 = vpop.permute.xlu0 %250
      %vm252 = vcmask 900096
      %v253 = vsel %vm252, %v245, %v247
      %v254 = vsel %vm252, %v247, %v249
      %v255 = vsel %vm252, %v249, %v251
      %256 = vrot.lane.b32.xlu0 %v213, 109
      %v257 = vpop.permute.xlu0 %256
      %258 = vrot.lane.b32.xlu0 %v214, 109
      %v259 = vpop.permute.xlu0 %258
      %260 = vrot.lane.b32.xlu0 %v215, 109
      %v261 = vpop.permute.xlu0 %260
      %vm262 = vcmask 891904
      %v263 = vsel %vm262, %v257, %v259
      %v264 = vsel %vm262, %v259, %v261
      %265 = vrot.lane.b32.xlu0 %v213, 108
      %v266 = vpop.permute.xlu0 %265
      %267 = vrot.lane.b32.xlu0 %v214, 108
      %v268 = vpop.permute.xlu0 %267
      %269 = vrot.lane.b32.xlu0 %v215, 108
      %v270 = vpop.permute.xlu0 %269
      %vm271 = vcmask 883712
      %v272 = vsel %vm271, %v266, %v268
      %v273 = vsel %vm271, %v268, %v270
      %274 = vrot.lane.b32.xlu0 %v213, 92
      %v275 = vpop.permute.xlu0 %274
      %276 = vrot.lane.b32.xlu0 %v214, 92
      %v277 = vpop.permute.xlu0 %276
      %278 = vrot.lane.b32.xlu0 %v215, 92
      %v279 = vpop.permute.xlu0 %278
      %vm280 = vcmask 752640
      %v281 = vsel %vm280, %v275, %v277
      %v282 = vsel %vm280, %v277, %v279
      %283 = vrot.lane.b32.xlu0 %v213, 91
      %v284 = vpop.permute.xlu0 %283
      %285 = vrot.lane.b32.xlu0 %v214, 91
      %v286 = vpop.permute.xlu0 %285
      %287 = vrot.lane.b32.xlu0 %v215, 91
      %v288 = vpop.permute.xlu0 %287
      %vm289 = vcmask 744448
      %v290 = vsel %vm289, %v284, %v286
      %v291 = vsel %vm289, %v286, %v288
      %292 = vrot.lane.b32.xlu0 %v213, 90
      %v293 = vpop.permute.xlu0 %292
      %294 = vrot.lane.b32.xlu0 %v214, 90
      %v295 = vpop.permute.xlu0 %294
      %296 = vrot.lane.b32.xlu0 %v215, 90
      %v297 = vpop.permute.xlu0 %296
      %vm298 = vcmask 736256
      %v299 = vsel %vm298, %v293, %v295
      %v300 = vsel %vm298, %v295, %v297
      %v301 = vld [vmem:[%s1] sm:$0xff]
      %v302 = vld [vmem:[%s2] sm:$0xff]
      %304 = vset.pattern.permute.xlu0 0
      %305 = vperm.xlu0 %304, %v302
      %v306 = vpop.permute.xlu0 %305
      %308 = vrot.lane.b32.xlu0 %v212, 19
      %v309 = vpop.permute.xlu0 %308
      %310 = vrot.lane.b32.xlu0 %v213, 19
      %v311 = vpop.permute.xlu0 %310
      %312 = vrot.lane.b32.xlu0 %v214, 19
      %v313 = vpop.permute.xlu0 %312
      %314 = vrot.lane.b32.xlu0 %v215, 19
      %v315 = vpop.permute.xlu0 %314
      %316 = vrot.lane.b32.xlu0 %v229, 19
      %v317 = vpop.permute.xlu0 %316
      %318 = vrot.lane.b32.xlu0 %v230, 19
      %v319 = vpop.permute.xlu0 %318
      %320 = vrot.lane.b32.xlu0 %v231, 19
      %v321 = vpop.permute.xlu0 %320
      %322 = vrot.lane.b32.xlu0 %v227, 19
      %v323 = vpop.permute.xlu0 %322
      %324 = vrot.lane.b32.xlu0 %v241, 19
      %v325 = vpop.permute.xlu0 %324
      %326 = vrot.lane.b32.xlu0 %v242, 19
      %v327 = vpop.permute.xlu0 %326
      %328 = vrot.lane.b32.xlu0 %v243, 19
      %v329 = vpop.permute.xlu0 %328
      %330 = vrot.lane.b32.xlu0 %v239, 19
      %v331 = vpop.permute.xlu0 %330
      %332 = vrot.lane.b32.xlu0 %v253, 19
      %v333 = vpop.permute.xlu0 %332
      %334 = vrot.lane.b32.xlu0 %v254, 19
      %v335 = vpop.permute.xlu0 %334
      %336 = vrot.lane.b32.xlu0 %v255, 19
      %v337 = vpop.permute.xlu0 %336
      %338 = vrot.lane.b32.xlu0 %v251, 19
      %v339 = vpop.permute.xlu0 %338
      %340 = vrot.lane.b32.xlu0 %v257, 19
      %v341 = vpop.permute.xlu0 %340
      %342 = vrot.lane.b32.xlu0 %v263, 19
      %v343 = vpop.permute.xlu0 %342
      %344 = vrot.lane.b32.xlu0 %v264, 19
      %v345 = vpop.permute.xlu0 %344
      %346 = vrot.lane.b32.xlu0 %v261, 19
      %v347 = vpop.permute.xlu0 %346
      %348 = vrot.lane.b32.xlu0 %v266, 19
      %v349 = vpop.permute.xlu0 %348
      %350 = vrot.lane.b32.xlu0 %v272, 19
      %v351 = vpop.permute.xlu0 %350
      %352 = vrot.lane.b32.xlu0 %v273, 19
      %v353 = vpop.permute.xlu0 %352
      %354 = vrot.lane.b32.xlu0 %v270, 19
      %v355 = vpop.permute.xlu0 %354
      %356 = vrot.lane.b32.xlu0 %v275, 19
      %v357 = vpop.permute.xlu0 %356
      %358 = vrot.lane.b32.xlu0 %v281, 19
      %v359 = vpop.permute.xlu0 %358
      %360 = vrot.lane.b32.xlu0 %v282, 19
      %v361 = vpop.permute.xlu0 %360
      %362 = vrot.lane.b32.xlu0 %v279, 19
      %v363 = vpop.permute.xlu0 %362
      %364 = vrot.lane.b32.xlu0 %v284, 19
      %v365 = vpop.permute.xlu0 %364
      %366 = vrot.lane.b32.xlu0 %v290, 19
      %v367 = vpop.permute.xlu0 %366
      %368 = vrot.lane.b32.xlu0 %v291, 19
      %v369 = vpop.permute.xlu0 %368
      %370 = vrot.lane.b32.xlu0 %v288, 19
      %v371 = vpop.permute.xlu0 %370
      %372 = vrot.lane.b32.xlu0 %v293, 19
      %v373 = vpop.permute.xlu0 %372
      %374 = vrot.lane.b32.xlu0 %v299, 19
      %v375 = vpop.permute.xlu0 %374
      %376 = vrot.lane.b32.xlu0 %v300, 19
      %v377 = vpop.permute.xlu0 %376
      %378 = vrot.lane.b32.xlu0 %v297, 19
      %v379 = vpop.permute.xlu0 %378
      %vm380 = vcmask 154624
      %v381 = vsel %vm380, %v309, %v311
      %v382 = vsel %vm380, %v311, %v313
      %v383 = vsel %vm380, %v313, %v315
      %v384 = vsel %vm380, %v317, %v319
      %v385 = vsel %vm380, %v319, %v321
      %v386 = vsel %vm380, %v321, %v323
      %v387 = vsel %vm380, %v325, %v327
      %v388 = vsel %vm380, %v327, %v329
      %v389 = vsel %vm380, %v329, %v331
      %v390 = vsel %vm380, %v333, %v335
      %v391 = vsel %vm380, %v335, %v337
      %v392 = vsel %vm380, %v337, %v339
      %v393 = vsel %vm380, %v341, %v343
      %v394 = vsel %vm380, %v343, %v345
      %v395 = vsel %vm380, %v345, %v347
      %v396 = vsel %vm380, %v349, %v351
      %v397 = vsel %vm380, %v351, %v353
      %v398 = vsel %vm380, %v353, %v355
      %v399 = vsel %vm380, %v357, %v359
      %v400 = vsel %vm380, %v359, %v361
      %v401 = vsel %vm380, %v361, %v363
      %v402 = vsel %vm380, %v365, %v367
      %v403 = vsel %vm380, %v367, %v369
      %v404 = vsel %vm380, %v369, %v371
      %v405 = vsel %vm380, %v373, %v375
      %v406 = vsel %vm380, %v375, %v377
      %v407 = vsel %vm380, %v377, %v379
      %vm435 = vcmask 588800
      %v437 = vsel %vm435, %v301, 0
      %439 = vmatprep.subr.mxu0 %v382
      %440 = vmatpush1.msra.mxu0 %v381
      %441 = vmatprep.subr.mxu0 %v385
      %442 = vmatpush1.msra.mxu0 %v384
      %443 = vmatprep.subr.mxu0 %v388
      %444 = vmatpush1.msra.mxu0 %v387
      %445 = vmatprep.subr.mxu0 %v391
      %446 = vmatpush1.msra.mxu0 %v390
      %447 = vmatprep.subr.mxu0 %v394
      %448 = vmatpush1.msra.mxu0 %v393
      %449 = vmatprep.subr.mxu0 %v397
      %450 = vmatpush1.msra.mxu0 %v396
      %451 = vmatprep.subr.mxu0 %v400
      %452 = vmatpush1.msra.mxu0 %v399
      %453 = vmatprep.subr.mxu0 %v403
      %454 = vmatpush1.msra.mxu0 %v402
      %455 = vmatprep.subr.mxu0 %v406
      %456 = vmatpush1.msra.mxu0 %v405
      %457 = vmatprep.subr.mxu0 0.0
      %458 = vmatpush1.msra.mxu0 0.0
      %459 = vmatprep.subr.mxu0 0.0
      %460 = vmatpush1.msra.mxu0 0.0
      %461 = vmatprep.subr.mxu0 0.0
      %462 = vmatpush1.msra.mxu0 0.0
      %463 = vmatprep.subr.mxu0 0.0
      %464 = vmatpush1.msra.mxu0 0.0
      %465 = vmatprep.subr.mxu0 0.0
      %466 = vmatpush1.msra.mxu0 0.0
      %467 = vmatprep.subr.mxu0 0.0
      %468 = vmatpush1.msra.mxu0 0.0
      %469 = vmatprep.subr.mxu0 0.0
      %470 = vmatpush1.msra.mxu0 0.0
      %471 = vmatprep.subr.mxu0 0.0
      %472 = vmatpush1.msra.mxu0 0.0
      %473 = vmatprep.subr.mxu0 0.0
      %474 = vmatpush1.msra.mxu0 0.0
      %475 = vmatprep.subr.mxu0 0.0
      %476 = vmatpush1.msra.mxu0 0.0
      %477 = vmatprep.subr.mxu0 0.0
      %478 = vmatpush1.msra.mxu0 0.0
      %479 = vmatprep.subr.mxu0 0.0
      %480 = vmatpush1.msra.mxu0 0.0
      %481 = vmatprep.subr.mxu0 0.0
      %482 = vmatpush1.msra.mxu0 0.0
      %483 = vmatprep.subr.mxu0 0.0
      %484 = vmatpush1.msra.mxu0 0.0
      %485 = vmatprep.subr.mxu0 0.0
      %486 = vmatpush1.msra.mxu0 0.0
      %487 = vmatprep.subr.mxu0 0.0
      %488 = vmatpush1.msra.mxu0 0.0
      %489 = vmatprep.subr.mxu0 0.0
      %490 = vmatpush1.msra.mxu0 0.0
      %491 = vmatprep.subr.mxu0 0.0
      %492 = vmatpush1.msra.mxu0 0.0
      %493 = vmatprep.subr.mxu0 0.0
      %494 = vmatpush1.msra.mxu0 0.0
      %495 = vmatprep.subr.mxu0 0.0
      %496 = vmatpush1.msra.mxu0 0.0
      %497 = vmatprep.subr.mxu0 0.0
      %498 = vmatpush1.msra.mxu0 0.0
      %499 = vmatprep.subr.mxu0 0.0
      %500 = vmatpush1.msra.mxu0 0.0
      %501 = vmatprep.subr.mxu0 0.0
      %502 = vmatpush1.msra.mxu0 0.0
      %503 = vmatprep.mubr.f32.mxu0 0.0
      %504 = vmatmul.mubr.f32.gmra.mrb[0].mxu0 %v437
      %v505 = vpop.f32.mrb[0].mxu0
      %v506 = vadd.f32 %v306, %v505
      %v507 = vpop.f32.mrb[0].mxu0
      %v508 = vadd.f32 %v306, %v507
      %509 = vdwg.mxu0
      %510 = vmatprep.subr.mxu0 0.0
      %511 = vmatpush1.msra.mxu0 %v383
      %512 = vmatprep.subr.mxu0 0.0
      %513 = vmatpush1.msra.mxu0 %v386
      %514 = vmatprep.subr.mxu0 0.0
      %515 = vmatpush1.msra.mxu0 %v389
      %516 = vmatprep.subr.mxu0 0.0
      %517 = vmatpush1.msra.mxu0 %v392
      %518 = vmatprep.subr.mxu0 0.0
      %519 = vmatpush1.msra.mxu0 %v395
      %520 = vmatprep.subr.mxu0 0.0
      %521 = vmatpush1.msra.mxu0 %v398
      %522 = vmatprep.subr.mxu0 0.0
      %523 = vmatpush1.msra.mxu0 %v401
      %524 = vmatprep.subr.mxu0 0.0
      %525 = vmatpush1.msra.mxu0 %v404
      %526 = vmatprep.subr.mxu0 0.0
      %527 = vmatpush1.msra.mxu0 %v407
      %528 = vmatprep.subr.mxu0 0.0
      %529 = vmatpush1.msra.mxu0 0.0
      %530 = vmatprep.subr.mxu0 0.0
      %531 = vmatpush1.msra.mxu0 0.0
      %532 = vmatprep.subr.mxu0 0.0
      %533 = vmatpush1.msra.mxu0 0.0
      %534 = vmatprep.subr.mxu0 0.0
      %535 = vmatpush1.msra.mxu0 0.0
      %536 = vmatprep.subr.mxu0 0.0
      %537 = vmatpush1.msra.mxu0 0.0
      %538 = vmatprep.subr.mxu0 0.0
      %539 = vmatpush1.msra.mxu0 0.0
      %540 = vmatprep.subr.mxu0 0.0
      %541 = vmatpush1.msra.mxu0 0.0
      %542 = vmatprep.subr.mxu0 0.0
      %543 = vmatpush1.msra.mxu0 0.0
      %544 = vmatprep.subr.mxu0 0.0
      %545 = vmatpush1.msra.mxu0 0.0
      %546 = vmatprep.subr.mxu0 0.0
      %547 = vmatpush1.msra.mxu0 0.0
      %548 = vmatprep.subr.mxu0 0.0
      %549 = vmatpush1.msra.mxu0 0.0
      %550 = vmatprep.subr.mxu0 0.0
      %551 = vmatpush1.msra.mxu0 0.0
      %552 = vmatprep.subr.mxu0 0.0
      %553 = vmatpush1.msra.mxu0 0.0
      %554 = vmatprep.subr.mxu0 0.0
      %555 = vmatpush1.msra.mxu0 0.0
      %556 = vmatprep.subr.mxu0 0.0
      %557 = vmatpush1.msra.mxu0 0.0
      %558 = vmatprep.subr.mxu0 0.0
      %559 = vmatpush1.msra.mxu0 0.0
      %560 = vmatprep.subr.mxu0 0.0
      %561 = vmatpush1.msra.mxu0 0.0
      %562 = vmatprep.subr.mxu0 0.0
      %563 = vmatpush1.msra.mxu0 0.0
      %564 = vmatprep.subr.mxu0 0.0
      %565 = vmatpush1.msra.mxu0 0.0
      %566 = vmatprep.subr.mxu0 0.0
      %567 = vmatpush1.msra.mxu0 0.0
      %568 = vmatprep.subr.mxu0 0.0
      %569 = vmatpush1.msra.mxu0 0.0
      %570 = vmatprep.subr.mxu0 0.0
      %571 = vmatpush1.msra.mxu0 0.0
      %572 = vmatprep.subr.mxu0 0.0
      %573 = vmatpush1.msra.mxu0 0.0
      %574 = vmatprep.mubr.f32.mxu0 0.0
      %575 = vmatmul.mubr.f32.gmra.mrb[0].mxu0 %v437
      %v576 = vpop.f32.mrb[0].mxu0
      %v577 = vadd.f32 %v306, %v576
      %v578 = vpop.f32.mrb[0].mxu0
      %579 = vdwg.mxu0
      %v580 = vmax.f32 %v506, 0.0
      %v581 = vmax.f32 %v508, 0.0
      %v582 = vmax.f32 %v577, 0.0
      %v583 = vsel %vm211, 1, 0
      %v584 = vlaneseq
      %v585 = vshrl.u32 %v584, 7
      %v586 = vsub.s32 0, %v585
      %v587 = vrot.slane %v583, %v586
      %v588 = vlaneseq
      %v589 = vshrl.u32 %v588, 7
      %v590 = vsub.s32 1, %v589
      %v591 = vrot.slane %v583, %v590
      %v592 = vlaneseq
      %v593 = vshrl.u32 %v592, 7
      %v594 = vsub.s32 2, %v593
      %v595 = vrot.slane %v583, %v594
      %vm596 = vcmp.eq.s32.totalorder %v587, 1
      %vm597 = vcmp.eq.s32.totalorder %v591, 1
      %vm598 = vcmp.eq.s32.totalorder %v595, 1
      %v599 = vsel %vm596, %v580, 0.0
      %v600 = vsel %vm597, %v581, 0.0
      %v601 = vsel %vm598, %v582, 0.0
      %602 = vst [vmem:[#allocation3 + $0x8] sm:$0xff] %v599
      %603 = vst [vmem:[#allocation3 + $0x10] sm:$0xff] %v600
      %vm604 = vcmask 556032
      %605 = vst.msk [vmem:[#allocation3 + $0x18] sm:$0xff] %vm604, %v601
      %v606 = vld [vmem:[#allocation3] sm:$0xff]
      %v607 = vld [vmem:[#allocation3 + $0x8] sm:$0xff]
      %v608 = vld [vmem:[#allocation3 + $0x10] sm:$0xff]
      %v609 = vld [vmem:[#allocation3 + $0x18] sm:$0xff]
      %614 = vrot.lane.b32.xlu0 %v606, 127
      %v615 = vpop.permute.xlu0 %614
      %616 = vrot.lane.b32.xlu0 %v607, 127
      %v617 = vpop.permute.xlu0 %616
      %618 = vrot.lane.b32.xlu0 %v608, 127
      %v619 = vpop.permute.xlu0 %618
      %620 = vrot.lane.b32.xlu0 %v609, 127
      %v621 = vpop.permute.xlu0 %620
      %v622 = vsel %vm228, %v615, %v617
      %v623 = vsel %vm228, %v617, %v619
      %v624 = vsel %vm228, %v619, %v621
      %625 = vrot.lane.b32.xlu0 %v606, 126
      %v626 = vpop.permute.xlu0 %625
      %627 = vrot.lane.b32.xlu0 %v607, 126
      %v628 = vpop.permute.xlu0 %627
      %629 = vrot.lane.b32.xlu0 %v608, 126
      %v630 = vpop.permute.xlu0 %629
      %631 = vrot.lane.b32.xlu0 %v609, 126
      %v632 = vpop.permute.xlu0 %631
      %v633 = vsel %vm240, %v626, %v628
      %v634 = vsel %vm240, %v628, %v630
      %v635 = vsel %vm240, %v630, %v632
      %636 = vrot.lane.b32.xlu0 %v606, 110
      %v637 = vpop.permute.xlu0 %636
      %638 = vrot.lane.b32.xlu0 %v607, 110
      %v639 = vpop.permute.xlu0 %638
      %640 = vrot.lane.b32.xlu0 %v608, 110
      %v641 = vpop.permute.xlu0 %640
      %642 = vrot.lane.b32.xlu0 %v609, 110
      %v643 = vpop.permute.xlu0 %642
      %v644 = vsel %vm252, %v637, %v639
      %v645 = vsel %vm252, %v639, %v641
      %v646 = vsel %vm252, %v641, %v643
      %647 = vrot.lane.b32.xlu0 %v607, 109
      %v648 = vpop.permute.xlu0 %647
      %649 = vrot.lane.b32.xlu0 %v608, 109
      %v650 = vpop.permute.xlu0 %649
      %651 = vrot.lane.b32.xlu0 %v609, 109
      %v652 = vpop.permute.xlu0 %651
      %v653 = vsel %vm262, %v648, %v650
      %v654 = vsel %vm262, %v650, %v652
      %655 = vrot.lane.b32.xlu0 %v607, 108
      %v656 = vpop.permute.xlu0 %655
      %657 = vrot.lane.b32.xlu0 %v608, 108
      %v658 = vpop.permute.xlu0 %657
      %659 = vrot.lane.b32.xlu0 %v609, 108
      %v660 = vpop.permute.xlu0 %659
      %v661 = vsel %vm271, %v656, %v658
      %v662 = vsel %vm271, %v658, %v660
      %663 = vrot.lane.b32.xlu0 %v607, 92
      %v664 = vpop.permute.xlu0 %663
      %665 = vrot.lane.b32.xlu0 %v608, 92
      %v666 = vpop.permute.xlu0 %665
      %667 = vrot.lane.b32.xlu0 %v609, 92
      %v668 = vpop.permute.xlu0 %667
      %v669 = vsel %vm280, %v664, %v666
      %v670 = vsel %vm280, %v666, %v668
      %671 = vrot.lane.b32.xlu0 %v607, 91
      %v672 = vpop.permute.xlu0 %671
      %673 = vrot.lane.b32.xlu0 %v608, 91
      %v674 = vpop.permute.xlu0 %673
      %675 = vrot.lane.b32.xlu0 %v609, 91
      %v676 = vpop.permute.xlu0 %675
      %v677 = vsel %vm289, %v672, %v674
      %v678 = vsel %vm289, %v674, %v676
      %679 = vrot.lane.b32.xlu0 %v607, 90
      %v680 = vpop.permute.xlu0 %679
      %681 = vrot.lane.b32.xlu0 %v608, 90
      %v682 = vpop.permute.xlu0 %681
      %683 = vrot.lane.b32.xlu0 %v609, 90
      %v684 = vpop.permute.xlu0 %683
      %v685 = vsel %vm298, %v680, %v682
      %v686 = vsel %vm298, %v682, %v684
      %s687 = scalar_lea.vmem %s1, 16
      %v688 = vld [vmem:[%s687] sm:$0xff]
      %s689 = scalar_lea.vmem %s2, 16
      %v690 = vld [vmem:[%s689] sm:$0xff]
      %692 = vset.pattern.permute.xlu0 0
      %693 = vperm.xlu0 %692, %v690
      %v694 = vpop.permute.xlu0 %693
      %696 = vrot.lane.b32.xlu0 %v606, 19
      %v697 = vpop.permute.xlu0 %696
      %698 = vrot.lane.b32.xlu0 %v607, 19
      %v699 = vpop.permute.xlu0 %698
      %700 = vrot.lane.b32.xlu0 %v608, 19
      %v701 = vpop.permute.xlu0 %700
      %702 = vrot.lane.b32.xlu0 %v609, 19
      %v703 = vpop.permute.xlu0 %702
      %704 = vrot.lane.b32.xlu0 %v622, 19
      %v705 = vpop.permute.xlu0 %704
      %706 = vrot.lane.b32.xlu0 %v623, 19
      %v707 = vpop.permute.xlu0 %706
      %708 = vrot.lane.b32.xlu0 %v624, 19
      %v709 = vpop.permute.xlu0 %708
      %710 = vrot.lane.b32.xlu0 %v621, 19
      %v711 = vpop.permute.xlu0 %710
      %712 = vrot.lane.b32.xlu0 %v633, 19
      %v713 = vpop.permute.xlu0 %712
      %714 = vrot.lane.b32.xlu0 %v634, 19
      %v715 = vpop.permute.xlu0 %714
      %716 = vrot.lane.b32.xlu0 %v635, 19
      %v717 = vpop.permute.xlu0 %716
      %718 = vrot.lane.b32.xlu0 %v632, 19
      %v719 = vpop.permute.xlu0 %718
      %720 = vrot.lane.b32.xlu0 %v644, 19
      %v721 = vpop.permute.xlu0 %720
      %722 = vrot.lane.b32.xlu0 %v645, 19
      %v723 = vpop.permute.xlu0 %722
      %724 = vrot.lane.b32.xlu0 %v646, 19
      %v725 = vpop.permute.xlu0 %724
      %726 = vrot.lane.b32.xlu0 %v643, 19
      %v727 = vpop.permute.xlu0 %726
      %728 = vrot.lane.b32.xlu0 %v648, 19
      %v729 = vpop.permute.xlu0 %728
      %730 = vrot.lane.b32.xlu0 %v653, 19
      %v731 = vpop.permute.xlu0 %730
      %732 = vrot.lane.b32.xlu0 %v654, 19
      %v733 = vpop.permute.xlu0 %732
      %734 = vrot.lane.b32.xlu0 %v652, 19
      %v735 = vpop.permute.xlu0 %734
      %736 = vrot.lane.b32.xlu0 %v656, 19
      %v737 = vpop.permute.xlu0 %736
      %738 = vrot.lane.b32.xlu0 %v661, 19
      %v739 = vpop.permute.xlu0 %738
      %740 = vrot.lane.b32.xlu0 %v662, 19
      %v741 = vpop.permute.xlu0 %740
      %742 = vrot.lane.b32.xlu0 %v660, 19
      %v743 = vpop.permute.xlu0 %742
      %744 = vrot.lane.b32.xlu0 %v664, 19
      %v745 = vpop.permute.xlu0 %744
      %746 = vrot.lane.b32.xlu0 %v669, 19
      %v747 = vpop.permute.xlu0 %746
      %748 = vrot.lane.b32.xlu0 %v670, 19
      %v749 = vpop.permute.xlu0 %748
      %750 = vrot.lane.b32.xlu0 %v668, 19
      %v751 = vpop.permute.xlu0 %750
      %752 = vrot.lane.b32.xlu0 %v672, 19
      %v753 = vpop.permute.xlu0 %752
      %754 = vrot.lane.b32.xlu0 %v677, 19
      %v755 = vpop.permute.xlu0 %754
      %756 = vrot.lane.b32.xlu0 %v678, 19
      %v757 = vpop.permute.xlu0 %756
      %758 = vrot.lane.b32.xlu0 %v676, 19
      %v759 = vpop.permute.xlu0 %758
      %760 = vrot.lane.b32.xlu0 %v680, 19
      %v761 = vpop.permute.xlu0 %760
      %762 = vrot.lane.b32.xlu0 %v685, 19
      %v763 = vpop.permute.xlu0 %762
      %764 = vrot.lane.b32.xlu0 %v686, 19
      %v765 = vpop.permute.xlu0 %764
      %766 = vrot.lane.b32.xlu0 %v684, 19
      %v767 = vpop.permute.xlu0 %766
      %v768 = vsel %vm380, %v697, %v699
      %v769 = vsel %vm380, %v699, %v701
      %v770 = vsel %vm380, %v701, %v703
      %v771 = vsel %vm380, %v705, %v707
      %v772 = vsel %vm380, %v707, %v709
      %v773 = vsel %vm380, %v709, %v711
      %v774 = vsel %vm380, %v713, %v715
      %v775 = vsel %vm380, %v715, %v717
      %v776 = vsel %vm380, %v717, %v719
      %v777 = vsel %vm380, %v721, %v723
      %v778 = vsel %vm380, %v723, %v725
      %v779 = vsel %vm380, %v725, %v727
      %v780 = vsel %vm380, %v729, %v731
      %v781 = vsel %vm380, %v731, %v733
      %v782 = vsel %vm380, %v733, %v735
      %v783 = vsel %vm380, %v737, %v739
      %v784 = vsel %vm380, %v739, %v741
      %v785 = vsel %vm380, %v741, %v743
      %v786 = vsel %vm380, %v745, %v747
      %v787 = vsel %vm380, %v747, %v749
      %v788 = vsel %vm380, %v749, %v751
      %v789 = vsel %vm380, %v753, %v755
      %v790 = vsel %vm380, %v755, %v757
      %v791 = vsel %vm380, %v757, %v759
      %v792 = vsel %vm380, %v761, %v763
      %v793 = vsel %vm380, %v763, %v765
      %v794 = vsel %vm380, %v765, %v767
      %v823 = vsel %vm435, %v688, 0
      %825 = vmatprep.subr.mxu0 %v769
      %826 = vmatpush1.msra.mxu0 %v768
      %827 = vmatprep.subr.mxu0 %v772
      %828 = vmatpush1.msra.mxu0 %v771
      %829 = vmatprep.subr.mxu0 %v775
      %830 = vmatpush1.msra.mxu0 %v774
      %831 = vmatprep.subr.mxu0 %v778
      %832 = vmatpush1.msra.mxu0 %v777
      %833 = vmatprep.subr.mxu0 %v781
      %834 = vmatpush1.msra.mxu0 %v780
      %835 = vmatprep.subr.mxu0 %v784
      %836 = vmatpush1.msra.mxu0 %v783
      %837 = vmatprep.subr.mxu0 %v787
      %838 = vmatpush1.msra.mxu0 %v786
      %839 = vmatprep.subr.mxu0 %v790
      %840 = vmatpush1.msra.mxu0 %v789
      %841 = vmatprep.subr.mxu0 %v793
      %842 = vmatpush1.msra.mxu0 %v792
      %843 = vmatprep.subr.mxu0 0.0
      %844 = vmatpush1.msra.mxu0 0.0
      %845 = vmatprep.subr.mxu0 0.0
      %846 = vmatpush1.msra.mxu0 0.0
      %847 = vmatprep.subr.mxu0 0.0
      %848 = vmatpush1.msra.mxu0 0.0
      %849 = vmatprep.subr.mxu0 0.0
      %850 = vmatpush1.msra.mxu0 0.0
      %851 = vmatprep.subr.mxu0 0.0
      %852 = vmatpush1.msra.mxu0 0.0
      %853 = vmatprep.subr.mxu0 0.0
      %854 = vmatpush1.msra.mxu0 0.0
      %855 = vmatprep.subr.mxu0 0.0
      %856 = vmatpush1.msra.mxu0 0.0
      %857 = vmatprep.subr.mxu0 0.0
      %858 = vmatpush1.msra.mxu0 0.0
      %859 = vmatprep.subr.mxu0 0.0
      %860 = vmatpush1.msra.mxu0 0.0
      %861 = vmatprep.subr.mxu0 0.0
      %862 = vmatpush1.msra.mxu0 0.0
      %863 = vmatprep.subr.mxu0 0.0
      %864 = vmatpush1.msra.mxu0 0.0
      %865 = vmatprep.subr.mxu0 0.0
      %866 = vmatpush1.msra.mxu0 0.0
      %867 = vmatprep.subr.mxu0 0.0
      %868 = vmatpush1.msra.mxu0 0.0
      %869 = vmatprep.subr.mxu0 0.0
      %870 = vmatpush1.msra.mxu0 0.0
      %871 = vmatprep.subr.mxu0 0.0
      %872 = vmatpush1.msra.mxu0 0.0
      %873 = vmatprep.subr.mxu0 0.0
      %874 = vmatpush1.msra.mxu0 0.0
      %875 = vmatprep.subr.mxu0 0.0
      %876 = vmatpush1.msra.mxu0 0.0
      %877 = vmatprep.subr.mxu0 0.0
      %878 = vmatpush1.msra.mxu0 0.0
      %879 = vmatprep.subr.mxu0 0.0
      %880 = vmatpush1.msra.mxu0 0.0
      %881 = vmatprep.subr.mxu0 0.0
      %882 = vmatpush1.msra.mxu0 0.0
      %883 = vmatprep.subr.mxu0 0.0
      %884 = vmatpush1.msra.mxu0 0.0
      %885 = vmatprep.subr.mxu0 0.0
      %886 = vmatpush1.msra.mxu0 0.0
      %887 = vmatprep.subr.mxu0 0.0
      %888 = vmatpush1.msra.mxu0 0.0
      %889 = vmatprep.mubr.f32.mxu0 0.0
      %890 = vmatmul.mubr.f32.gmra.mrb[0].mxu0 %v823
      %v891 = vpop.f32.mrb[0].mxu0
      %v892 = vadd.f32 %v694, %v891
      %v893 = vpop.f32.mrb[0].mxu0
      %v894 = vadd.f32 %v694, %v893
      %895 = vdwg.mxu0
      %896 = vmatprep.subr.mxu0 0.0
      %897 = vmatpush1.msra.mxu0 %v770
      %898 = vmatprep.subr.mxu0 0.0
      %899 = vmatpush1.msra.mxu0 %v773
      %900 = vmatprep.subr.mxu0 0.0
      %901 = vmatpush1.msra.mxu0 %v776
      %902 = vmatprep.subr.mxu0 0.0
      %903 = vmatpush1.msra.mxu0 %v779
      %904 = vmatprep.subr.mxu0 0.0
      %905 = vmatpush1.msra.mxu0 %v782
      %906 = vmatprep.subr.mxu0 0.0
      %907 = vmatpush1.msra.mxu0 %v785
      %908 = vmatprep.subr.mxu0 0.0
      %909 = vmatpush1.msra.mxu0 %v788
      %910 = vmatprep.subr.mxu0 0.0
      %911 = vmatpush1.msra.mxu0 %v791
      %912 = vmatprep.subr.mxu0 0.0
      %913 = vmatpush1.msra.mxu0 %v794
      %914 = vmatprep.subr.mxu0 0.0
      %915 = vmatpush1.msra.mxu0 0.0
      %916 = vmatprep.subr.mxu0 0.0
      %917 = vmatpush1.msra.mxu0 0.0
      %918 = vmatprep.subr.mxu0 0.0
      %919 = vmatpush1.msra.mxu0 0.0
      %920 = vmatprep.subr.mxu0 0.0
      %921 = vmatpush1.msra.mxu0 0.0
      %922 = vmatprep.subr.mxu0 0.0
      %923 = vmatpush1.msra.mxu0 0.0
      %924 = vmatprep.subr.mxu0 0.0
      %925 = vmatpush1.msra.mxu0 0.0
      %926 = vmatprep.subr.mxu0 0.0
      %927 = vmatpush1.msra.mxu0 0.0
      %928 = vmatprep.subr.mxu0 0.0
      %929 = vmatpush1.msra.mxu0 0.0
      %930 = vmatprep.subr.mxu0 0.0
      %931 = vmatpush1.msra.mxu0 0.0
      %932 = vmatprep.subr.mxu0 0.0
      %933 = vmatpush1.msra.mxu0 0.0
      %934 = vmatprep.subr.mxu0 0.0
      %935 = vmatpush1.msra.mxu0 0.0
      %936 = vmatprep.subr.mxu0 0.0
      %937 = vmatpush1.msra.mxu0 0.0
      %938 = vmatprep.subr.mxu0 0.0
      %939 = vmatpush1.msra.mxu0 0.0
      %940 = vmatprep.subr.mxu0 0.0
      %941 = vmatpush1.msra.mxu0 0.0
      %942 = vmatprep.subr.mxu0 0.0
      %943 = vmatpush1.msra.mxu0 0.0
      %944 = vmatprep.subr.mxu0 0.0
      %945 = vmatpush1.msra.mxu0 0.0
      %946 = vmatprep.subr.mxu0 0.0
      %947 = vmatpush1.msra.mxu0 0.0
      %948 = vmatprep.subr.mxu0 0.0
      %949 = vmatpush1.msra.mxu0 0.0
      %950 = vmatprep.subr.mxu0 0.0
      %951 = vmatpush1.msra.mxu0 0.0
      %952 = vmatprep.subr.mxu0 0.0
      %953 = vmatpush1.msra.mxu0 0.0
      %954 = vmatprep.subr.mxu0 0.0
      %955 = vmatpush1.msra.mxu0 0.0
      %956 = vmatprep.subr.mxu0 0.0
      %957 = vmatpush1.msra.mxu0 0.0
      %958 = vmatprep.subr.mxu0 0.0
      %959 = vmatpush1.msra.mxu0 0.0
      %960 = vmatprep.mubr.f32.mxu0 0.0
      %961 = vmatmul.mubr.f32.gmra.mrb[0].mxu0 %v823
      %v962 = vpop.f32.mrb[0].mxu0
      %v963 = vadd.f32 %v694, %v962
      %v964 = vpop.f32.mrb[0].mxu0
      %965 = vdwg.mxu0
      %v966 = vmax.f32 %v892, 0.0
      %v967 = vmax.f32 %v894, 0.0
      %v968 = vmax.f32 %v963, 0.0
      %v969 = vsel %vm596, %v966, 0.0
      %v970 = vsel %vm597, %v967, 0.0
      %v971 = vsel %vm598, %v968, 0.0
      %972 = vst [vmem:[#allocation2 + $0x8] sm:$0xff] %v969
      %973 = vst [vmem:[#allocation2 + $0x10] sm:$0xff] %v970
      %974 = vst.msk [vmem:[#allocation2 + $0x18] sm:$0xff] %vm604, %v971
      %v975 = vld [vmem:[#allocation2] sm:$0xff]
      %v976 = vld [vmem:[#allocation2 + $0x8] sm:$0xff]
      %v977 = vld [vmem:[#allocation2 + $0x10] sm:$0xff]
      %v978 = vld [vmem:[#allocation2 + $0x18] sm:$0xff]
      %983 = vrot.lane.b32.xlu0 %v975, 127
      %v984 = vpop.permute.xlu0 %983
      %985 = vrot.lane.b32.xlu0 %v976, 127
      %v986 = vpop.permute.xlu0 %985
      %987 = vrot.lane.b32.xlu0 %v977, 127
      %v988 = vpop.permute.xlu0 %987
      %989 = vrot.lane.b32.xlu0 %v978, 127
      %v990 = vpop.permute.xlu0 %989
      %v991 = vsel %vm228, %v984, %v986
      %v992 = vsel %vm228, %v986, %v988
      %v993 = vsel %vm228, %v988, %v990
      %994 = vrot.lane.b32.xlu0 %v975, 126
      %v995 = vpop.permute.xlu0 %994
      %996 = vrot.lane.b32.xlu0 %v976, 126
      %v997 = vpop.permute.xlu0 %996
      %998 = vrot.lane.b32.xlu0 %v977, 126
      %v999 = vpop.permute.xlu0 %998
      %1000 = vrot.lane.b32.xlu0 %v978, 126
      %v1001 = vpop.permute.xlu0 %1000
      %v1002 = vsel %vm240, %v995, %v997
      %v1003 = vsel %vm240, %v997, %v999
      %v1004 = vsel %vm240, %v999, %v1001
      %1005 = vrot.lane.b32.xlu0 %v975, 110
      %v1006 = vpop.permute.xlu0 %1005
      %1007 = vrot.lane.b32.xlu0 %v976, 110
      %v1008 = vpop.permute.xlu0 %1007
      %1009 = vrot.lane.b32.xlu0 %v977, 110
      %v1010 = vpop.permute.xlu0 %1009
      %1011 = vrot.lane.b32.xlu0 %v978, 110
      %v1012 = vpop.permute.xlu0 %1011
      %v1013 = vsel %vm252, %v1006, %v1008
      %v1014 = vsel %vm252, %v1008, %v1010
      %v1015 = vsel %vm252, %v1010, %v1012
      %1016 = vrot.lane.b32.xlu0 %v976, 109
      %v1017 = vpop.permute.xlu0 %1016
      %1018 = vrot.lane.b32.xlu0 %v977, 109
      %v1019 = vpop.permute.xlu0 %1018
      %1020 = vrot.lane.b32.xlu0 %v978, 109
      %v1021 = vpop.permute.xlu0 %1020
      %v1022 = vsel %vm262, %v1017, %v1019
      %v1023 = vsel %vm262, %v1019, %v1021
      %1024 = vrot.lane.b32.xlu0 %v976, 108
      %v1025 = vpop.permute.xlu0 %1024
      %1026 = vrot.lane.b32.xlu0 %v977, 108
      %v1027 = vpop.permute.xlu0 %1026
      %1028 = vrot.lane.b32.xlu0 %v978, 108
      %v1029 = vpop.permute.xlu0 %1028
      %v1030 = vsel %vm271, %v1025, %v1027
      %v1031 = vsel %vm271, %v1027, %v1029
      %1032 = vrot.lane.b32.xlu0 %v976, 92
      %v1033 = vpop.permute.xlu0 %1032
      %1034 = vrot.lane.b32.xlu0 %v977, 92
      %v1035 = vpop.permute.xlu0 %1034
      %1036 = vrot.lane.b32.xlu0 %v978, 92
      %v1037 = vpop.permute.xlu0 %1036
      %v1038 = vsel %vm280, %v1033, %v1035
      %v1039 = vsel %vm280, %v1035, %v1037
      %1040 = vrot.lane.b32.xlu0 %v976, 91
      %v1041 = vpop.permute.xlu0 %1040
      %1042 = vrot.lane.b32.xlu0 %v977, 91
      %v1043 = vpop.permute.xlu0 %1042
      %1044 = vrot.lane.b32.xlu0 %v978, 91
      %v1045 = vpop.permute.xlu0 %1044
      %v1046 = vsel %vm289, %v1041, %v1043
      %v1047 = vsel %vm289, %v1043, %v1045
      %1048 = vrot.lane.b32.xlu0 %v976, 90
      %v1049 = vpop.permute.xlu0 %1048
      %1050 = vrot.lane.b32.xlu0 %v977, 90
      %v1051 = vpop.permute.xlu0 %1050
      %1052 = vrot.lane.b32.xlu0 %v978, 90
      %v1053 = vpop.permute.xlu0 %1052
      %v1054 = vsel %vm298, %v1049, %v1051
      %v1055 = vsel %vm298, %v1051, %v1053
      %s1056 = scalar_lea.vmem %s1, 24
      %v1057 = vld [vmem:[%s1056] sm:$0xff]
      %s1058 = scalar_lea.vmem %s2, 24
      %v1059 = vld [vmem:[%s1058] sm:$0xff]
      %1061 = vset.pattern.permute.xlu0 0
      %1062 = vperm.xlu0 %1061, %v1059
      %v1063 = vpop.permute.xlu0 %1062
      %1065 = vrot.lane.b32.xlu0 %v975, 19
      %v1066 = vpop.permute.xlu0 %1065
      %1067 = vrot.lane.b32.xlu0 %v976, 19
      %v1068 = vpop.permute.xlu0 %1067
      %1069 = vrot.lane.b32.xlu0 %v977, 19
      %v1070 = vpop.permute.xlu0 %1069
      %1071 = vrot.lane.b32.xlu0 %v978, 19
      %v1072 = vpop.permute.xlu0 %1071
      %1073 = vrot.lane.b32.xlu0 %v991, 19
      %v1074 = vpop.permute.xlu0 %1073
      %1075 = vrot.lane.b32.xlu0 %v992, 19
      %v1076 = vpop.permute.xlu0 %1075
      %1077 = vrot.lane.b32.xlu0 %v993, 19
      %v1078 = vpop.permute.xlu0 %1077
      %1079 = vrot.lane.b32.xlu0 %v990, 19
      %v1080 = vpop.permute.xlu0 %1079
      %1081 = vrot.lane.b32.xlu0 %v1002, 19
      %v1082 = vpop.permute.xlu0 %1081
      %1083 = vrot.lane.b32.xlu0 %v1003, 19
      %v1084 = vpop.permute.xlu0 %1083
      %1085 = vrot.lane.b32.xlu0 %v1004, 19
      %v1086 = vpop.permute.xlu0 %1085
      %1087 = vrot.lane.b32.xlu0 %v1001, 19
      %v1088 = vpop.permute.xlu0 %1087
      %1089 = vrot.lane.b32.xlu0 %v1013, 19
      %v1090 = vpop.permute.xlu0 %1089
      %1091 = vrot.lane.b32.xlu0 %v1014, 19
      %v1092 = vpop.permute.xlu0 %1091
      %1093 = vrot.lane.b32.xlu0 %v1015, 19
      %v1094 = vpop.permute.xlu0 %1093
      %1095 = vrot.lane.b32.xlu0 %v1012, 19
      %v1096 = vpop.permute.xlu0 %1095
      %1097 = vrot.lane.b32.xlu0 %v1017, 19
      %v1098 = vpop.permute.xlu0 %1097
      %1099 = vrot.lane.b32.xlu0 %v1022, 19
      %v1100 = vpop.permute.xlu0 %1099
      %1101 = vrot.lane.b32.xlu0 %v1023, 19
      %v1102 = vpop.permute.xlu0 %1101
      %1103 = vrot.lane.b32.xlu0 %v1021, 19
      %v1104 = vpop.permute.xlu0 %1103
      %1105 = vrot.lane.b32.xlu0 %v1025, 19
      %v1106 = vpop.permute.xlu0 %1105
      %1107 = vrot.lane.b32.xlu0 %v1030, 19
      %v1108 = vpop.permute.xlu0 %1107
      %1109 = vrot.lane.b32.xlu0 %v1031, 19
      %v1110 = vpop.permute.xlu0 %1109
      %1111 = vrot.lane.b32.xlu0 %v1029, 19
      %v1112 = vpop.permute.xlu0 %1111
      %1113 = vrot.lane.b32.xlu0 %v1033, 19
      %v1114 = vpop.permute.xlu0 %1113
      %1115 = vrot.lane.b32.xlu0 %v1038, 19
      %v1116 = vpop.permute.xlu0 %1115
      %1117 = vrot.lane.b32.xlu0 %v1039, 19
      %v1118 = vpop.permute.xlu0 %1117
      %1119 = vrot.lane.b32.xlu0 %v1037, 19
      %v1120 = vpop.permute.xlu0 %1119
      %1121 = vrot.lane.b32.xlu0 %v1041, 19
      %v1122 = vpop.permute.xlu0 %1121
      %1123 = vrot.lane.b32.xlu0 %v1046, 19
      %v1124 = vpop.permute.xlu0 %1123
      %1125 = vrot.lane.b32.xlu0 %v1047, 19
      %v1126 = vpop.permute.xlu0 %1125
      %1127 = vrot.lane.b32.xlu0 %v1045, 19
      %v1128 = vpop.permute.xlu0 %1127
      %1129 = vrot.lane.b32.xlu0 %v1049, 19
      %v1130 = vpop.permute.xlu0 %1129
      %1131 = vrot.lane.b32.xlu0 %v1054, 19
      %v1132 = vpop.permute.xlu0 %1131
      %1133 = vrot.lane.b32.xlu0 %v1055, 19
      %v1134 = vpop.permute.xlu0 %1133
      %1135 = vrot.lane.b32.xlu0 %v1053, 19
      %v1136 = vpop.permute.xlu0 %1135
      %v1137 = vsel %vm380, %v1066, %v1068
      %v1138 = vsel %vm380, %v1068, %v1070
      %v1139 = vsel %vm380, %v1070, %v1072
      %v1140 = vsel %vm380, %v1074, %v1076
      %v1141 = vsel %vm380, %v1076, %v1078
      %v1142 = vsel %vm380, %v1078, %v1080
      %v1143 = vsel %vm380, %v1082, %v1084
      %v1144 = vsel %vm380, %v1084, %v1086
      %v1145 = vsel %vm380, %v1086, %v1088
      %v1146 = vsel %vm380, %v1090, %v1092
      %v1147 = vsel %vm380, %v1092, %v1094
      %v1148 = vsel %vm380, %v1094, %v1096
      %v1149 = vsel %vm380, %v1098, %v1100
      %v1150 = vsel %vm380, %v1100, %v1102
      %v1151 = vsel %vm380, %v1102, %v1104
      %v1152 = vsel %vm380, %v1106, %v1108
      %v1153 = vsel %vm380, %v1108, %v1110
      %v1154 = vsel %vm380, %v1110, %v1112
      %v1155 = vsel %vm380, %v1114, %v1116
      %v1156 = vsel %vm380, %v1116, %v1118
      %v1157 = vsel %vm380, %v1118, %v1120
      %v1158 = vsel %vm380, %v1122, %v1124
      %v1159 = vsel %vm380, %v1124, %v1126
      %v1160 = vsel %vm380, %v1126, %v1128
      %v1161 = vsel %vm380, %v1130, %v1132
      %v1162 = vsel %vm380, %v1132, %v1134
      %v1163 = vsel %vm380, %v1134, %v1136
      %v1192 = vsel %vm435, %v1057, 0
      %1194 = vmatprep.subr.mxu0 %v1138
      %1195 = vmatpush1.msra.mxu0 %v1137
      %1196 = vmatprep.subr.mxu0 %v1141
      %1197 = vmatpush1.msra.mxu0 %v1140
      %1198 = vmatprep.subr.mxu0 %v1144
      %1199 = vmatpush1.msra.mxu0 %v1143
      %1200 = vmatprep.subr.mxu0 %v1147
      %1201 = vmatpush1.msra.mxu0 %v1146
      %1202 = vmatprep.subr.mxu0 %v1150
      %1203 = vmatpush1.msra.mxu0 %v1149
      %1204 = vmatprep.subr.mxu0 %v1153
      %1205 = vmatpush1.msra.mxu0 %v1152
      %1206 = vmatprep.subr.mxu0 %v1156
      %1207 = vmatpush1.msra.mxu0 %v1155
      %1208 = vmatprep.subr.mxu0 %v1159
      %1209 = vmatpush1.msra.mxu0 %v1158
      %1210 = vmatprep.subr.mxu0 %v1162
      %1211 = vmatpush1.msra.mxu0 %v1161
      %1212 = vmatprep.subr.mxu0 0.0
      %1213 = vmatpush1.msra.mxu0 0.0
      %1214 = vmatprep.subr.mxu0 0.0
      %1215 = vmatpush1.msra.mxu0 0.0
      %1216 = vmatprep.subr.mxu0 0.0
      %1217 = vmatpush1.msra.mxu0 0.0
      %1218 = vmatprep.subr.mxu0 0.0
      %1219 = vmatpush1.msra.mxu0 0.0
      %1220 = vmatprep.subr.mxu0 0.0
      %1221 = vmatpush1.msra.mxu0 0.0
      %1222 = vmatprep.subr.mxu0 0.0
      %1223 = vmatpush1.msra.mxu0 0.0
      %1224 = vmatprep.subr.mxu0 0.0
      %1225 = vmatpush1.msra.mxu0 0.0
      %1226 = vmatprep.subr.mxu0 0.0
      %1227 = vmatpush1.msra.mxu0 0.0
      %1228 = vmatprep.subr.mxu0 0.0
      %1229 = vmatpush1.msra.mxu0 0.0
      %1230 = vmatprep.subr.mxu0 0.0
      %1231 = vmatpush1.msra.mxu0 0.0
      %1232 = vmatprep.subr.mxu0 0.0
      %1233 = vmatpush1.msra.mxu0 0.0
      %1234 = vmatprep.subr.mxu0 0.0
      %1235 = vmatpush1.msra.mxu0 0.0
      %1236 = vmatprep.subr.mxu0 0.0
      %1237 = vmatpush1.msra.mxu0 0.0
      %1238 = vmatprep.subr.mxu0 0.0
      %1239 = vmatpush1.msra.mxu0 0.0
      %1240 = vmatprep.subr.mxu0 0.0
      %1241 = vmatpush1.msra.mxu0 0.0
      %1242 = vmatprep.subr.mxu0 0.0
      %1243 = vmatpush1.msra.mxu0 0.0
      %1244 = vmatprep.subr.mxu0 0.0
      %1245 = vmatpush1.msra.mxu0 0.0
      %1246 = vmatprep.subr.mxu0 0.0
      %1247 = vmatpush1.msra.mxu0 0.0
      %1248 = vmatprep.subr.mxu0 0.0
      %1249 = vmatpush1.msra.mxu0 0.0
      %1250 = vmatprep.subr.mxu0 0.0
      %1251 = vmatpush1.msra.mxu0 0.0
      %1252 = vmatprep.subr.mxu0 0.0
      %1253 = vmatpush1.msra.mxu0 0.0
      %1254 = vmatprep.subr.mxu0 0.0
      %1255 = vmatpush1.msra.mxu0 0.0
      %1256 = vmatprep.subr.mxu0 0.0
      %1257 = vmatpush1.msra.mxu0 0.0
      %1258 = vmatprep.mubr.f32.mxu0 0.0
      %1259 = vmatmul.mubr.f32.gmra.mrb[0].mxu0 %v1192
      %v1260 = vpop.f32.mrb[0].mxu0
      %v1261 = vadd.f32 %v1063, %v1260
      %v1262 = vpop.f32.mrb[0].mxu0
      %v1263 = vadd.f32 %v1063, %v1262
      %1264 = vdwg.mxu0
      %1265 = vmatprep.subr.mxu0 0.0
      %1266 = vmatpush1.msra.mxu0 %v1139
      %1267 = vmatprep.subr.mxu0 0.0
      %1268 = vmatpush1.msra.mxu0 %v1142
      %1269 = vmatprep.subr.mxu0 0.0
      %1270 = vmatpush1.msra.mxu0 %v1145
      %1271 = vmatprep.subr.mxu0 0.0
      %1272 = vmatpush1.msra.mxu0 %v1148
      %1273 = vmatprep.subr.mxu0 0.0
      %1274 = vmatpush1.msra.mxu0 %v1151
      %1275 = vmatprep.subr.mxu0 0.0
      %1276 = vmatpush1.msra.mxu0 %v1154
      %1277 = vmatprep.subr.mxu0 0.0
      %1278 = vmatpush1.msra.mxu0 %v1157
      %1279 = vmatprep.subr.mxu0 0.0
      %1280 = vmatpush1.msra.mxu0 %v1160
      %1281 = vmatprep.subr.mxu0 0.0
      %1282 = vmatpush1.msra.mxu0 %v1163
      %1283 = vmatprep.subr.mxu0 0.0
      %1284 = vmatpush1.msra.mxu0 0.0
      %1285 = vmatprep.subr.mxu0 0.0
      %1286 = vmatpush1.msra.mxu0 0.0
      %1287 = vmatprep.subr.mxu0 0.0
      %1288 = vmatpush1.msra.mxu0 0.0
      %1289 = vmatprep.subr.mxu0 0.0
      %1290 = vmatpush1.msra.mxu0 0.0
      %1291 = vmatprep.subr.mxu0 0.0
      %1292 = vmatpush1.msra.mxu0 0.0
      %1293 = vmatprep.subr.mxu0 0.0
      %1294 = vmatpush1.msra.mxu0 0.0
      %1295 = vmatprep.subr.mxu0 0.0
      %1296 = vmatpush1.msra.mxu0 0.0
      %1297 = vmatprep.subr.mxu0 0.0
      %1298 = vmatpush1.msra.mxu0 0.0
      %1299 = vmatprep.subr.mxu0 0.0
      %1300 = vmatpush1.msra.mxu0 0.0
      %1301 = vmatprep.subr.mxu0 0.0
      %1302 = vmatpush1.msra.mxu0 0.0
      %1303 = vmatprep.subr.mxu0 0.0
      %1304 = vmatpush1.msra.mxu0 0.0
      %1305 = vmatprep.subr.mxu0 0.0
      %1306 = vmatpush1.msra.mxu0 0.0
      %1307 = vmatprep.subr.mxu0 0.0
      %1308 = vmatpush1.msra.mxu0 0.0
      %1309 = vmatprep.subr.mxu0 0.0
      %1310 = vmatpush1.msra.mxu0 0.0
      %1311 = vmatprep.subr.mxu0 0.0
      %1312 = vmatpush1.msra.mxu0 0.0
      %1313 = vmatprep.subr.mxu0 0.0
      %1314 = vmatpush1.msra.mxu0 0.0
      %1315 = vmatprep.subr.mxu0 0.0
      %1316 = vmatpush1.msra.mxu0 0.0
      %1317 = vmatprep.subr.mxu0 0.0
      %1318 = vmatpush1.msra.mxu0 0.0
      %1319 = vmatprep.subr.mxu0 0.0
      %1320 = vmatpush1.msra.mxu0 0.0
      %1321 = vmatprep.subr.mxu0 0.0
      %1322 = vmatpush1.msra.mxu0 0.0
      %1323 = vmatprep.subr.mxu0 0.0
      %1324 = vmatpush1.msra.mxu0 0.0
      %1325 = vmatprep.subr.mxu0 0.0
      %1326 = vmatpush1.msra.mxu0 0.0
      %1327 = vmatprep.subr.mxu0 0.0
      %1328 = vmatpush1.msra.mxu0 0.0
      %1329 = vmatprep.mubr.f32.mxu0 0.0
      %1330 = vmatmul.mubr.f32.gmra.mrb[0].mxu0 %v1192
      %v1331 = vpop.f32.mrb[0].mxu0
      %v1332 = vadd.f32 %v1063, %v1331
      %v1333 = vpop.f32.mrb[0].mxu0
      %1334 = vdwg.mxu0
      %v1335 = vld [vmem:[#allocation3 + $0x8] sm:$0xff]
      %v1336 = vld [vmem:[#allocation3 + $0x10] sm:$0xff]
      %v1337 = vld [vmem:[#allocation3 + $0x18] sm:$0xff]
      %v1338 = vadd.f32 %v1261, %v1335
      %v1339 = vadd.f32 %v1263, %v1336
      %v1340 = vadd.f32 %v1332, %v1337
      %v1341 = vsel %vm596, %v1338, 0.0
      %v1342 = vsel %vm597, %v1339, 0.0
      %v1343 = vsel %vm598, %v1340, 0.0
      %1344 = vst [vmem:[#allocation3 + $0x8] sm:$0xff] %v1341
      %1345 = vst [vmem:[#allocation3 + $0x10] sm:$0xff] %v1342
      %1346 = vst.msk [vmem:[#allocation3 + $0x18] sm:$0xff] %vm604, %v1343
      %v1347 = vld [vmem:[#allocation3] sm:$0xff]
      %v1348 = vld [vmem:[#allocation3 + $0x8] sm:$0xff]
      %v1349 = vld [vmem:[#allocation3 + $0x10] sm:$0xff]
      %v1350 = vld [vmem:[#allocation3 + $0x18] sm:$0xff]
      %1355 = vrot.lane.b32.xlu0 %v1347, 127
      %v1356 = vpop.permute.xlu0 %1355
      %1357 = vrot.lane.b32.xlu0 %v1348, 127
      %v1358 = vpop.permute.xlu0 %1357
      %1359 = vrot.lane.b32.xlu0 %v1349, 127
      %v1360 = vpop.permute.xlu0 %1359
      %1361 = vrot.lane.b32.xlu0 %v1350, 127
      %v1362 = vpop.permute.xlu0 %1361
      %v1363 = vsel %vm228, %v1356, %v1358
      %v1364 = vsel %vm228, %v1358, %v1360
      %v1365 = vsel %vm228, %v1360, %v1362
      %1366 = vrot.lane.b32.xlu0 %v1347, 126
      %v1367 = vpop.permute.xlu0 %1366
      %1368 = vrot.lane.b32.xlu0 %v1348, 126
      %v1369 = vpop.permute.xlu0 %1368
      %1370 = vrot.lane.b32.xlu0 %v1349, 126
      %v1371 = vpop.permute.xlu0 %1370
      %1372 = vrot.lane.b32.xlu0 %v1350, 126
      %v1373 = vpop.permute.xlu0 %1372
      %v1374 = vsel %vm240, %v1367, %v1369
      %v1375 = vsel %vm240, %v1369, %v1371
      %v1376 = vsel %vm240, %v1371, %v1373
      %1377 = vrot.lane.b32.xlu0 %v1347, 110
      %v1378 = vpop.permute.xlu0 %1377
      %1379 = vrot.lane.b32.xlu0 %v1348, 110
      %v1380 = vpop.permute.xlu0 %1379
      %1381 = vrot.lane.b32.xlu0 %v1349, 110
      %v1382 = vpop.permute.xlu0 %1381
      %1383 = vrot.lane.b32.xlu0 %v1350, 110
      %v1384 = vpop.permute.xlu0 %1383
      %v1385 = vsel %vm252, %v1378, %v1380
      %v1386 = vsel %vm252, %v1380, %v1382
      %v1387 = vsel %vm252, %v1382, %v1384
      %1388 = vrot.lane.b32.xlu0 %v1348, 109
      %v1389 = vpop.permute.xlu0 %1388
      %1390 = vrot.lane.b32.xlu0 %v1349, 109
      %v1391 = vpop.permute.xlu0 %1390
      %1392 = vrot.lane.b32.xlu0 %v1350, 109
      %v1393 = vpop.permute.xlu0 %1392
      %v1394 = vsel %vm262, %v1389, %v1391
      %v1395 = vsel %vm262, %v1391, %v1393
      %1396 = vrot.lane.b32.xlu0 %v1348, 108
      %v1397 = vpop.permute.xlu0 %1396
      %1398 = vrot.lane.b32.xlu0 %v1349, 108
      %v1399 = vpop.permute.xlu0 %1398
      %1400 = vrot.lane.b32.xlu0 %v1350, 108
      %v1401 = vpop.permute.xlu0 %1400
      %v1402 = vsel %vm271, %v1397, %v1399
      %v1403 = vsel %vm271, %v1399, %v1401
      %1404 = vrot.lane.b32.xlu0 %v1348, 92
      %v1405 = vpop.permute.xlu0 %1404
      %1406 = vrot.lane.b32.xlu0 %v1349, 92
      %v1407 = vpop.permute.xlu0 %1406
      %1408 = vrot.lane.b32.xlu0 %v1350, 92
      %v1409 = vpop.permute.xlu0 %1408
      %v1410 = vsel %vm280, %v1405, %v1407
      %v1411 = vsel %vm280, %v1407, %v1409
      %1412 = vrot.lane.b32.xlu0 %v1348, 91
      %v1413 = vpop.permute.xlu0 %1412
      %1414 = vrot.lane.b32.xlu0 %v1349, 91
      %v1415 = vpop.permute.xlu0 %1414
      %1416 = vrot.lane.b32.xlu0 %v1350, 91
      %v1417 = vpop.permute.xlu0 %1416
      %v1418 = vsel %vm289, %v1413, %v1415
      %v1419 = vsel %vm289, %v1415, %v1417
      %1420 = vrot.lane.b32.xlu0 %v1348, 90
      %v1421 = vpop.permute.xlu0 %1420
      %1422 = vrot.lane.b32.xlu0 %v1349, 90
      %v1423 = vpop.permute.xlu0 %1422
      %1424 = vrot.lane.b32.xlu0 %v1350, 90
      %v1425 = vpop.permute.xlu0 %1424
      %v1426 = vsel %vm298, %v1421, %v1423
      %v1427 = vsel %vm298, %v1423, %v1425
      %v1428 = vld [vmem:[%s687] sm:$0xff]
      %v1429 = vld [vmem:[%s689] sm:$0xff]
      %1431 = vset.pattern.permute.xlu0 0
      %1432 = vperm.xlu0 %1431, %v1429
      %v1433 = vpop.permute.xlu0 %1432
      %1435 = vrot.lane.b32.xlu0 %v1347, 19
      %v1436 = vpop.permute.xlu0 %1435
      %1437 = vrot.lane.b32.xlu0 %v1348, 19
      %v1438 = vpop.permute.xlu0 %1437
      %1439 = vrot.lane.b32.xlu0 %v1349, 19
      %v1440 = vpop.permute.xlu0 %1439
      %1441 = vrot.lane.b32.xlu0 %v1350, 19
      %v1442 = vpop.permute.xlu0 %1441
      %1443 = vrot.lane.b32.xlu0 %v1363, 19
      %v1444 = vpop.permute.xlu0 %1443
      %1445 = vrot.lane.b32.xlu0 %v1364, 19
      %v1446 = vpop.permute.xlu0 %1445
      %1447 = vrot.lane.b32.xlu0 %v1365, 19
      %v1448 = vpop.permute.xlu0 %1447
      %1449 = vrot.lane.b32.xlu0 %v1362, 19
      %v1450 = vpop.permute.xlu0 %1449
      %1451 = vrot.lane.b32.xlu0 %v1374, 19
      %v1452 = vpop.permute.xlu0 %1451
      %1453 = vrot.lane.b32.xlu0 %v1375, 19
      %v1454 = vpop.permute.xlu0 %1453
      %1455 = vrot.lane.b32.xlu0 %v1376, 19
      %v1456 = vpop.permute.xlu0 %1455
      %1457 = vrot.lane.b32.xlu0 %v1373, 19
      %v1458 = vpop.permute.xlu0 %1457
      %1459 = vrot.lane.b32.xlu0 %v1385, 19
      %v1460 = vpop.permute.xlu0 %1459
      %1461 = vrot.lane.b32.xlu0 %v1386, 19
      %v1462 = vpop.permute.xlu0 %1461
      %1463 = vrot.lane.b32.xlu0 %v1387, 19
      %v1464 = vpop.permute.xlu0 %1463
      %1465 = vrot.lane.b32.xlu0 %v1384, 19
      %v1466 = vpop.permute.xlu0 %1465
      %1467 = vrot.lane.b32.xlu0 %v1389, 19
      %v1468 = vpop.permute.xlu0 %1467
      %1469 = vrot.lane.b32.xlu0 %v1394, 19
      %v1470 = vpop.permute.xlu0 %1469
      %1471 = vrot.lane.b32.xlu0 %v1395, 19
      %v1472 = vpop.permute.xlu0 %1471
      %1473 = vrot.lane.b32.xlu0 %v1393, 19
      %v1474 = vpop.permute.xlu0 %1473
      %1475 = vrot.lane.b32.xlu0 %v1397, 19
      %v1476 = vpop.permute.xlu0 %1475
      %1477 = vrot.lane.b32.xlu0 %v1402, 19
      %v1478 = vpop.permute.xlu0 %1477
      %1479 = vrot.lane.b32.xlu0 %v1403, 19
      %v1480 = vpop.permute.xlu0 %1479
      %1481 = vrot.lane.b32.xlu0 %v1401, 19
      %v1482 = vpop.permute.xlu0 %1481
      %1483 = vrot.lane.b32.xlu0 %v1405, 19
      %v1484 = vpop.permute.xlu0 %1483
      %1485 = vrot.lane.b32.xlu0 %v1410, 19
      %v1486 = vpop.permute.xlu0 %1485
      %1487 = vrot.lane.b32.xlu0 %v1411, 19
      %v1488 = vpop.permute.xlu0 %1487
      %1489 = vrot.lane.b32.xlu0 %v1409, 19
      %v1490 = vpop.permute.xlu0 %1489
      %1491 = vrot.lane.b32.xlu0 %v1413, 19
      %v1492 = vpop.permute.xlu0 %1491
      %1493 = vrot.lane.b32.xlu0 %v1418, 19
      %v1494 = vpop.permute.xlu0 %1493
      %1495 = vrot.lane.b32.xlu0 %v1419, 19
      %v1496 = vpop.permute.xlu0 %1495
      %1497 = vrot.lane.b32.xlu0 %v1417, 19
      %v1498 = vpop.permute.xlu0 %1497
      %1499 = vrot.lane.b32.xlu0 %v1421, 19
      %v1500 = vpop.permute.xlu0 %1499
      %1501 = vrot.lane.b32.xlu0 %v1426, 19
      %v1502 = vpop.permute.xlu0 %1501
      %1503 = vrot.lane.b32.xlu0 %v1427, 19
      %v1504 = vpop.permute.xlu0 %1503
      %1505 = vrot.lane.b32.xlu0 %v1425, 19
      %v1506 = vpop.permute.xlu0 %1505
      %v1507 = vsel %vm380, %v1436, %v1438
      %v1508 = vsel %vm380, %v1438, %v1440
      %v1509 = vsel %vm380, %v1440, %v1442
      %v1510 = vsel %vm380, %v1444, %v1446
      %v1511 = vsel %vm380, %v1446, %v1448
      %v1512 = vsel %vm380, %v1448, %v1450
      %v1513 = vsel %vm380, %v1452, %v1454
      %v1514 = vsel %vm380, %v1454, %v1456
      %v1515 = vsel %vm380, %v1456, %v1458
      %v1516 = vsel %vm380, %v1460, %v1462
      %v1517 = vsel %vm380, %v1462, %v1464
      %v1518 = vsel %vm380, %v1464, %v1466
      %v1519 = vsel %vm380, %v1468, %v1470
      %v1520 = vsel %vm380, %v1470, %v1472
      %v1521 = vsel %vm380, %v1472, %v1474
      %v1522 = vsel %vm380, %v1476, %v1478
      %v1523 = vsel %vm380, %v1478, %v1480
      %v1524 = vsel %vm380, %v1480, %v1482
      %v1525 = vsel %vm380, %v1484, %v1486
      %v1526 = vsel %vm380, %v1486, %v1488
      %v1527 = vsel %vm380, %v1488, %v1490
      %v1528 = vsel %vm380, %v1492, %v1494
      %v1529 = vsel %vm380, %v1494, %v1496
      %v1530 = vsel %vm380, %v1496, %v1498
      %v1531 = vsel %vm380, %v1500, %v1502
      %v1532 = vsel %vm380, %v1502, %v1504
      %v1533 = vsel %vm380, %v1504, %v1506
      %v1562 = vsel %vm435, %v1428, 0
      %1564 = vmatprep.subr.mxu0 %v1508
      %1565 = vmatpush1.msra.mxu0 %v1507
      %1566 = vmatprep.subr.mxu0 %v1511
      %1567 = vmatpush1.msra.mxu0 %v1510
      %1568 = vmatprep.subr.mxu0 %v1514
      %1569 = vmatpush1.msra.mxu0 %v1513
      %1570 = vmatprep.subr.mxu0 %v1517
      %1571 = vmatpush1.msra.mxu0 %v1516
      %1572 = vmatprep.subr.mxu0 %v1520
      %1573 = vmatpush1.msra.mxu0 %v1519
      %1574 = vmatprep.subr.mxu0 %v1523
      %1575 = vmatpush1.msra.mxu0 %v1522
      %1576 = vmatprep.subr.mxu0 %v1526
      %1577 = vmatpush1.msra.mxu0 %v1525
      %1578 = vmatprep.subr.mxu0 %v1529
      %1579 = vmatpush1.msra.mxu0 %v1528
      %1580 = vmatprep.subr.mxu0 %v1532
      %1581 = vmatpush1.msra.mxu0 %v1531
      %1582 = vmatprep.subr.mxu0 0.0
      %1583 = vmatpush1.msra.mxu0 0.0
      %1584 = vmatprep.subr.mxu0 0.0
      %1585 = vmatpush1.msra.mxu0 0.0
      %1586 = vmatprep.subr.mxu0 0.0
      %1587 = vmatpush1.msra.mxu0 0.0
      %1588 = vmatprep.subr.mxu0 0.0
      %1589 = vmatpush1.msra.mxu0 0.0
      %1590 = vmatprep.subr.mxu0 0.0
      %1591 = vmatpush1.msra.mxu0 0.0
      %1592 = vmatprep.subr.mxu0 0.0
      %1593 = vmatpush1.msra.mxu0 0.0
      %1594 = vmatprep.subr.mxu0 0.0
      %1595 = vmatpush1.msra.mxu0 0.0
      %1596 = vmatprep.subr.mxu0 0.0
      %1597 = vmatpush1.msra.mxu0 0.0
      %1598 = vmatprep.subr.mxu0 0.0
      %1599 = vmatpush1.msra.mxu0 0.0
      %1600 = vmatprep.subr.mxu0 0.0
      %1601 = vmatpush1.msra.mxu0 0.0
      %1602 = vmatprep.subr.mxu0 0.0
      %1603 = vmatpush1.msra.mxu0 0.0
      %1604 = vmatprep.subr.mxu0 0.0
      %1605 = vmatpush1.msra.mxu0 0.0
      %1606 = vmatprep.subr.mxu0 0.0
      %1607 = vmatpush1.msra.mxu0 0.0
      %1608 = vmatprep.subr.mxu0 0.0
      %1609 = vmatpush1.msra.mxu0 0.0
      %1610 = vmatprep.subr.mxu0 0.0
      %1611 = vmatpush1.msra.mxu0 0.0
      %1612 = vmatprep.subr.mxu0 0.0
      %1613 = vmatpush1.msra.mxu0 0.0
      %1614 = vmatprep.subr.mxu0 0.0
      %1615 = vmatpush1.msra.mxu0 0.0
      %1616 = vmatprep.subr.mxu0 0.0
      %1617 = vmatpush1.msra.mxu0 0.0
      %1618 = vmatprep.subr.mxu0 0.0
      %1619 = vmatpush1.msra.mxu0 0.0
      %1620 = vmatprep.subr.mxu0 0.0
      %1621 = vmatpush1.msra.mxu0 0.0
      %1622 = vmatprep.subr.mxu0 0.0
      %1623 = vmatpush1.msra.mxu0 0.0
      %1624 = vmatprep.subr.mxu0 0.0
      %1625 = vmatpush1.msra.mxu0 0.0
      %1626 = vmatprep.subr.mxu0 0.0
      %1627 = vmatpush1.msra.mxu0 0.0
      %1628 = vmatprep.mubr.f32.mxu0 0.0
      %1629 = vmatmul.mubr.f32.gmra.mrb[0].mxu0 %v1562
      %v1630 = vpop.f32.mrb[0].mxu0
      %v1631 = vadd.f32 %v1433, %v1630
      %v1632 = vpop.f32.mrb[0].mxu0
      %v1633 = vadd.f32 %v1433, %v1632
      %1634 = vdwg.mxu0
      %1635 = vmatprep.subr.mxu0 0.0
      %1636 = vmatpush1.msra.mxu0 %v1509
      %1637 = vmatprep.subr.mxu0 0.0
      %1638 = vmatpush1.msra.mxu0 %v1512
      %1639 = vmatprep.subr.mxu0 0.0
      %1640 = vmatpush1.msra.mxu0 %v1515
      %1641 = vmatprep.subr.mxu0 0.0
      %1642 = vmatpush1.msra.mxu0 %v1518
      %1643 = vmatprep.subr.mxu0 0.0
      %1644 = vmatpush1.msra.mxu0 %v1521
      %1645 = vmatprep.subr.mxu0 0.0
      %1646 = vmatpush1.msra.mxu0 %v1524
      %1647 = vmatprep.subr.mxu0 0.0
      %1648 = vmatpush1.msra.mxu0 %v1527
      %1649 = vmatprep.subr.mxu0 0.0
      %1650 = vmatpush1.msra.mxu0 %v1530
      %1651 = vmatprep.subr.mxu0 0.0
      %1652 = vmatpush1.msra.mxu0 %v1533
      %1653 = vmatprep.subr.mxu0 0.0
      %1654 = vmatpush1.msra.mxu0 0.0
      %1655 = vmatprep.subr.mxu0 0.0
      %1656 = vmatpush1.msra.mxu0 0.0
      %1657 = vmatprep.subr.mxu0 0.0
      %1658 = vmatpush1.msra.mxu0 0.0
      %1659 = vmatprep.subr.mxu0 0.0
      %1660 = vmatpush1.msra.mxu0 0.0
      %1661 = vmatprep.subr.mxu0 0.0
      %1662 = vmatpush1.msra.mxu0 0.0
      %1663 = vmatprep.subr.mxu0 0.0
      %1664 = vmatpush1.msra.mxu0 0.0
      %1665 = vmatprep.subr.mxu0 0.0
      %1666 = vmatpush1.msra.mxu0 0.0
      %1667 = vmatprep.subr.mxu0 0.0
      %1668 = vmatpush1.msra.mxu0 0.0
      %1669 = vmatprep.subr.mxu0 0.0
      %1670 = vmatpush1.msra.mxu0 0.0
      %1671 = vmatprep.subr.mxu0 0.0
      %1672 = vmatpush1.msra.mxu0 0.0
      %1673 = vmatprep.subr.mxu0 0.0
      %1674 = vmatpush1.msra.mxu0 0.0
      %1675 = vmatprep.subr.mxu0 0.0
      %1676 = vmatpush1.msra.mxu0 0.0
      %1677 = vmatprep.subr.mxu0 0.0
      %1678 = vmatpush1.msra.mxu0 0.0
      %1679 = vmatprep.subr.mxu0 0.0
      %1680 = vmatpush1.msra.mxu0 0.0
      %1681 = vmatprep.subr.mxu0 0.0
      %1682 = vmatpush1.msra.mxu0 0.0
      %1683 = vmatprep.subr.mxu0 0.0
      %1684 = vmatpush1.msra.mxu0 0.0
      %1685 = vmatprep.subr.mxu0 0.0
      %1686 = vmatpush1.msra.mxu0 0.0
      %1687 = vmatprep.subr.mxu0 0.0
      %1688 = vmatpush1.msra.mxu0 0.0
      %1689 = vmatprep.subr.mxu0 0.0
      %1690 = vmatpush1.msra.mxu0 0.0
      %1691 = vmatprep.subr.mxu0 0.0
      %1692 = vmatpush1.msra.mxu0 0.0
      %1693 = vmatprep.subr.mxu0 0.0
      %1694 = vmatpush1.msra.mxu0 0.0
      %1695 = vmatprep.subr.mxu0 0.0
      %1696 = vmatpush1.msra.mxu0 0.0
      %1697 = vmatprep.subr.mxu0 0.0
      %1698 = vmatpush1.msra.mxu0 0.0
      %1699 = vmatprep.mubr.f32.mxu0 0.0
      %1700 = vmatmul.mubr.f32.gmra.mrb[0].mxu0 %v1562
      %v1701 = vpop.f32.mrb[0].mxu0
      %v1702 = vadd.f32 %v1433, %v1701
      %v1703 = vpop.f32.mrb[0].mxu0
      %1704 = vdwg.mxu0
      %v1705 = vmax.f32 %v1631, 0.0
      %v1706 = vmax.f32 %v1633, 0.0
      %v1707 = vmax.f32 %v1702, 0.0
      %v1708 = vsel %vm596, %v1705, 0.0
      %v1709 = vsel %vm597, %v1706, 0.0
      %v1710 = vsel %vm598, %v1707, 0.0
      %1711 = vst [vmem:[#allocation2 + $0x8] sm:$0xff] %v1708
      %1712 = vst [vmem:[#allocation2 + $0x10] sm:$0xff] %v1709
      %1713 = vst.msk [vmem:[#allocation2 + $0x18] sm:$0xff] %vm604, %v1710
      %v1714 = vld [vmem:[#allocation2] sm:$0xff]
      %v1715 = vld [vmem:[#allocation2 + $0x8] sm:$0xff]
      %v1716 = vld [vmem:[#allocation2 + $0x10] sm:$0xff]
      %v1717 = vld [vmem:[#allocation2 + $0x18] sm:$0xff]
      %1722 = vrot.lane.b32.xlu0 %v1714, 127
      %v1723 = vpop.permute.xlu0 %1722
      %1724 = vrot.lane.b32.xlu0 %v1715, 127
      %v1725 = vpop.permute.xlu0 %1724
      %1726 = vrot.lane.b32.xlu0 %v1716, 127
      %v1727 = vpop.permute.xlu0 %1726
      %1728 = vrot.lane.b32.xlu0 %v1717, 127
      %v1729 = vpop.permute.xlu0 %1728
      %v1730 = vsel %vm228, %v1723, %v1725
      %v1731 = vsel %vm228, %v1725, %v1727
      %v1732 = vsel %vm228, %v1727, %v1729
      %1733 = vrot.lane.b32.xlu0 %v1714, 126
      %v1734 = vpop.permute.xlu0 %1733
      %1735 = vrot.lane.b32.xlu0 %v1715, 126
      %v1736 = vpop.permute.xlu0 %1735
      %1737 = vrot.lane.b32.xlu0 %v1716, 126
      %v1738 = vpop.permute.xlu0 %1737
      %1739 = vrot.lane.b32.xlu0 %v1717, 126
      %v1740 = vpop.permute.xlu0 %1739
      %v1741 = vsel %vm240, %v1734, %v1736
      %v1742 = vsel %vm240, %v1736, %v1738
      %v1743 = vsel %vm240, %v1738, %v1740
      %1744 = vrot.lane.b32.xlu0 %v1714, 110
      %v1745 = vpop.permute.xlu0 %1744
      %1746 = vrot.lane.b32.xlu0 %v1715, 110
      %v1747 = vpop.permute.xlu0 %1746
      %1748 = vrot.lane.b32.xlu0 %v1716, 110
      %v1749 = vpop.permute.xlu0 %1748
      %1750 = vrot.lane.b32.xlu0 %v1717, 110
      %v1751 = vpop.permute.xlu0 %1750
      %v1752 = vsel %vm252, %v1745, %v1747
      %v1753 = vsel %vm252, %v1747, %v1749
      %v1754 = vsel %vm252, %v1749, %v1751
      %1755 = vrot.lane.b32.xlu0 %v1715, 109
      %v1756 = vpop.permute.xlu0 %1755
      %1757 = vrot.lane.b32.xlu0 %v1716, 109
      %v1758 = vpop.permute.xlu0 %1757
      %1759 = vrot.lane.b32.xlu0 %v1717, 109
      %v1760 = vpop.permute.xlu0 %1759
      %v1761 = vsel %vm262, %v1756, %v1758
      %v1762 = vsel %vm262, %v1758, %v1760
      %1763 = vrot.lane.b32.xlu0 %v1715, 108
      %v1764 = vpop.permute.xlu0 %1763
      %1765 = vrot.lane.b32.xlu0 %v1716, 108
      %v1766 = vpop.permute.xlu0 %1765
      %1767 = vrot.lane.b32.xlu0 %v1717, 108
      %v1768 = vpop.permute.xlu0 %1767
      %v1769 = vsel %vm271, %v1764, %v1766
      %v1770 = vsel %vm271, %v1766, %v1768
      %1771 = vrot.lane.b32.xlu0 %v1715, 92
      %v1772 = vpop.permute.xlu0 %1771
      %1773 = vrot.lane.b32.xlu0 %v1716, 92
      %v1774 = vpop.permute.xlu0 %1773
      %1775 = vrot.lane.b32.xlu0 %v1717, 92
      %v1776 = vpop.permute.xlu0 %1775
      %v1777 = vsel %vm280, %v1772, %v1774
      %v1778 = vsel %vm280, %v1774, %v1776
      %1779 = vrot.lane.b32.xlu0 %v1715, 91
      %v1780 = vpop.permute.xlu0 %1779
      %1781 = vrot.lane.b32.xlu0 %v1716, 91
      %v1782 = vpop.permute.xlu0 %1781
      %1783 = vrot.lane.b32.xlu0 %v1717, 91
      %v1784 = vpop.permute.xlu0 %1783
      %v1785 = vsel %vm289, %v1780, %v1782
      %v1786 = vsel %vm289, %v1782, %v1784
      %1787 = vrot.lane.b32.xlu0 %v1715, 90
      %v1788 = vpop.permute.xlu0 %1787
      %1789 = vrot.lane.b32.xlu0 %v1716, 90
      %v1790 = vpop.permute.xlu0 %1789
      %1791 = vrot.lane.b32.xlu0 %v1717, 90
      %v1792 = vpop.permute.xlu0 %1791
      %v1793 = vsel %vm298, %v1788, %v1790
      %v1794 = vsel %vm298, %v1790, %v1792
      %v1795 = vld [vmem:[%s1056] sm:$0xff]
      %v1796 = vld [vmem:[%s1058] sm:$0xff]
      %1798 = vset.pattern.permute.xlu0 0
      %1799 = vperm.xlu0 %1798, %v1796
      %v1800 = vpop.permute.xlu0 %1799
      %1802 = vrot.lane.b32.xlu0 %v1714, 19
      %v1803 = vpop.permute.xlu0 %1802
      %1804 = vrot.lane.b32.xlu0 %v1715, 19
      %v1805 = vpop.permute.xlu0 %1804
      %1806 = vrot.lane.b32.xlu0 %v1716, 19
      %v1807 = vpop.permute.xlu0 %1806
      %1808 = vrot.lane.b32.xlu0 %v1717, 19
      %v1809 = vpop.permute.xlu0 %1808
      %1810 = vrot.lane.b32.xlu0 %v1730, 19
      %v1811 = vpop.permute.xlu0 %1810
      %1812 = vrot.lane.b32.xlu0 %v1731, 19
      %v1813 = vpop.permute.xlu0 %1812
      %1814 = vrot.lane.b32.xlu0 %v1732, 19
      %v1815 = vpop.permute.xlu0 %1814
      %1816 = vrot.lane.b32.xlu0 %v1729, 19
      %v1817 = vpop.permute.xlu0 %1816
      %1818 = vrot.lane.b32.xlu0 %v1741, 19
      %v1819 = vpop.permute.xlu0 %1818
      %1820 = vrot.lane.b32.xlu0 %v1742, 19
      %v1821 = vpop.permute.xlu0 %1820
      %1822 = vrot.lane.b32.xlu0 %v1743, 19
      %v1823 = vpop.permute.xlu0 %1822
      %1824 = vrot.lane.b32.xlu0 %v1740, 19
      %v1825 = vpop.permute.xlu0 %1824
      %1826 = vrot.lane.b32.xlu0 %v1752, 19
      %v1827 = vpop.permute.xlu0 %1826
      %1828 = vrot.lane.b32.xlu0 %v1753, 19
      %v1829 = vpop.permute.xlu0 %1828
      %1830 = vrot.lane.b32.xlu0 %v1754, 19
      %v1831 = vpop.permute.xlu0 %1830
      %1832 = vrot.lane.b32.xlu0 %v1751, 19
      %v1833 = vpop.permute.xlu0 %1832
      %1834 = vrot.lane.b32.xlu0 %v1756, 19
      %v1835 = vpop.permute.xlu0 %1834
      %1836 = vrot.lane.b32.xlu0 %v1761, 19
      %v1837 = vpop.permute.xlu0 %1836
      %1838 = vrot.lane.b32.xlu0 %v1762, 19
      %v1839 = vpop.permute.xlu0 %1838
      %1840 = vrot.lane.b32.xlu0 %v1760, 19
      %v1841 = vpop.permute.xlu0 %1840
      %1842 = vrot.lane.b32.xlu0 %v1764, 19
      %v1843 = vpop.permute.xlu0 %1842
      %1844 = vrot.lane.b32.xlu0 %v1769, 19
      %v1845 = vpop.permute.xlu0 %1844
      %1846 = vrot.lane.b32.xlu0 %v1770, 19
      %v1847 = vpop.permute.xlu0 %1846
      %1848 = vrot.lane.b32.xlu0 %v1768, 19
      %v1849 = vpop.permute.xlu0 %1848
      %1850 = vrot.lane.b32.xlu0 %v1772, 19
      %v1851 = vpop.permute.xlu0 %1850
      %1852 = vrot.lane.b32.xlu0 %v1777, 19
      %v1853 = vpop.permute.xlu0 %1852
      %1854 = vrot.lane.b32.xlu0 %v1778, 19
      %v1855 = vpop.permute.xlu0 %1854
      %1856 = vrot.lane.b32.xlu0 %v1776, 19
      %v1857 = vpop.permute.xlu0 %1856
      %1858 = vrot.lane.b32.xlu0 %v1780, 19
      %v1859 = vpop.permute.xlu0 %1858
      %1860 = vrot.lane.b32.xlu0 %v1785, 19
      %v1861 = vpop.permute.xlu0 %1860
      %1862 = vrot.lane.b32.xlu0 %v1786, 19
      %v1863 = vpop.permute.xlu0 %1862
      %1864 = vrot.lane.b32.xlu0 %v1784, 19
      %v1865 = vpop.permute.xlu0 %1864
      %1866 = vrot.lane.b32.xlu0 %v1788, 19
      %v1867 = vpop.permute.xlu0 %1866
      %1868 = vrot.lane.b32.xlu0 %v1793, 19
      %v1869 = vpop.permute.xlu0 %1868
      %1870 = vrot.lane.b32.xlu0 %v1794, 19
      %v1871 = vpop.permute.xlu0 %1870
      %1872 = vrot.lane.b32.xlu0 %v1792, 19
      %v1873 = vpop.permute.xlu0 %1872
      %v1874 = vsel %vm380, %v1803, %v1805
      %v1875 = vsel %vm380, %v1805, %v1807
      %v1876 = vsel %vm380, %v1807, %v1809
      %v1877 = vsel %vm380, %v1811, %v1813
      %v1878 = vsel %vm380, %v1813, %v1815
      %v1879 = vsel %vm380, %v1815, %v1817
      %v1880 = vsel %vm380, %v1819, %v1821
      %v1881 = vsel %vm380, %v1821, %v1823
      %v1882 = vsel %vm380, %v1823, %v1825
      %v1883 = vsel %vm380, %v1827, %v1829
      %v1884 = vsel %vm380, %v1829, %v1831
      %v1885 = vsel %vm380, %v1831, %v1833
      %v1886 = vsel %vm380, %v1835, %v1837
      %v1887 = vsel %vm380, %v1837, %v1839
      %v1888 = vsel %vm380, %v1839, %v1841
      %v1889 = vsel %vm380, %v1843, %v1845
      %v1890 = vsel %vm380, %v1845, %v1847
      %v1891 = vsel %vm380, %v1847, %v1849
      %v1892 = vsel %vm380, %v1851, %v1853
      %v1893 = vsel %vm380, %v1853, %v1855
      %v1894 = vsel %vm380, %v1855, %v1857
      %v1895 = vsel %vm380, %v1859, %v1861
      %v1896 = vsel %vm380, %v1861, %v1863
      %v1897 = vsel %vm380, %v1863, %v1865
      %v1898 = vsel %vm380, %v1867, %v1869
      %v1899 = vsel %vm380, %v1869, %v1871
      %v1900 = vsel %vm380, %v1871, %v1873
      %v1929 = vsel %vm435, %v1795, 0
      %1931 = vmatprep.subr.mxu0 %v1875
      %1932 = vmatpush1.msra.mxu0 %v1874
      %1933 = vmatprep.subr.mxu0 %v1878
      %1934 = vmatpush1.msra.mxu0 %v1877
      %1935 = vmatprep.subr.mxu0 %v1881
      %1936 = vmatpush1.msra.mxu0 %v1880
      %1937 = vmatprep.subr.mxu0 %v1884
      %1938 = vmatpush1.msra.mxu0 %v1883
      %1939 = vmatprep.subr.mxu0 %v1887
      %1940 = vmatpush1.msra.mxu0 %v1886
      %1941 = vmatprep.subr.mxu0 %v1890
      %1942 = vmatpush1.msra.mxu0 %v1889
      %1943 = vmatprep.subr.mxu0 %v1893
      %1944 = vmatpush1.msra.mxu0 %v1892
      %1945 = vmatprep.subr.mxu0 %v1896
      %1946 = vmatpush1.msra.mxu0 %v1895
      %1947 = vmatprep.subr.mxu0 %v1899
      %1948 = vmatpush1.msra.mxu0 %v1898
      %1949 = vmatprep.subr.mxu0 0.0
      %1950 = vmatpush1.msra.mxu0 0.0
      %1951 = vmatprep.subr.mxu0 0.0
      %1952 = vmatpush1.msra.mxu0 0.0
      %1953 = vmatprep.subr.mxu0 0.0
      %1954 = vmatpush1.msra.mxu0 0.0
      %1955 = vmatprep.subr.mxu0 0.0
      %1956 = vmatpush1.msra.mxu0 0.0
      %1957 = vmatprep.subr.mxu0 0.0
      %1958 = vmatpush1.msra.mxu0 0.0
      %1959 = vmatprep.subr.mxu0 0.0
      %1960 = vmatpush1.msra.mxu0 0.0
      %1961 = vmatprep.subr.mxu0 0.0
      %1962 = vmatpush1.msra.mxu0 0.0
      %1963 = vmatprep.subr.mxu0 0.0
      %1964 = vmatpush1.msra.mxu0 0.0
      %1965 = vmatprep.subr.mxu0 0.0
      %1966 = vmatpush1.msra.mxu0 0.0
      %1967 = vmatprep.subr.mxu0 0.0
      %1968 = vmatpush1.msra.mxu0 0.0
      %1969 = vmatprep.subr.mxu0 0.0
      %1970 = vmatpush1.msra.mxu0 0.0
      %1971 = vmatprep.subr.mxu0 0.0
      %1972 = vmatpush1.msra.mxu0 0.0
      %1973 = vmatprep.subr.mxu0 0.0
      %1974 = vmatpush1.msra.mxu0 0.0
      %1975 = vmatprep.subr.mxu0 0.0
      %1976 = vmatpush1.msra.mxu0 0.0
      %1977 = vmatprep.subr.mxu0 0.0
      %1978 = vmatpush1.msra.mxu0 0.0
      %1979 = vmatprep.subr.mxu0 0.0
      %1980 = vmatpush1.msra.mxu0 0.0
      %1981 = vmatprep.subr.mxu0 0.0
      %1982 = vmatpush1.msra.mxu0 0.0
      %1983 = vmatprep.subr.mxu0 0.0
      %1984 = vmatpush1.msra.mxu0 0.0
      %1985 = vmatprep.subr.mxu0 0.0
      %1986 = vmatpush1.msra.mxu0 0.0
      %1987 = vmatprep.subr.mxu0 0.0
      %1988 = vmatpush1.msra.mxu0 0.0
      %1989 = vmatprep.subr.mxu0 0.0
      %1990 = vmatpush1.msra.mxu0 0.0
      %1991 = vmatprep.subr.mxu0 0.0
      %1992 = vmatpush1.msra.mxu0 0.0
      %1993 = vmatprep.subr.mxu0 0.0
      %1994 = vmatpush1.msra.mxu0 0.0
      %1995 = vmatprep.mubr.f32.mxu0 0.0
      %1996 = vmatmul.mubr.f32.gmra.mrb[0].mxu0 %v1929
      %v1997 = vpop.f32.mrb[0].mxu0
      %v1998 = vadd.f32 %v1800, %v1997
      %v1999 = vpop.f32.mrb[0].mxu0
      %v2000 = vadd.f32 %v1800, %v1999
      %2001 = vdwg.mxu0
      %2002 = vmatprep.subr.mxu0 0.0
      %2003 = vmatpush1.msra.mxu0 %v1876
      %2004 = vmatprep.subr.mxu0 0.0
      %2005 = vmatpush1.msra.mxu0 %v1879
      %2006 = vmatprep.subr.mxu0 0.0
      %2007 = vmatpush1.msra.mxu0 %v1882
      %2008 = vmatprep.subr.mxu0 0.0
      %2009 = vmatpush1.msra.mxu0 %v1885
      %2010 = vmatprep.subr.mxu0 0.0
      %2011 = vmatpush1.msra.mxu0 %v1888
      %2012 = vmatprep.subr.mxu0 0.0
      %2013 = vmatpush1.msra.mxu0 %v1891
      %2014 = vmatprep.subr.mxu0 0.0
      %2015 = vmatpush1.msra.mxu0 %v1894
      %2016 = vmatprep.subr.mxu0 0.0
      %2017 = vmatpush1.msra.mxu0 %v1897
      %2018 = vmatprep.subr.mxu0 0.0
      %2019 = vmatpush1.msra.mxu0 %v1900
      %2020 = vmatprep.subr.mxu0 0.0
      %2021 = vmatpush1.msra.mxu0 0.0
      %2022 = vmatprep.subr.mxu0 0.0
      %2023 = vmatpush1.msra.mxu0 0.0
      %2024 = vmatprep.subr.mxu0 0.0
      %2025 = vmatpush1.msra.mxu0 0.0
      %2026 = vmatprep.subr.mxu0 0.0
      %2027 = vmatpush1.msra.mxu0 0.0
      %2028 = vmatprep.subr.mxu0 0.0
      %2029 = vmatpush1.msra.mxu0 0.0
      %2030 = vmatprep.subr.mxu0 0.0
      %2031 = vmatpush1.msra.mxu0 0.0
      %2032 = vmatprep.subr.mxu0 0.0
      %2033 = vmatpush1.msra.mxu0 0.0
      %2034 = vmatprep.subr.mxu0 0.0
      %2035 = vmatpush1.msra.mxu0 0.0
      %2036 = vmatprep.subr.mxu0 0.0
      %2037 = vmatpush1.msra.mxu0 0.0
      %2038 = vmatprep.subr.mxu0 0.0
      %2039 = vmatpush1.msra.mxu0 0.0
      %2040 = vmatprep.subr.mxu0 0.0
      %2041 = vmatpush1.msra.mxu0 0.0
      %2042 = vmatprep.subr.mxu0 0.0
      %2043 = vmatpush1.msra.mxu0 0.0
      %2044 = vmatprep.subr.mxu0 0.0
      %2045 = vmatpush1.msra.mxu0 0.0
      %2046 = vmatprep.subr.mxu0 0.0
      %2047 = vmatpush1.msra.mxu0 0.0
      %2048 = vmatprep.subr.mxu0 0.0
      %2049 = vmatpush1.msra.mxu0 0.0
      %2050 = vmatprep.subr.mxu0 0.0
      %2051 = vmatpush1.msra.mxu0 0.0
      %2052 = vmatprep.subr.mxu0 0.0
      %2053 = vmatpush1.msra.mxu0 0.0
      %2054 = vmatprep.subr.mxu0 0.0
      %2055 = vmatpush1.msra.mxu0 0.0
      %2056 = vmatprep.subr.mxu0 0.0
      %2057 = vmatpush1.msra.mxu0 0.0
      %2058 = vmatprep.subr.mxu0 0.0
      %2059 = vmatpush1.msra.mxu0 0.0
      %2060 = vmatprep.subr.mxu0 0.0
      %2061 = vmatpush1.msra.mxu0 0.0
      %2062 = vmatprep.subr.mxu0 0.0
      %2063 = vmatpush1.msra.mxu0 0.0
      %2064 = vmatprep.subr.mxu0 0.0
      %2065 = vmatpush1.msra.mxu0 0.0
      %2066 = vmatprep.mubr.f32.mxu0 0.0
      %2067 = vmatmul.mubr.f32.gmra.mrb[0].mxu0 %v1929
      %v2068 = vpop.f32.mrb[0].mxu0
      %v2069 = vadd.f32 %v1800, %v2068
      %v2070 = vpop.f32.mrb[0].mxu0
      %2071 = vdwg.mxu0
      %v2072 = vld [vmem:[#allocation3 + $0x8] sm:$0xff]
      %v2073 = vld [vmem:[#allocation3 + $0x10] sm:$0xff]
      %v2074 = vld [vmem:[#allocation3 + $0x18] sm:$0xff]
      %v2075 = vadd.f32 %v1998, %v2072
      %v2076 = vadd.f32 %v2000, %v2073
      %v2077 = vadd.f32 %v2069, %v2074
      %v2078 = vsel %vm596, %v2075, 0.0
      %v2079 = vsel %vm597, %v2076, 0.0
      %v2080 = vsel %vm598, %v2077, 0.0
      %2081 = vst [vmem:[#allocation3 + $0x8] sm:$0xff] %v2078
      %2082 = vst [vmem:[#allocation3 + $0x10] sm:$0xff] %v2079
      %2083 = vst.msk [vmem:[#allocation3 + $0x18] sm:$0xff] %vm604, %v2080
      %v2084 = vld [vmem:[#allocation3] sm:$0xff]
      %v2085 = vld [vmem:[#allocation3 + $0x8] sm:$0xff]
      %v2086 = vld [vmem:[#allocation3 + $0x10] sm:$0xff]
      %v2087 = vld [vmem:[#allocation3 + $0x18] sm:$0xff]
      %2092 = vrot.lane.b32.xlu0 %v2084, 127
      %v2093 = vpop.permute.xlu0 %2092
      %2094 = vrot.lane.b32.xlu0 %v2085, 127
      %v2095 = vpop.permute.xlu0 %2094
      %2096 = vrot.lane.b32.xlu0 %v2086, 127
      %v2097 = vpop.permute.xlu0 %2096
      %2098 = vrot.lane.b32.xlu0 %v2087, 127
      %v2099 = vpop.permute.xlu0 %2098
      %v2100 = vsel %vm228, %v2093, %v2095
      %v2101 = vsel %vm228, %v2095, %v2097
      %v2102 = vsel %vm228, %v2097, %v2099
      %2103 = vrot.lane.b32.xlu0 %v2084, 126
      %v2104 = vpop.permute.xlu0 %2103
      %2105 = vrot.lane.b32.xlu0 %v2085, 126
      %v2106 = vpop.permute.xlu0 %2105
      %2107 = vrot.lane.b32.xlu0 %v2086, 126
      %v2108 = vpop.permute.xlu0 %2107
      %2109 = vrot.lane.b32.xlu0 %v2087, 126
      %v2110 = vpop.permute.xlu0 %2109
      %v2111 = vsel %vm240, %v2104, %v2106
      %v2112 = vsel %vm240, %v2106, %v2108
      %v2113 = vsel %vm240, %v2108, %v2110
      %2114 = vrot.lane.b32.xlu0 %v2084, 110
      %v2115 = vpop.permute.xlu0 %2114
      %2116 = vrot.lane.b32.xlu0 %v2085, 110
      %v2117 = vpop.permute.xlu0 %2116
      %2118 = vrot.lane.b32.xlu0 %v2086, 110
      %v2119 = vpop.permute.xlu0 %2118
      %2120 = vrot.lane.b32.xlu0 %v2087, 110
      %v2121 = vpop.permute.xlu0 %2120
      %v2122 = vsel %vm252, %v2115, %v2117
      %v2123 = vsel %vm252, %v2117, %v2119
      %v2124 = vsel %vm252, %v2119, %v2121
      %2125 = vrot.lane.b32.xlu0 %v2085, 109
      %v2126 = vpop.permute.xlu0 %2125
      %2127 = vrot.lane.b32.xlu0 %v2086, 109
      %v2128 = vpop.permute.xlu0 %2127
      %2129 = vrot.lane.b32.xlu0 %v2087, 109
      %v2130 = vpop.permute.xlu0 %2129
      %v2131 = vsel %vm262, %v2126, %v2128
      %v2132 = vsel %vm262, %v2128, %v2130
      %2133 = vrot.lane.b32.xlu0 %v2085, 108
      %v2134 = vpop.permute.xlu0 %2133
      %2135 = vrot.lane.b32.xlu0 %v2086, 108
      %v2136 = vpop.permute.xlu0 %2135
      %2137 = vrot.lane.b32.xlu0 %v2087, 108
      %v2138 = vpop.permute.xlu0 %2137
      %v2139 = vsel %vm271, %v2134, %v2136
      %v2140 = vsel %vm271, %v2136, %v2138
      %2141 = vrot.lane.b32.xlu0 %v2085, 92
      %v2142 = vpop.permute.xlu0 %2141
      %2143 = vrot.lane.b32.xlu0 %v2086, 92
      %v2144 = vpop.permute.xlu0 %2143
      %2145 = vrot.lane.b32.xlu0 %v2087, 92
      %v2146 = vpop.permute.xlu0 %2145
      %v2147 = vsel %vm280, %v2142, %v2144
      %v2148 = vsel %vm280, %v2144, %v2146
      %2149 = vrot.lane.b32.xlu0 %v2085, 91
      %v2150 = vpop.permute.xlu0 %2149
      %2151 = vrot.lane.b32.xlu0 %v2086, 91
      %v2152 = vpop.permute.xlu0 %2151
      %2153 = vrot.lane.b32.xlu0 %v2087, 91
      %v2154 = vpop.permute.xlu0 %2153
      %v2155 = vsel %vm289, %v2150, %v2152
      %v2156 = vsel %vm289, %v2152, %v2154
      %2157 = vrot.lane.b32.xlu0 %v2085, 90
      %v2158 = vpop.permute.xlu0 %2157
      %2159 = vrot.lane.b32.xlu0 %v2086, 90
      %v2160 = vpop.permute.xlu0 %2159
      %2161 = vrot.lane.b32.xlu0 %v2087, 90
      %v2162 = vpop.permute.xlu0 %2161
      %v2163 = vsel %vm298, %v2158, %v2160
      %v2164 = vsel %vm298, %v2160, %v2162
      %s2165 = scalar_lea.vmem %s1, 8
      %v2166 = vld [vmem:[%s2165] sm:$0xff]
      %s2167 = scalar_lea.vmem %s2, 8
      %v2168 = vld [vmem:[%s2167] sm:$0xff]
      %2170 = vset.pattern.permute.xlu0 0
      %2171 = vperm.xlu0 %2170, %v2168
      %v2172 = vpop.permute.xlu0 %2171
      %2174 = vrot.lane.b32.xlu0 %v2084, 19
      %v2175 = vpop.permute.xlu0 %2174
      %2176 = vrot.lane.b32.xlu0 %v2085, 19
      %v2177 = vpop.permute.xlu0 %2176
      %2178 = vrot.lane.b32.xlu0 %v2086, 19
      %v2179 = vpop.permute.xlu0 %2178
      %2180 = vrot.lane.b32.xlu0 %v2087, 19
      %v2181 = vpop.permute.xlu0 %2180
      %2182 = vrot.lane.b32.xlu0 %v2100, 19
      %v2183 = vpop.permute.xlu0 %2182
      %2184 = vrot.lane.b32.xlu0 %v2101, 19
      %v2185 = vpop.permute.xlu0 %2184
      %2186 = vrot.lane.b32.xlu0 %v2102, 19
      %v2187 = vpop.permute.xlu0 %2186
      %2188 = vrot.lane.b32.xlu0 %v2099, 19
      %v2189 = vpop.permute.xlu0 %2188
      %2190 = vrot.lane.b32.xlu0 %v2111, 19
      %v2191 = vpop.permute.xlu0 %2190
      %2192 = vrot.lane.b32.xlu0 %v2112, 19
      %v2193 = vpop.permute.xlu0 %2192
      %2194 = vrot.lane.b32.xlu0 %v2113, 19
      %v2195 = vpop.permute.xlu0 %2194
      %2196 = vrot.lane.b32.xlu0 %v2110, 19
      %v2197 = vpop.permute.xlu0 %2196
      %2198 = vrot.lane.b32.xlu0 %v2122, 19
      %v2199 = vpop.permute.xlu0 %2198
      %2200 = vrot.lane.b32.xlu0 %v2123, 19
      %v2201 = vpop.permute.xlu0 %2200
      %2202 = vrot.lane.b32.xlu0 %v2124, 19
      %v2203 = vpop.permute.xlu0 %2202
      %2204 = vrot.lane.b32.xlu0 %v2121, 19
      %v2205 = vpop.permute.xlu0 %2204
      %2206 = vrot.lane.b32.xlu0 %v2126, 19
      %v2207 = vpop.permute.xlu0 %2206
      %2208 = vrot.lane.b32.xlu0 %v2131, 19
      %v2209 = vpop.permute.xlu0 %2208
      %2210 = vrot.lane.b32.xlu0 %v2132, 19
      %v2211 = vpop.permute.xlu0 %2210
      %2212 = vrot.lane.b32.xlu0 %v2130, 19
      %v2213 = vpop.permute.xlu0 %2212
      %2214 = vrot.lane.b32.xlu0 %v2134, 19
      %v2215 = vpop.permute.xlu0 %2214
      %2216 = vrot.lane.b32.xlu0 %v2139, 19
      %v2217 = vpop.permute.xlu0 %2216
      %2218 = vrot.lane.b32.xlu0 %v2140, 19
      %v2219 = vpop.permute.xlu0 %2218
      %2220 = vrot.lane.b32.xlu0 %v2138, 19
      %v2221 = vpop.permute.xlu0 %2220
      %2222 = vrot.lane.b32.xlu0 %v2142, 19
      %v2223 = vpop.permute.xlu0 %2222
      %2224 = vrot.lane.b32.xlu0 %v2147, 19
      %v2225 = vpop.permute.xlu0 %2224
      %2226 = vrot.lane.b32.xlu0 %v2148, 19
      %v2227 = vpop.permute.xlu0 %2226
      %2228 = vrot.lane.b32.xlu0 %v2146, 19
      %v2229 = vpop.permute.xlu0 %2228
      %2230 = vrot.lane.b32.xlu0 %v2150, 19
      %v2231 = vpop.permute.xlu0 %2230
      %2232 = vrot.lane.b32.xlu0 %v2155, 19
      %v2233 = vpop.permute.xlu0 %2232
      %2234 = vrot.lane.b32.xlu0 %v2156, 19
      %v2235 = vpop.permute.xlu0 %2234
      %2236 = vrot.lane.b32.xlu0 %v2154, 19
      %v2237 = vpop.permute.xlu0 %2236
      %2238 = vrot.lane.b32.xlu0 %v2158, 19
      %v2239 = vpop.permute.xlu0 %2238
      %2240 = vrot.lane.b32.xlu0 %v2163, 19
      %v2241 = vpop.permute.xlu0 %2240
      %2242 = vrot.lane.b32.xlu0 %v2164, 19
      %v2243 = vpop.permute.xlu0 %2242
      %2244 = vrot.lane.b32.xlu0 %v2162, 19
      %v2245 = vpop.permute.xlu0 %2244
      %v2246 = vsel %vm380, %v2175, %v2177
      %v2247 = vsel %vm380, %v2177, %v2179
      %v2248 = vsel %vm380, %v2179, %v2181
      %v2249 = vsel %vm380, %v2183, %v2185
      %v2250 = vsel %vm380, %v2185, %v2187
      %v2251 = vsel %vm380, %v2187, %v2189
      %v2252 = vsel %vm380, %v2191, %v2193
      %v2253 = vsel %vm380, %v2193, %v2195
      %v2254 = vsel %vm380, %v2195, %v2197
      %v2255 = vsel %vm380, %v2199, %v2201
      %v2256 = vsel %vm380, %v2201, %v2203
      %v2257 = vsel %vm380, %v2203, %v2205
      %v2258 = vsel %vm380, %v2207, %v2209
      %v2259 = vsel %vm380, %v2209, %v2211
      %v2260 = vsel %vm380, %v2211, %v2213
      %v2261 = vsel %vm380, %v2215, %v2217
      %v2262 = vsel %vm380, %v2217, %v2219
      %v2263 = vsel %vm380, %v2219, %v2221
      %v2264 = vsel %vm380, %v2223, %v2225
      %v2265 = vsel %vm380, %v2225, %v2227
      %v2266 = vsel %vm380, %v2227, %v2229
      %v2267 = vsel %vm380, %v2231, %v2233
      %v2268 = vsel %vm380, %v2233, %v2235
      %v2269 = vsel %vm380, %v2235, %v2237
      %v2270 = vsel %vm380, %v2239, %v2241
      %v2271 = vsel %vm380, %v2241, %v2243
      %v2272 = vsel %vm380, %v2243, %v2245
      %v2301 = vsel %vm435, %v2166, 0
      %2303 = vmatprep.subr.mxu0 %v2247
      %2304 = vmatpush1.msra.mxu0 %v2246
      %2305 = vmatprep.subr.mxu0 %v2250
      %2306 = vmatpush1.msra.mxu0 %v2249
      %2307 = vmatprep.subr.mxu0 %v2253
      %2308 = vmatpush1.msra.mxu0 %v2252
      %2309 = vmatprep.subr.mxu0 %v2256
      %2310 = vmatpush1.msra.mxu0 %v2255
      %2311 = vmatprep.subr.mxu0 %v2259
      %2312 = vmatpush1.msra.mxu0 %v2258
      %2313 = vmatprep.subr.mxu0 %v2262
      %2314 = vmatpush1.msra.mxu0 %v2261
      %2315 = vmatprep.subr.mxu0 %v2265
      %2316 = vmatpush1.msra.mxu0 %v2264
      %2317 = vmatprep.subr.mxu0 %v2268
      %2318 = vmatpush1.msra.mxu0 %v2267
      %2319 = vmatprep.subr.mxu0 %v2271
      %2320 = vmatpush1.msra.mxu0 %v2270
      %2321 = vmatprep.subr.mxu0 0.0
      %2322 = vmatpush1.msra.mxu0 0.0
      %2323 = vmatprep.subr.mxu0 0.0
      %2324 = vmatpush1.msra.mxu0 0.0
      %2325 = vmatprep.subr.mxu0 0.0
      %2326 = vmatpush1.msra.mxu0 0.0
      %2327 = vmatprep.subr.mxu0 0.0
      %2328 = vmatpush1.msra.mxu0 0.0
      %2329 = vmatprep.subr.mxu0 0.0
      %2330 = vmatpush1.msra.mxu0 0.0
      %2331 = vmatprep.subr.mxu0 0.0
      %2332 = vmatpush1.msra.mxu0 0.0
      %2333 = vmatprep.subr.mxu0 0.0
      %2334 = vmatpush1.msra.mxu0 0.0
      %2335 = vmatprep.subr.mxu0 0.0
      %2336 = vmatpush1.msra.mxu0 0.0
      %2337 = vmatprep.subr.mxu0 0.0
      %2338 = vmatpush1.msra.mxu0 0.0
      %2339 = vmatprep.subr.mxu0 0.0
      %2340 = vmatpush1.msra.mxu0 0.0
      %2341 = vmatprep.subr.mxu0 0.0
      %2342 = vmatpush1.msra.mxu0 0.0
      %2343 = vmatprep.subr.mxu0 0.0
      %2344 = vmatpush1.msra.mxu0 0.0
      %2345 = vmatprep.subr.mxu0 0.0
      %2346 = vmatpush1.msra.mxu0 0.0
      %2347 = vmatprep.subr.mxu0 0.0
      %2348 = vmatpush1.msra.mxu0 0.0
      %2349 = vmatprep.subr.mxu0 0.0
      %2350 = vmatpush1.msra.mxu0 0.0
      %2351 = vmatprep.subr.mxu0 0.0
      %2352 = vmatpush1.msra.mxu0 0.0
      %2353 = vmatprep.subr.mxu0 0.0
      %2354 = vmatpush1.msra.mxu0 0.0
      %2355 = vmatprep.subr.mxu0 0.0
      %2356 = vmatpush1.msra.mxu0 0.0
      %2357 = vmatprep.subr.mxu0 0.0
      %2358 = vmatpush1.msra.mxu0 0.0
      %2359 = vmatprep.subr.mxu0 0.0
      %2360 = vmatpush1.msra.mxu0 0.0
      %2361 = vmatprep.subr.mxu0 0.0
      %2362 = vmatpush1.msra.mxu0 0.0
      %2363 = vmatprep.subr.mxu0 0.0
      %2364 = vmatpush1.msra.mxu0 0.0
      %2365 = vmatprep.subr.mxu0 0.0
      %2366 = vmatpush1.msra.mxu0 0.0
      %2367 = vmatprep.mubr.f32.mxu0 0.0
      %2368 = vmatmul.mubr.f32.gmra.mrb[0].mxu0 %v2301
      %v2369 = vpop.f32.mrb[0].mxu0
      %v2370 = vadd.f32 %v2172, %v2369
      %v2371 = vpop.f32.mrb[0].mxu0
      %v2372 = vadd.f32 %v2172, %v2371
      %2373 = vdwg.mxu0
      %2374 = vmatprep.subr.mxu0 0.0
      %2375 = vmatpush1.msra.mxu0 %v2248
      %2376 = vmatprep.subr.mxu0 0.0
      %2377 = vmatpush1.msra.mxu0 %v2251
      %2378 = vmatprep.subr.mxu0 0.0
      %2379 = vmatpush1.msra.mxu0 %v2254
      %2380 = vmatprep.subr.mxu0 0.0
      %2381 = vmatpush1.msra.mxu0 %v2257
      %2382 = vmatprep.subr.mxu0 0.0
      %2383 = vmatpush1.msra.mxu0 %v2260
      %2384 = vmatprep.subr.mxu0 0.0
      %2385 = vmatpush1.msra.mxu0 %v2263
      %2386 = vmatprep.subr.mxu0 0.0
      %2387 = vmatpush1.msra.mxu0 %v2266
      %2388 = vmatprep.subr.mxu0 0.0
      %2389 = vmatpush1.msra.mxu0 %v2269
      %2390 = vmatprep.subr.mxu0 0.0
      %2391 = vmatpush1.msra.mxu0 %v2272
      %2392 = vmatprep.subr.mxu0 0.0
      %2393 = vmatpush1.msra.mxu0 0.0
      %2394 = vmatprep.subr.mxu0 0.0
      %2395 = vmatpush1.msra.mxu0 0.0
      %2396 = vmatprep.subr.mxu0 0.0
      %2397 = vmatpush1.msra.mxu0 0.0
      %2398 = vmatprep.subr.mxu0 0.0
      %2399 = vmatpush1.msra.mxu0 0.0
      %2400 = vmatprep.subr.mxu0 0.0
      %2401 = vmatpush1.msra.mxu0 0.0
      %2402 = vmatprep.subr.mxu0 0.0
      %2403 = vmatpush1.msra.mxu0 0.0
      %2404 = vmatprep.subr.mxu0 0.0
      %2405 = vmatpush1.msra.mxu0 0.0
      %2406 = vmatprep.subr.mxu0 0.0
      %2407 = vmatpush1.msra.mxu0 0.0
      %2408 = vmatprep.subr.mxu0 0.0
      %2409 = vmatpush1.msra.mxu0 0.0
      %2410 = vmatprep.subr.mxu0 0.0
      %2411 = vmatpush1.msra.mxu0 0.0
      %2412 = vmatprep.subr.mxu0 0.0
      %2413 = vmatpush1.msra.mxu0 0.0
      %2414 = vmatprep.subr.mxu0 0.0
      %2415 = vmatpush1.msra.mxu0 0.0
      %2416 = vmatprep.subr.mxu0 0.0
      %2417 = vmatpush1.msra.mxu0 0.0
      %2418 = vmatprep.subr.mxu0 0.0
      %2419 = vmatpush1.msra.mxu0 0.0
      %2420 = vmatprep.subr.mxu0 0.0
      %2421 = vmatpush1.msra.mxu0 0.0
      %2422 = vmatprep.subr.mxu0 0.0
      %2423 = vmatpush1.msra.mxu0 0.0
      %2424 = vmatprep.subr.mxu0 0.0
      %2425 = vmatpush1.msra.mxu0 0.0
      %2426 = vmatprep.subr.mxu0 0.0
      %2427 = vmatpush1.msra.mxu0 0.0
      %2428 = vmatprep.subr.mxu0 0.0
      %2429 = vmatpush1.msra.mxu0 0.0
      %2430 = vmatprep.subr.mxu0 0.0
      %2431 = vmatpush1.msra.mxu0 0.0
      %2432 = vmatprep.subr.mxu0 0.0
      %2433 = vmatpush1.msra.mxu0 0.0
      %2434 = vmatprep.subr.mxu0 0.0
      %2435 = vmatpush1.msra.mxu0 0.0
      %2436 = vmatprep.subr.mxu0 0.0
      %2437 = vmatpush1.msra.mxu0 0.0
      %2438 = vmatprep.mubr.f32.mxu0 0.0
      %2439 = vmatmul.mubr.f32.gmra.mrb[0].mxu0 %v2301
      %v2440 = vpop.f32.mrb[0].mxu0
      %v2441 = vadd.f32 %v2172, %v2440
      %v2442 = vpop.f32.mrb[0].mxu0
      %2443 = vdwg.mxu0
      %v2444 = vmax.f32 %v2370, 0.0
      %v2445 = vmax.f32 %v2372, 0.0
      %v2446 = vmax.f32 %v2441, 0.0
      %v2447 = vsel %vm596, %v2444, 0.0
      %v2448 = vsel %vm597, %v2445, 0.0
      %v2449 = vsel %vm598, %v2446, 0.0
      %2450 = vst [vmem:[#allocation2 + $0x8] sm:$0xff] %v2447
      %2451 = vst [vmem:[#allocation2 + $0x10] sm:$0xff] %v2448
      %2452 = vst.msk [vmem:[#allocation2 + $0x18] sm:$0xff] %vm604, %v2449
      %v2453 = vld [vmem:[#allocation2] sm:$0xff]
      %v2454 = vld [vmem:[#allocation2 + $0x8] sm:$0xff]
      %v2455 = vld [vmem:[#allocation2 + $0x10] sm:$0xff]
      %v2456 = vld [vmem:[#allocation2 + $0x18] sm:$0xff]
      %2461 = vrot.lane.b32.xlu0 %v2453, 127
      %v2462 = vpop.permute.xlu0 %2461
      %2463 = vrot.lane.b32.xlu0 %v2454, 127
      %v2464 = vpop.permute.xlu0 %2463
      %2465 = vrot.lane.b32.xlu0 %v2455, 127
      %v2466 = vpop.permute.xlu0 %2465
      %2467 = vrot.lane.b32.xlu0 %v2456, 127
      %v2468 = vpop.permute.xlu0 %2467
      %v2469 = vsel %vm228, %v2462, %v2464
      %v2470 = vsel %vm228, %v2464, %v2466
      %v2471 = vsel %vm228, %v2466, %v2468
      %2472 = vrot.lane.b32.xlu0 %v2453, 126
      %v2473 = vpop.permute.xlu0 %2472
      %2474 = vrot.lane.b32.xlu0 %v2454, 126
      %v2475 = vpop.permute.xlu0 %2474
      %2476 = vrot.lane.b32.xlu0 %v2455, 126
      %v2477 = vpop.permute.xlu0 %2476
      %2478 = vrot.lane.b32.xlu0 %v2456, 126
      %v2479 = vpop.permute.xlu0 %2478
      %v2480 = vsel %vm240, %v2473, %v2475
      %v2481 = vsel %vm240, %v2475, %v2477
      %v2482 = vsel %vm240, %v2477, %v2479
      %2483 = vrot.lane.b32.xlu0 %v2453, 110
      %v2484 = vpop.permute.xlu0 %2483
      %2485 = vrot.lane.b32.xlu0 %v2454, 110
      %v2486 = vpop.permute.xlu0 %2485
      %2487 = vrot.lane.b32.xlu0 %v2455, 110
      %v2488 = vpop.permute.xlu0 %2487
      %2489 = vrot.lane.b32.xlu0 %v2456, 110
      %v2490 = vpop.permute.xlu0 %2489
      %v2491 = vsel %vm252, %v2484, %v2486
      %v2492 = vsel %vm252, %v2486, %v2488
      %v2493 = vsel %vm252, %v2488, %v2490
      %2494 = vrot.lane.b32.xlu0 %v2454, 109
      %v2495 = vpop.permute.xlu0 %2494
      %2496 = vrot.lane.b32.xlu0 %v2455, 109
      %v2497 = vpop.permute.xlu0 %2496
      %2498 = vrot.lane.b32.xlu0 %v2456, 109
      %v2499 = vpop.permute.xlu0 %2498
      %v2500 = vsel %vm262, %v2495, %v2497
      %v2501 = vsel %vm262, %v2497, %v2499
      %2502 = vrot.lane.b32.xlu0 %v2454, 108
      %v2503 = vpop.permute.xlu0 %2502
      %2504 = vrot.lane.b32.xlu0 %v2455, 108
      %v2505 = vpop.permute.xlu0 %2504
      %2506 = vrot.lane.b32.xlu0 %v2456, 108
      %v2507 = vpop.permute.xlu0 %2506
      %v2508 = vsel %vm271, %v2503, %v2505
      %v2509 = vsel %vm271, %v2505, %v2507
      %2510 = vrot.lane.b32.xlu0 %v2454, 92
      %v2511 = vpop.permute.xlu0 %2510
      %2512 = vrot.lane.b32.xlu0 %v2455, 92
      %v2513 = vpop.permute.xlu0 %2512
      %2514 = vrot.lane.b32.xlu0 %v2456, 92
      %v2515 = vpop.permute.xlu0 %2514
      %v2516 = vsel %vm280, %v2511, %v2513
      %v2517 = vsel %vm280, %v2513, %v2515
      %2518 = vrot.lane.b32.xlu0 %v2454, 91
      %v2519 = vpop.permute.xlu0 %2518
      %2520 = vrot.lane.b32.xlu0 %v2455, 91
      %v2521 = vpop.permute.xlu0 %2520
      %2522 = vrot.lane.b32.xlu0 %v2456, 91
      %v2523 = vpop.permute.xlu0 %2522
      %v2524 = vsel %vm289, %v2519, %v2521
      %v2525 = vsel %vm289, %v2521, %v2523
      %2526 = vrot.lane.b32.xlu0 %v2454, 90
      %v2527 = vpop.permute.xlu0 %2526
      %2528 = vrot.lane.b32.xlu0 %v2455, 90
      %v2529 = vpop.permute.xlu0 %2528
      %2530 = vrot.lane.b32.xlu0 %v2456, 90
      %v2531 = vpop.permute.xlu0 %2530
      %v2532 = vsel %vm298, %v2527, %v2529
      %v2533 = vsel %vm298, %v2529, %v2531
      %v2534 = vld [vmem:[%s687] sm:$0xff]
      %v2535 = vld [vmem:[%s689] sm:$0xff]
      %2537 = vset.pattern.permute.xlu0 0
      %2538 = vperm.xlu0 %2537, %v2535
      %v2539 = vpop.permute.xlu0 %2538
      %2541 = vrot.lane.b32.xlu0 %v2453, 19
      %v2542 = vpop.permute.xlu0 %2541
      %2543 = vrot.lane.b32.xlu0 %v2454, 19
      %v2544 = vpop.permute.xlu0 %2543
      %2545 = vrot.lane.b32.xlu0 %v2455, 19
      %v2546 = vpop.permute.xlu0 %2545
      %2547 = vrot.lane.b32.xlu0 %v2456, 19
      %v2548 = vpop.permute.xlu0 %2547
      %2549 = vrot.lane.b32.xlu0 %v2469, 19
      %v2550 = vpop.permute.xlu0 %2549
      %2551 = vrot.lane.b32.xlu0 %v2470, 19
      %v2552 = vpop.permute.xlu0 %2551
      %2553 = vrot.lane.b32.xlu0 %v2471, 19
      %v2554 = vpop.permute.xlu0 %2553
      %2555 = vrot.lane.b32.xlu0 %v2468, 19
      %v2556 = vpop.permute.xlu0 %2555
      %2557 = vrot.lane.b32.xlu0 %v2480, 19
      %v2558 = vpop.permute.xlu0 %2557
      %2559 = vrot.lane.b32.xlu0 %v2481, 19
      %v2560 = vpop.permute.xlu0 %2559
      %2561 = vrot.lane.b32.xlu0 %v2482, 19
      %v2562 = vpop.permute.xlu0 %2561
      %2563 = vrot.lane.b32.xlu0 %v2479, 19
      %v2564 = vpop.permute.xlu0 %2563
      %2565 = vrot.lane.b32.xlu0 %v2491, 19
      %v2566 = vpop.permute.xlu0 %2565
      %2567 = vrot.lane.b32.xlu0 %v2492, 19
      %v2568 = vpop.permute.xlu0 %2567
      %2569 = vrot.lane.b32.xlu0 %v2493, 19
      %v2570 = vpop.permute.xlu0 %2569
      %2571 = vrot.lane.b32.xlu0 %v2490, 19
      %v2572 = vpop.permute.xlu0 %2571
      %2573 = vrot.lane.b32.xlu0 %v2495, 19
      %v2574 = vpop.permute.xlu0 %2573
      %2575 = vrot.lane.b32.xlu0 %v2500, 19
      %v2576 = vpop.permute.xlu0 %2575
      %2577 = vrot.lane.b32.xlu0 %v2501, 19
      %v2578 = vpop.permute.xlu0 %2577
      %2579 = vrot.lane.b32.xlu0 %v2499, 19
      %v2580 = vpop.permute.xlu0 %2579
      %2581 = vrot.lane.b32.xlu0 %v2503, 19
      %v2582 = vpop.permute.xlu0 %2581
      %2583 = vrot.lane.b32.xlu0 %v2508, 19
      %v2584 = vpop.permute.xlu0 %2583
      %2585 = vrot.lane.b32.xlu0 %v2509, 19
      %v2586 = vpop.permute.xlu0 %2585
      %2587 = vrot.lane.b32.xlu0 %v2507, 19
      %v2588 = vpop.permute.xlu0 %2587
      %2589 = vrot.lane.b32.xlu0 %v2511, 19
      %v2590 = vpop.permute.xlu0 %2589
      %2591 = vrot.lane.b32.xlu0 %v2516, 19
      %v2592 = vpop.permute.xlu0 %2591
      %2593 = vrot.lane.b32.xlu0 %v2517, 19
      %v2594 = vpop.permute.xlu0 %2593
      %2595 = vrot.lane.b32.xlu0 %v2515, 19
      %v2596 = vpop.permute.xlu0 %2595
      %2597 = vrot.lane.b32.xlu0 %v2519, 19
      %v2598 = vpop.permute.xlu0 %2597
      %2599 = vrot.lane.b32.xlu0 %v2524, 19
      %v2600 = vpop.permute.xlu0 %2599
      %2601 = vrot.lane.b32.xlu0 %v2525, 19
      %v2602 = vpop.permute.xlu0 %2601
      %2603 = vrot.lane.b32.xlu0 %v2523, 19
      %v2604 = vpop.permute.xlu0 %2603
      %2605 = vrot.lane.b32.xlu0 %v2527, 19
      %v2606 = vpop.permute.xlu0 %2605
      %2607 = vrot.lane.b32.xlu0 %v2532, 19
      %v2608 = vpop.permute.xlu0 %2607
      %2609 = vrot.lane.b32.xlu0 %v2533, 19
      %v2610 = vpop.permute.xlu0 %2609
      %2611 = vrot.lane.b32.xlu0 %v2531, 19
      %v2612 = vpop.permute.xlu0 %2611
      %v2613 = vsel %vm380, %v2542, %v2544
      %v2614 = vsel %vm380, %v2544, %v2546
      %v2615 = vsel %vm380, %v2546, %v2548
      %v2616 = vsel %vm380, %v2550, %v2552
      %v2617 = vsel %vm380, %v2552, %v2554
      %v2618 = vsel %vm380, %v2554, %v2556
      %v2619 = vsel %vm380, %v2558, %v2560
      %v2620 = vsel %vm380, %v2560, %v2562
      %v2621 = vsel %vm380, %v2562, %v2564
      %v2622 = vsel %vm380, %v2566, %v2568
      %v2623 = vsel %vm380, %v2568, %v2570
      %v2624 = vsel %vm380, %v2570, %v2572
      %v2625 = vsel %vm380, %v2574, %v2576
      %v2626 = vsel %vm380, %v2576, %v2578
      %v2627 = vsel %vm380, %v2578, %v2580
      %v2628 = vsel %vm380, %v2582, %v2584
      %v2629 = vsel %vm380, %v2584, %v2586
      %v2630 = vsel %vm380, %v2586, %v2588
      %v2631 = vsel %vm380, %v2590, %v2592
      %v2632 = vsel %vm380, %v2592, %v2594
      %v2633 = vsel %vm380, %v2594, %v2596
      %v2634 = vsel %vm380, %v2598, %v2600
      %v2635 = vsel %vm380, %v2600, %v2602
      %v2636 = vsel %vm380, %v2602, %v2604
      %v2637 = vsel %vm380, %v2606, %v2608
      %v2638 = vsel %vm380, %v2608, %v2610
      %v2639 = vsel %vm380, %v2610, %v2612
      %v2668 = vsel %vm435, %v2534, 0
      %2670 = vmatprep.subr.mxu0 %v2614
      %2671 = vmatpush1.msra.mxu0 %v2613
      %2672 = vmatprep.subr.mxu0 %v2617
      %2673 = vmatpush1.msra.mxu0 %v2616
      %2674 = vmatprep.subr.mxu0 %v2620
      %2675 = vmatpush1.msra.mxu0 %v2619
      %2676 = vmatprep.subr.mxu0 %v2623
      %2677 = vmatpush1.msra.mxu0 %v2622
      %2678 = vmatprep.subr.mxu0 %v2626
      %2679 = vmatpush1.msra.mxu0 %v2625
      %2680 = vmatprep.subr.mxu0 %v2629
      %2681 = vmatpush1.msra.mxu0 %v2628
      %2682 = vmatprep.subr.mxu0 %v2632
      %2683 = vmatpush1.msra.mxu0 %v2631
      %2684 = vmatprep.subr.mxu0 %v2635
      %2685 = vmatpush1.msra.mxu0 %v2634
      %2686 = vmatprep.subr.mxu0 %v2638
      %2687 = vmatpush1.msra.mxu0 %v2637
      %2688 = vmatprep.subr.mxu0 0.0
      %2689 = vmatpush1.msra.mxu0 0.0
      %2690 = vmatprep.subr.mxu0 0.0
      %2691 = vmatpush1.msra.mxu0 0.0
      %2692 = vmatprep.subr.mxu0 0.0
      %2693 = vmatpush1.msra.mxu0 0.0
      %2694 = vmatprep.subr.mxu0 0.0
      %2695 = vmatpush1.msra.mxu0 0.0
      %2696 = vmatprep.subr.mxu0 0.0
      %2697 = vmatpush1.msra.mxu0 0.0
      %2698 = vmatprep.subr.mxu0 0.0
      %2699 = vmatpush1.msra.mxu0 0.0
      %2700 = vmatprep.subr.mxu0 0.0
      %2701 = vmatpush1.msra.mxu0 0.0
      %2702 = vmatprep.subr.mxu0 0.0
      %2703 = vmatpush1.msra.mxu0 0.0
      %2704 = vmatprep.subr.mxu0 0.0
      %2705 = vmatpush1.msra.mxu0 0.0
      %2706 = vmatprep.subr.mxu0 0.0
      %2707 = vmatpush1.msra.mxu0 0.0
      %2708 = vmatprep.subr.mxu0 0.0
      %2709 = vmatpush1.msra.mxu0 0.0
      %2710 = vmatprep.subr.mxu0 0.0
      %2711 = vmatpush1.msra.mxu0 0.0
      %2712 = vmatprep.subr.mxu0 0.0
      %2713 = vmatpush1.msra.mxu0 0.0
      %2714 = vmatprep.subr.mxu0 0.0
      %2715 = vmatpush1.msra.mxu0 0.0
      %2716 = vmatprep.subr.mxu0 0.0
      %2717 = vmatpush1.msra.mxu0 0.0
      %2718 = vmatprep.subr.mxu0 0.0
      %2719 = vmatpush1.msra.mxu0 0.0
      %2720 = vmatprep.subr.mxu0 0.0
      %2721 = vmatpush1.msra.mxu0 0.0
      %2722 = vmatprep.subr.mxu0 0.0
      %2723 = vmatpush1.msra.mxu0 0.0
      %2724 = vmatprep.subr.mxu0 0.0
      %2725 = vmatpush1.msra.mxu0 0.0
      %2726 = vmatprep.subr.mxu0 0.0
      %2727 = vmatpush1.msra.mxu0 0.0
      %2728 = vmatprep.subr.mxu0 0.0
      %2729 = vmatpush1.msra.mxu0 0.0
      %2730 = vmatprep.subr.mxu0 0.0
      %2731 = vmatpush1.msra.mxu0 0.0
      %2732 = vmatprep.subr.mxu0 0.0
      %2733 = vmatpush1.msra.mxu0 0.0
      %2734 = vmatprep.mubr.f32.mxu0 0.0
      %2735 = vmatmul.mubr.f32.gmra.mrb[0].mxu0 %v2668
      %v2736 = vpop.f32.mrb[0].mxu0
      %v2737 = vadd.f32 %v2539, %v2736
      %v2738 = vpop.f32.mrb[0].mxu0
      %v2739 = vadd.f32 %v2539, %v2738
      %2740 = vdwg.mxu0
      %2741 = vmatprep.subr.mxu0 0.0
      %2742 = vmatpush1.msra.mxu0 %v2615
      %2743 = vmatprep.subr.mxu0 0.0
      %2744 = vmatpush1.msra.mxu0 %v2618
      %2745 = vmatprep.subr.mxu0 0.0
      %2746 = vmatpush1.msra.mxu0 %v2621
      %2747 = vmatprep.subr.mxu0 0.0
      %2748 = vmatpush1.msra.mxu0 %v2624
      %2749 = vmatprep.subr.mxu0 0.0
      %2750 = vmatpush1.msra.mxu0 %v2627
      %2751 = vmatprep.subr.mxu0 0.0
      %2752 = vmatpush1.msra.mxu0 %v2630
      %2753 = vmatprep.subr.mxu0 0.0
      %2754 = vmatpush1.msra.mxu0 %v2633
      %2755 = vmatprep.subr.mxu0 0.0
      %2756 = vmatpush1.msra.mxu0 %v2636
      %2757 = vmatprep.subr.mxu0 0.0
      %2758 = vmatpush1.msra.mxu0 %v2639
      %2759 = vmatprep.subr.mxu0 0.0
      %2760 = vmatpush1.msra.mxu0 0.0
      %2761 = vmatprep.subr.mxu0 0.0
      %2762 = vmatpush1.msra.mxu0 0.0
      %2763 = vmatprep.subr.mxu0 0.0
      %2764 = vmatpush1.msra.mxu0 0.0
      %2765 = vmatprep.subr.mxu0 0.0
      %2766 = vmatpush1.msra.mxu0 0.0
      %2767 = vmatprep.subr.mxu0 0.0
      %2768 = vmatpush1.msra.mxu0 0.0
      %2769 = vmatprep.subr.mxu0 0.0
      %2770 = vmatpush1.msra.mxu0 0.0
      %2771 = vmatprep.subr.mxu0 0.0
      %2772 = vmatpush1.msra.mxu0 0.0
      %2773 = vmatprep.subr.mxu0 0.0
      %2774 = vmatpush1.msra.mxu0 0.0
      %2775 = vmatprep.subr.mxu0 0.0
      %2776 = vmatpush1.msra.mxu0 0.0
      %2777 = vmatprep.subr.mxu0 0.0
      %2778 = vmatpush1.msra.mxu0 0.0
      %2779 = vmatprep.subr.mxu0 0.0
      %2780 = vmatpush1.msra.mxu0 0.0
      %2781 = vmatprep.subr.mxu0 0.0
      %2782 = vmatpush1.msra.mxu0 0.0
      %2783 = vmatprep.subr.mxu0 0.0
      %2784 = vmatpush1.msra.mxu0 0.0
      %2785 = vmatprep.subr.mxu0 0.0
      %2786 = vmatpush1.msra.mxu0 0.0
      %2787 = vmatprep.subr.mxu0 0.0
      %2788 = vmatpush1.msra.mxu0 0.0
      %2789 = vmatprep.subr.mxu0 0.0
      %2790 = vmatpush1.msra.mxu0 0.0
      %2791 = vmatprep.subr.mxu0 0.0
      %2792 = vmatpush1.msra.mxu0 0.0
      %2793 = vmatprep.subr.mxu0 0.0
      %2794 = vmatpush1.msra.mxu0 0.0
      %2795 = vmatprep.subr.mxu0 0.0
      %2796 = vmatpush1.msra.mxu0 0.0
      %2797 = vmatprep.subr.mxu0 0.0
      %2798 = vmatpush1.msra.mxu0 0.0
      %2799 = vmatprep.subr.mxu0 0.0
      %2800 = vmatpush1.msra.mxu0 0.0
      %2801 = vmatprep.subr.mxu0 0.0
      %2802 = vmatpush1.msra.mxu0 0.0
      %2803 = vmatprep.subr.mxu0 0.0
      %2804 = vmatpush1.msra.mxu0 0.0
      %2805 = vmatprep.mubr.f32.mxu0 0.0
      %2806 = vmatmul.mubr.f32.gmra.mrb[0].mxu0 %v2668
      %v2807 = vpop.f32.mrb[0].mxu0
      %v2808 = vadd.f32 %v2539, %v2807
      %v2809 = vpop.f32.mrb[0].mxu0
      %2810 = vdwg.mxu0
      %v2811 = vmax.f32 %v2737, 0.0
      %v2812 = vmax.f32 %v2739, 0.0
      %v2813 = vmax.f32 %v2808, 0.0
      %v2814 = vsel %vm596, %v2811, 0.0
      %v2815 = vsel %vm597, %v2812, 0.0
      %v2816 = vsel %vm598, %v2813, 0.0
      %2817 = vst [vmem:[#allocation3 + $0x8] sm:$0xff] %v2814
      %2818 = vst [vmem:[#allocation3 + $0x10] sm:$0xff] %v2815
      %2819 = vst.msk [vmem:[#allocation3 + $0x18] sm:$0xff] %vm604, %v2816
      %v2820 = vld [vmem:[#allocation3] sm:$0xff]
      %v2821 = vld [vmem:[#allocation3 + $0x8] sm:$0xff]
      %v2822 = vld [vmem:[#allocation3 + $0x10] sm:$0xff]
      %v2823 = vld [vmem:[#allocation3 + $0x18] sm:$0xff]
      %2828 = vrot.lane.b32.xlu0 %v2820, 127
      %v2829 = vpop.permute.xlu0 %2828
      %2830 = vrot.lane.b32.xlu0 %v2821, 127
      %v2831 = vpop.permute.xlu0 %2830
      %2832 = vrot.lane.b32.xlu0 %v2822, 127
      %v2833 = vpop.permute.xlu0 %2832
      %2834 = vrot.lane.b32.xlu0 %v2823, 127
      %v2835 = vpop.permute.xlu0 %2834
      %v2836 = vsel %vm228, %v2829, %v2831
      %v2837 = vsel %vm228, %v2831, %v2833
      %v2838 = vsel %vm228, %v2833, %v2835
      %2839 = vrot.lane.b32.xlu0 %v2820, 126
      %v2840 = vpop.permute.xlu0 %2839
      %2841 = vrot.lane.b32.xlu0 %v2821, 126
      %v2842 = vpop.permute.xlu0 %2841
      %2843 = vrot.lane.b32.xlu0 %v2822, 126
      %v2844 = vpop.permute.xlu0 %2843
      %2845 = vrot.lane.b32.xlu0 %v2823, 126
      %v2846 = vpop.permute.xlu0 %2845
      %v2847 = vsel %vm240, %v2840, %v2842
      %v2848 = vsel %vm240, %v2842, %v2844
      %v2849 = vsel %vm240, %v2844, %v2846
      %2850 = vrot.lane.b32.xlu0 %v2820, 110
      %v2851 = vpop.permute.xlu0 %2850
      %2852 = vrot.lane.b32.xlu0 %v2821, 110
      %v2853 = vpop.permute.xlu0 %2852
      %2854 = vrot.lane.b32.xlu0 %v2822, 110
      %v2855 = vpop.permute.xlu0 %2854
      %2856 = vrot.lane.b32.xlu0 %v2823, 110
      %v2857 = vpop.permute.xlu0 %2856
      %v2858 = vsel %vm252, %v2851, %v2853
      %v2859 = vsel %vm252, %v2853, %v2855
      %v2860 = vsel %vm252, %v2855, %v2857
      %2861 = vrot.lane.b32.xlu0 %v2821, 109
      %v2862 = vpop.permute.xlu0 %2861
      %2863 = vrot.lane.b32.xlu0 %v2822, 109
      %v2864 = vpop.permute.xlu0 %2863
      %2865 = vrot.lane.b32.xlu0 %v2823, 109
      %v2866 = vpop.permute.xlu0 %2865
      %v2867 = vsel %vm262, %v2862, %v2864
      %v2868 = vsel %vm262, %v2864, %v2866
      %2869 = vrot.lane.b32.xlu0 %v2821, 108
      %v2870 = vpop.permute.xlu0 %2869
      %2871 = vrot.lane.b32.xlu0 %v2822, 108
      %v2872 = vpop.permute.xlu0 %2871
      %2873 = vrot.lane.b32.xlu0 %v2823, 108
      %v2874 = vpop.permute.xlu0 %2873
      %v2875 = vsel %vm271, %v2870, %v2872
      %v2876 = vsel %vm271, %v2872, %v2874
      %2877 = vrot.lane.b32.xlu0 %v2821, 92
      %v2878 = vpop.permute.xlu0 %2877
      %2879 = vrot.lane.b32.xlu0 %v2822, 92
      %v2880 = vpop.permute.xlu0 %2879
      %2881 = vrot.lane.b32.xlu0 %v2823, 92
      %v2882 = vpop.permute.xlu0 %2881
      %v2883 = vsel %vm280, %v2878, %v2880
      %v2884 = vsel %vm280, %v2880, %v2882
      %2885 = vrot.lane.b32.xlu0 %v2821, 91
      %v2886 = vpop.permute.xlu0 %2885
      %2887 = vrot.lane.b32.xlu0 %v2822, 91
      %v2888 = vpop.permute.xlu0 %2887
      %2889 = vrot.lane.b32.xlu0 %v2823, 91
      %v2890 = vpop.permute.xlu0 %2889
      %v2891 = vsel %vm289, %v2886, %v2888
      %v2892 = vsel %vm289, %v2888, %v2890
      %2893 = vrot.lane.b32.xlu0 %v2821, 90
      %v2894 = vpop.permute.xlu0 %2893
      %2895 = vrot.lane.b32.xlu0 %v2822, 90
      %v2896 = vpop.permute.xlu0 %2895
      %2897 = vrot.lane.b32.xlu0 %v2823, 90
      %v2898 = vpop.permute.xlu0 %2897
      %v2899 = vsel %vm298, %v2894, %v2896
      %v2900 = vsel %vm298, %v2896, %v2898
      %v2901 = vld [vmem:[%s1056] sm:$0xff]
      %v2902 = vld [vmem:[%s1058] sm:$0xff]
      %2904 = vset.pattern.permute.xlu0 0
      %2905 = vperm.xlu0 %2904, %v2902
      %v2906 = vpop.permute.xlu0 %2905
      %2908 = vrot.lane.b32.xlu0 %v2820, 19
      %v2909 = vpop.permute.xlu0 %2908
      %2910 = vrot.lane.b32.xlu0 %v2821, 19
      %v2911 = vpop.permute.xlu0 %2910
      %2912 = vrot.lane.b32.xlu0 %v2822, 19
      %v2913 = vpop.permute.xlu0 %2912
      %2914 = vrot.lane.b32.xlu0 %v2823, 19
      %v2915 = vpop.permute.xlu0 %2914
      %2916 = vrot.lane.b32.xlu0 %v2836, 19
      %v2917 = vpop.permute.xlu0 %2916
      %2918 = vrot.lane.b32.xlu0 %v2837, 19
      %v2919 = vpop.permute.xlu0 %2918
      %2920 = vrot.lane.b32.xlu0 %v2838, 19
      %v2921 = vpop.permute.xlu0 %2920
      %2922 = vrot.lane.b32.xlu0 %v2835, 19
      %v2923 = vpop.permute.xlu0 %2922
      %2924 = vrot.lane.b32.xlu0 %v2847, 19
      %v2925 = vpop.permute.xlu0 %2924
      %2926 = vrot.lane.b32.xlu0 %v2848, 19
      %v2927 = vpop.permute.xlu0 %2926
      %2928 = vrot.lane.b32.xlu0 %v2849, 19
      %v2929 = vpop.permute.xlu0 %2928
      %2930 = vrot.lane.b32.xlu0 %v2846, 19
      %v2931 = vpop.permute.xlu0 %2930
      %2932 = vrot.lane.b32.xlu0 %v2858, 19
      %v2933 = vpop.permute.xlu0 %2932
      %2934 = vrot.lane.b32.xlu0 %v2859, 19
      %v2935 = vpop.permute.xlu0 %2934
      %2936 = vrot.lane.b32.xlu0 %v2860, 19
      %v2937 = vpop.permute.xlu0 %2936
      %2938 = vrot.lane.b32.xlu0 %v2857, 19
      %v2939 = vpop.permute.xlu0 %2938
      %2940 = vrot.lane.b32.xlu0 %v2862, 19
      %v2941 = vpop.permute.xlu0 %2940
      %2942 = vrot.lane.b32.xlu0 %v2867, 19
      %v2943 = vpop.permute.xlu0 %2942
      %2944 = vrot.lane.b32.xlu0 %v2868, 19
      %v2945 = vpop.permute.xlu0 %2944
      %2946 = vrot.lane.b32.xlu0 %v2866, 19
      %v2947 = vpop.permute.xlu0 %2946
      %2948 = vrot.lane.b32.xlu0 %v2870, 19
      %v2949 = vpop.permute.xlu0 %2948
      %2950 = vrot.lane.b32.xlu0 %v2875, 19
      %v2951 = vpop.permute.xlu0 %2950
      %2952 = vrot.lane.b32.xlu0 %v2876, 19
      %v2953 = vpop.permute.xlu0 %2952
      %2954 = vrot.lane.b32.xlu0 %v2874, 19
      %v2955 = vpop.permute.xlu0 %2954
      %2956 = vrot.lane.b32.xlu0 %v2878, 19
      %v2957 = vpop.permute.xlu0 %2956
      %2958 = vrot.lane.b32.xlu0 %v2883, 19
      %v2959 = vpop.permute.xlu0 %2958
      %2960 = vrot.lane.b32.xlu0 %v2884, 19
      %v2961 = vpop.permute.xlu0 %2960
      %2962 = vrot.lane.b32.xlu0 %v2882, 19
      %v2963 = vpop.permute.xlu0 %2962
      %2964 = vrot.lane.b32.xlu0 %v2886, 19
      %v2965 = vpop.permute.xlu0 %2964
      %2966 = vrot.lane.b32.xlu0 %v2891, 19
      %v2967 = vpop.permute.xlu0 %2966
      %2968 = vrot.lane.b32.xlu0 %v2892, 19
      %v2969 = vpop.permute.xlu0 %2968
      %2970 = vrot.lane.b32.xlu0 %v2890, 19
      %v2971 = vpop.permute.xlu0 %2970
      %2972 = vrot.lane.b32.xlu0 %v2894, 19
      %v2973 = vpop.permute.xlu0 %2972
      %2974 = vrot.lane.b32.xlu0 %v2899, 19
      %v2975 = vpop.permute.xlu0 %2974
      %2976 = vrot.lane.b32.xlu0 %v2900, 19
      %v2977 = vpop.permute.xlu0 %2976
      %2978 = vrot.lane.b32.xlu0 %v2898, 19
      %v2979 = vpop.permute.xlu0 %2978
      %v2980 = vsel %vm380, %v2909, %v2911
      %v2981 = vsel %vm380, %v2911, %v2913
      %v2982 = vsel %vm380, %v2913, %v2915
      %v2983 = vsel %vm380, %v2917, %v2919
      %v2984 = vsel %vm380, %v2919, %v2921
      %v2985 = vsel %vm380, %v2921, %v2923
      %v2986 = vsel %vm380, %v2925, %v2927
      %v2987 = vsel %vm380, %v2927, %v2929
      %v2988 = vsel %vm380, %v2929, %v2931
      %v2989 = vsel %vm380, %v2933, %v2935
      %v2990 = vsel %vm380, %v2935, %v2937
      %v2991 = vsel %vm380, %v2937, %v2939
      %v2992 = vsel %vm380, %v2941, %v2943
      %v2993 = vsel %vm380, %v2943, %v2945
      %v2994 = vsel %vm380, %v2945, %v2947
      %v2995 = vsel %vm380, %v2949, %v2951
      %v2996 = vsel %vm380, %v2951, %v2953
      %v2997 = vsel %vm380, %v2953, %v2955
      %v2998 = vsel %vm380, %v2957, %v2959
      %v2999 = vsel %vm380, %v2959, %v2961
      %v3000 = vsel %vm380, %v2961, %v2963
      %v3001 = vsel %vm380, %v2965, %v2967
      %v3002 = vsel %vm380, %v2967, %v2969
      %v3003 = vsel %vm380, %v2969, %v2971
      %v3004 = vsel %vm380, %v2973, %v2975
      %v3005 = vsel %vm380, %v2975, %v2977
      %v3006 = vsel %vm380, %v2977, %v2979
      %v3035 = vsel %vm435, %v2901, 0
      %3037 = vmatprep.subr.mxu0 %v2981
      %3038 = vmatpush1.msra.mxu0 %v2980
      %3039 = vmatprep.subr.mxu0 %v2984
      %3040 = vmatpush1.msra.mxu0 %v2983
      %3041 = vmatprep.subr.mxu0 %v2987
      %3042 = vmatpush1.msra.mxu0 %v2986
      %3043 = vmatprep.subr.mxu0 %v2990
      %3044 = vmatpush1.msra.mxu0 %v2989
      %3045 = vmatprep.subr.mxu0 %v2993
      %3046 = vmatpush1.msra.mxu0 %v2992
      %3047 = vmatprep.subr.mxu0 %v2996
      %3048 = vmatpush1.msra.mxu0 %v2995
      %3049 = vmatprep.subr.mxu0 %v2999
      %3050 = vmatpush1.msra.mxu0 %v2998
      %3051 = vmatprep.subr.mxu0 %v3002
      %3052 = vmatpush1.msra.mxu0 %v3001
      %3053 = vmatprep.subr.mxu0 %v3005
      %3054 = vmatpush1.msra.mxu0 %v3004
      %3055 = vmatprep.subr.mxu0 0.0
      %3056 = vmatpush1.msra.mxu0 0.0
      %3057 = vmatprep.subr.mxu0 0.0
      %3058 = vmatpush1.msra.mxu0 0.0
      %3059 = vmatprep.subr.mxu0 0.0
      %3060 = vmatpush1.msra.mxu0 0.0
      %3061 = vmatprep.subr.mxu0 0.0
      %3062 = vmatpush1.msra.mxu0 0.0
      %3063 = vmatprep.subr.mxu0 0.0
      %3064 = vmatpush1.msra.mxu0 0.0
      %3065 = vmatprep.subr.mxu0 0.0
      %3066 = vmatpush1.msra.mxu0 0.0
      %3067 = vmatprep.subr.mxu0 0.0
      %3068 = vmatpush1.msra.mxu0 0.0
      %3069 = vmatprep.subr.mxu0 0.0
      %3070 = vmatpush1.msra.mxu0 0.0
      %3071 = vmatprep.subr.mxu0 0.0
      %3072 = vmatpush1.msra.mxu0 0.0
      %3073 = vmatprep.subr.mxu0 0.0
      %3074 = vmatpush1.msra.mxu0 0.0
      %3075 = vmatprep.subr.mxu0 0.0
      %3076 = vmatpush1.msra.mxu0 0.0
      %3077 = vmatprep.subr.mxu0 0.0
      %3078 = vmatpush1.msra.mxu0 0.0
      %3079 = vmatprep.subr.mxu0 0.0
      %3080 = vmatpush1.msra.mxu0 0.0
      %3081 = vmatprep.subr.mxu0 0.0
      %3082 = vmatpush1.msra.mxu0 0.0
      %3083 = vmatprep.subr.mxu0 0.0
      %3084 = vmatpush1.msra.mxu0 0.0
      %3085 = vmatprep.subr.mxu0 0.0
      %3086 = vmatpush1.msra.mxu0 0.0
      %3087 = vmatprep.subr.mxu0 0.0
      %3088 = vmatpush1.msra.mxu0 0.0
      %3089 = vmatprep.subr.mxu0 0.0
      %3090 = vmatpush1.msra.mxu0 0.0
      %3091 = vmatprep.subr.mxu0 0.0
      %3092 = vmatpush1.msra.mxu0 0.0
      %3093 = vmatprep.subr.mxu0 0.0
      %3094 = vmatpush1.msra.mxu0 0.0
      %3095 = vmatprep.subr.mxu0 0.0
      %3096 = vmatpush1.msra.mxu0 0.0
      %3097 = vmatprep.subr.mxu0 0.0
      %3098 = vmatpush1.msra.mxu0 0.0
      %3099 = vmatprep.subr.mxu0 0.0
      %3100 = vmatpush1.msra.mxu0 0.0
      %3101 = vmatprep.mubr.f32.mxu0 0.0
      %3102 = vmatmul.mubr.f32.gmra.mrb[0].mxu0 %v3035
      %v3103 = vpop.f32.mrb[0].mxu0
      %v3104 = vadd.f32 %v2906, %v3103
      %v3105 = vpop.f32.mrb[0].mxu0
      %v3106 = vadd.f32 %v2906, %v3105
      %3107 = vdwg.mxu0
      %3108 = vmatprep.subr.mxu0 0.0
      %3109 = vmatpush1.msra.mxu0 %v2982
      %3110 = vmatprep.subr.mxu0 0.0
      %3111 = vmatpush1.msra.mxu0 %v2985
      %3112 = vmatprep.subr.mxu0 0.0
      %3113 = vmatpush1.msra.mxu0 %v2988
      %3114 = vmatprep.subr.mxu0 0.0
      %3115 = vmatpush1.msra.mxu0 %v2991
      %3116 = vmatprep.subr.mxu0 0.0
      %3117 = vmatpush1.msra.mxu0 %v2994
      %3118 = vmatprep.subr.mxu0 0.0
      %3119 = vmatpush1.msra.mxu0 %v2997
      %3120 = vmatprep.subr.mxu0 0.0
      %3121 = vmatpush1.msra.mxu0 %v3000
      %3122 = vmatprep.subr.mxu0 0.0
      %3123 = vmatpush1.msra.mxu0 %v3003
      %3124 = vmatprep.subr.mxu0 0.0
      %3125 = vmatpush1.msra.mxu0 %v3006
      %3126 = vmatprep.subr.mxu0 0.0
      %3127 = vmatpush1.msra.mxu0 0.0
      %3128 = vmatprep.subr.mxu0 0.0
      %3129 = vmatpush1.msra.mxu0 0.0
      %3130 = vmatprep.subr.mxu0 0.0
      %3131 = vmatpush1.msra.mxu0 0.0
      %3132 = vmatprep.subr.mxu0 0.0
      %3133 = vmatpush1.msra.mxu0 0.0
      %3134 = vmatprep.subr.mxu0 0.0
      %3135 = vmatpush1.msra.mxu0 0.0
      %3136 = vmatprep.subr.mxu0 0.0
      %3137 = vmatpush1.msra.mxu0 0.0
      %3138 = vmatprep.subr.mxu0 0.0
      %3139 = vmatpush1.msra.mxu0 0.0
      %3140 = vmatprep.subr.mxu0 0.0
      %3141 = vmatpush1.msra.mxu0 0.0
      %3142 = vmatprep.subr.mxu0 0.0
      %3143 = vmatpush1.msra.mxu0 0.0
      %3144 = vmatprep.subr.mxu0 0.0
      %3145 = vmatpush1.msra.mxu0 0.0
      %3146 = vmatprep.subr.mxu0 0.0
      %3147 = vmatpush1.msra.mxu0 0.0
      %3148 = vmatprep.subr.mxu0 0.0
      %3149 = vmatpush1.msra.mxu0 0.0
      %3150 = vmatprep.subr.mxu0 0.0
      %3151 = vmatpush1.msra.mxu0 0.0
      %3152 = vmatprep.subr.mxu0 0.0
      %3153 = vmatpush1.msra.mxu0 0.0
      %3154 = vmatprep.subr.mxu0 0.0
      %3155 = vmatpush1.msra.mxu0 0.0
      %3156 = vmatprep.subr.mxu0 0.0
      %3157 = vmatpush1.msra.mxu0 0.0
      %3158 = vmatprep.subr.mxu0 0.0
      %3159 = vmatpush1.msra.mxu0 0.0
      %3160 = vmatprep.subr.mxu0 0.0
      %3161 = vmatpush1.msra.mxu0 0.0
      %3162 = vmatprep.subr.mxu0 0.0
      %3163 = vmatpush1.msra.mxu0 0.0
      %3164 = vmatprep.subr.mxu0 0.0
      %3165 = vmatpush1.msra.mxu0 0.0
      %3166 = vmatprep.subr.mxu0 0.0
      %3167 = vmatpush1.msra.mxu0 0.0
      %3168 = vmatprep.subr.mxu0 0.0
      %3169 = vmatpush1.msra.mxu0 0.0
      %3170 = vmatprep.subr.mxu0 0.0
      %3171 = vmatpush1.msra.mxu0 0.0
      %3172 = vmatprep.mubr.f32.mxu0 0.0
      %3173 = vmatmul.mubr.f32.gmra.mrb[0].mxu0 %v3035
      %v3174 = vpop.f32.mrb[0].mxu0
      %v3175 = vadd.f32 %v2906, %v3174
      %v3176 = vpop.f32.mrb[0].mxu0
      %3177 = vdwg.mxu0
      %v3178 = vld [vmem:[#allocation2 + $0x8] sm:$0xff]
      %v3179 = vld [vmem:[#allocation2 + $0x10] sm:$0xff]
      %v3180 = vld [vmem:[#allocation2 + $0x18] sm:$0xff]
      %v3181 = vadd.f32 %v3104, %v3178
      %v3182 = vadd.f32 %v3106, %v3179
      %v3183 = vadd.f32 %v3175, %v3180
      %v3184 = vsel %vm596, %v3181, 0.0
      %v3185 = vsel %vm597, %v3182, 0.0
      %v3186 = vsel %vm598, %v3183, 0.0
      %3187 = vst [vmem:[#allocation2 + $0x8] sm:$0xff] %v3184
      %3188 = vst [vmem:[#allocation2 + $0x10] sm:$0xff] %v3185
      %3189 = vst.msk [vmem:[#allocation2 + $0x18] sm:$0xff] %vm604, %v3186
      %v3190 = vld [vmem:[#allocation2] sm:$0xff]
      %v3191 = vld [vmem:[#allocation2 + $0x8] sm:$0xff]
      %v3192 = vld [vmem:[#allocation2 + $0x10] sm:$0xff]
      %v3193 = vld [vmem:[#allocation2 + $0x18] sm:$0xff]
      %3198 = vrot.lane.b32.xlu0 %v3190, 127
      %v3199 = vpop.permute.xlu0 %3198
      %3200 = vrot.lane.b32.xlu0 %v3191, 127
      %v3201 = vpop.permute.xlu0 %3200
      %3202 = vrot.lane.b32.xlu0 %v3192, 127
      %v3203 = vpop.permute.xlu0 %3202
      %3204 = vrot.lane.b32.xlu0 %v3193, 127
      %v3205 = vpop.permute.xlu0 %3204
      %v3206 = vsel %vm228, %v3199, %v3201
      %v3207 = vsel %vm228, %v3201, %v3203
      %v3208 = vsel %vm228, %v3203, %v3205
      %3209 = vrot.lane.b32.xlu0 %v3190, 126
      %v3210 = vpop.permute.xlu0 %3209
      %3211 = vrot.lane.b32.xlu0 %v3191, 126
      %v3212 = vpop.permute.xlu0 %3211
      %3213 = vrot.lane.b32.xlu0 %v3192, 126
      %v3214 = vpop.permute.xlu0 %3213
      %3215 = vrot.lane.b32.xlu0 %v3193, 126
      %v3216 = vpop.permute.xlu0 %3215
      %v3217 = vsel %vm240, %v3210, %v3212
      %v3218 = vsel %vm240, %v3212, %v3214
      %v3219 = vsel %vm240, %v3214, %v3216
      %3220 = vrot.lane.b32.xlu0 %v3190, 110
      %v3221 = vpop.permute.xlu0 %3220
      %3222 = vrot.lane.b32.xlu0 %v3191, 110
      %v3223 = vpop.permute.xlu0 %3222
      %3224 = vrot.lane.b32.xlu0 %v3192, 110
      %v3225 = vpop.permute.xlu0 %3224
      %3226 = vrot.lane.b32.xlu0 %v3193, 110
      %v3227 = vpop.permute.xlu0 %3226
      %v3228 = vsel %vm252, %v3221, %v3223
      %v3229 = vsel %vm252, %v3223, %v3225
      %v3230 = vsel %vm252, %v3225, %v3227
      %3231 = vrot.lane.b32.xlu0 %v3191, 109
      %v3232 = vpop.permute.xlu0 %3231
      %3233 = vrot.lane.b32.xlu0 %v3192, 109
      %v3234 = vpop.permute.xlu0 %3233
      %3235 = vrot.lane.b32.xlu0 %v3193, 109
      %v3236 = vpop.permute.xlu0 %3235
      %v3237 = vsel %vm262, %v3232, %v3234
      %v3238 = vsel %vm262, %v3234, %v3236
      %3239 = vrot.lane.b32.xlu0 %v3191, 108
      %v3240 = vpop.permute.xlu0 %3239
      %3241 = vrot.lane.b32.xlu0 %v3192, 108
      %v3242 = vpop.permute.xlu0 %3241
      %3243 = vrot.lane.b32.xlu0 %v3193, 108
      %v3244 = vpop.permute.xlu0 %3243
      %v3245 = vsel %vm271, %v3240, %v3242
      %v3246 = vsel %vm271, %v3242, %v3244
      %3247 = vrot.lane.b32.xlu0 %v3191, 92
      %v3248 = vpop.permute.xlu0 %3247
      %3249 = vrot.lane.b32.xlu0 %v3192, 92
      %v3250 = vpop.permute.xlu0 %3249
      %3251 = vrot.lane.b32.xlu0 %v3193, 92
      %v3252 = vpop.permute.xlu0 %3251
      %v3253 = vsel %vm280, %v3248, %v3250
      %v3254 = vsel %vm280, %v3250, %v3252
      %3255 = vrot.lane.b32.xlu0 %v3191, 91
      %v3256 = vpop.permute.xlu0 %3255
      %3257 = vrot.lane.b32.xlu0 %v3192, 91
      %v3258 = vpop.permute.xlu0 %3257
      %3259 = vrot.lane.b32.xlu0 %v3193, 91
      %v3260 = vpop.permute.xlu0 %3259
      %v3261 = vsel %vm289, %v3256, %v3258
      %v3262 = vsel %vm289, %v3258, %v3260
      %3263 = vrot.lane.b32.xlu0 %v3191, 90
      %v3264 = vpop.permute.xlu0 %3263
      %3265 = vrot.lane.b32.xlu0 %v3192, 90
      %v3266 = vpop.permute.xlu0 %3265
      %3267 = vrot.lane.b32.xlu0 %v3193, 90
      %v3268 = vpop.permute.xlu0 %3267
      %v3269 = vsel %vm298, %v3264, %v3266
      %v3270 = vsel %vm298, %v3266, %v3268
      %v3271 = vld [vmem:[%s687] sm:$0xff]
      %v3272 = vld [vmem:[%s689] sm:$0xff]
      %3274 = vset.pattern.permute.xlu0 0
      %3275 = vperm.xlu0 %3274, %v3272
      %v3276 = vpop.permute.xlu0 %3275
      %3278 = vrot.lane.b32.xlu0 %v3190, 19
      %v3279 = vpop.permute.xlu0 %3278
      %3280 = vrot.lane.b32.xlu0 %v3191, 19
      %v3281 = vpop.permute.xlu0 %3280
      %3282 = vrot.lane.b32.xlu0 %v3192, 19
      %v3283 = vpop.permute.xlu0 %3282
      %3284 = vrot.lane.b32.xlu0 %v3193, 19
      %v3285 = vpop.permute.xlu0 %3284
      %3286 = vrot.lane.b32.xlu0 %v3206, 19
      %v3287 = vpop.permute.xlu0 %3286
      %3288 = vrot.lane.b32.xlu0 %v3207, 19
      %v3289 = vpop.permute.xlu0 %3288
      %3290 = vrot.lane.b32.xlu0 %v3208, 19
      %v3291 = vpop.permute.xlu0 %3290
      %3292 = vrot.lane.b32.xlu0 %v3205, 19
      %v3293 = vpop.permute.xlu0 %3292
      %3294 = vrot.lane.b32.xlu0 %v3217, 19
      %v3295 = vpop.permute.xlu0 %3294
      %3296 = vrot.lane.b32.xlu0 %v3218, 19
      %v3297 = vpop.permute.xlu0 %3296
      %3298 = vrot.lane.b32.xlu0 %v3219, 19
      %v3299 = vpop.permute.xlu0 %3298
      %3300 = vrot.lane.b32.xlu0 %v3216, 19
      %v3301 = vpop.permute.xlu0 %3300
      %3302 = vrot.lane.b32.xlu0 %v3228, 19
      %v3303 = vpop.permute.xlu0 %3302
      %3304 = vrot.lane.b32.xlu0 %v3229, 19
      %v3305 = vpop.permute.xlu0 %3304
      %3306 = vrot.lane.b32.xlu0 %v3230, 19
      %v3307 = vpop.permute.xlu0 %3306
      %3308 = vrot.lane.b32.xlu0 %v3227, 19
      %v3309 = vpop.permute.xlu0 %3308
      %3310 = vrot.lane.b32.xlu0 %v3232, 19
      %v3311 = vpop.permute.xlu0 %3310
      %3312 = vrot.lane.b32.xlu0 %v3237, 19
      %v3313 = vpop.permute.xlu0 %3312
      %3314 = vrot.lane.b32.xlu0 %v3238, 19
      %v3315 = vpop.permute.xlu0 %3314
      %3316 = vrot.lane.b32.xlu0 %v3236, 19
      %v3317 = vpop.permute.xlu0 %3316
      %3318 = vrot.lane.b32.xlu0 %v3240, 19
      %v3319 = vpop.permute.xlu0 %3318
      %3320 = vrot.lane.b32.xlu0 %v3245, 19
      %v3321 = vpop.permute.xlu0 %3320
      %3322 = vrot.lane.b32.xlu0 %v3246, 19
      %v3323 = vpop.permute.xlu0 %3322
      %3324 = vrot.lane.b32.xlu0 %v3244, 19
      %v3325 = vpop.permute.xlu0 %3324
      %3326 = vrot.lane.b32.xlu0 %v3248, 19
      %v3327 = vpop.permute.xlu0 %3326
      %3328 = vrot.lane.b32.xlu0 %v3253, 19
      %v3329 = vpop.permute.xlu0 %3328
      %3330 = vrot.lane.b32.xlu0 %v3254, 19
      %v3331 = vpop.permute.xlu0 %3330
      %3332 = vrot.lane.b32.xlu0 %v3252, 19
      %v3333 = vpop.permute.xlu0 %3332
      %3334 = vrot.lane.b32.xlu0 %v3256, 19
      %v3335 = vpop.permute.xlu0 %3334
      %3336 = vrot.lane.b32.xlu0 %v3261, 19
      %v3337 = vpop.permute.xlu0 %3336
      %3338 = vrot.lane.b32.xlu0 %v3262, 19
      %v3339 = vpop.permute.xlu0 %3338
      %3340 = vrot.lane.b32.xlu0 %v3260, 19
      %v3341 = vpop.permute.xlu0 %3340
      %3342 = vrot.lane.b32.xlu0 %v3264, 19
      %v3343 = vpop.permute.xlu0 %3342
      %3344 = vrot.lane.b32.xlu0 %v3269, 19
      %v3345 = vpop.permute.xlu0 %3344
      %3346 = vrot.lane.b32.xlu0 %v3270, 19
      %v3347 = vpop.permute.xlu0 %3346
      %3348 = vrot.lane.b32.xlu0 %v3268, 19
      %v3349 = vpop.permute.xlu0 %3348
      %v3350 = vsel %vm380, %v3279, %v3281
      %v3351 = vsel %vm380, %v3281, %v3283
      %v3352 = vsel %vm380, %v3283, %v3285
      %v3353 = vsel %vm380, %v3287, %v3289
      %v3354 = vsel %vm380, %v3289, %v3291
      %v3355 = vsel %vm380, %v3291, %v3293
      %v3356 = vsel %vm380, %v3295, %v3297
      %v3357 = vsel %vm380, %v3297, %v3299
      %v3358 = vsel %vm380, %v3299, %v3301
      %v3359 = vsel %vm380, %v3303, %v3305
      %v3360 = vsel %vm380, %v3305, %v3307
      %v3361 = vsel %vm380, %v3307, %v3309
      %v3362 = vsel %vm380, %v3311, %v3313
      %v3363 = vsel %vm380, %v3313, %v3315
      %v3364 = vsel %vm380, %v3315, %v3317
      %v3365 = vsel %vm380, %v3319, %v3321
      %v3366 = vsel %vm380, %v3321, %v3323
      %v3367 = vsel %vm380, %v3323, %v3325
      %v3368 = vsel %vm380, %v3327, %v3329
      %v3369 = vsel %vm380, %v3329, %v3331
      %v3370 = vsel %vm380, %v3331, %v3333
      %v3371 = vsel %vm380, %v3335, %v3337
      %v3372 = vsel %vm380, %v3337, %v3339
      %v3373 = vsel %vm380, %v3339, %v3341
      %v3374 = vsel %vm380, %v3343, %v3345
      %v3375 = vsel %vm380, %v3345, %v3347
      %v3376 = vsel %vm380, %v3347, %v3349
      %v3405 = vsel %vm435, %v3271, 0
      %3407 = vmatprep.subr.mxu0 %v3351
      %3408 = vmatpush1.msra.mxu0 %v3350
      %3409 = vmatprep.subr.mxu0 %v3354
      %3410 = vmatpush1.msra.mxu0 %v3353
      %3411 = vmatprep.subr.mxu0 %v3357
      %3412 = vmatpush1.msra.mxu0 %v3356
      %3413 = vmatprep.subr.mxu0 %v3360
      %3414 = vmatpush1.msra.mxu0 %v3359
      %3415 = vmatprep.subr.mxu0 %v3363
      %3416 = vmatpush1.msra.mxu0 %v3362
      %3417 = vmatprep.subr.mxu0 %v3366
      %3418 = vmatpush1.msra.mxu0 %v3365
      %3419 = vmatprep.subr.mxu0 %v3369
      %3420 = vmatpush1.msra.mxu0 %v3368
      %3421 = vmatprep.subr.mxu0 %v3372
      %3422 = vmatpush1.msra.mxu0 %v3371
      %3423 = vmatprep.subr.mxu0 %v3375
      %3424 = vmatpush1.msra.mxu0 %v3374
      %3425 = vmatprep.subr.mxu0 0.0
      %3426 = vmatpush1.msra.mxu0 0.0
      %3427 = vmatprep.subr.mxu0 0.0
      %3428 = vmatpush1.msra.mxu0 0.0
      %3429 = vmatprep.subr.mxu0 0.0
      %3430 = vmatpush1.msra.mxu0 0.0
      %3431 = vmatprep.subr.mxu0 0.0
      %3432 = vmatpush1.msra.mxu0 0.0
      %3433 = vmatprep.subr.mxu0 0.0
      %3434 = vmatpush1.msra.mxu0 0.0
      %3435 = vmatprep.subr.mxu0 0.0
      %3436 = vmatpush1.msra.mxu0 0.0
      %3437 = vmatprep.subr.mxu0 0.0
      %3438 = vmatpush1.msra.mxu0 0.0
      %3439 = vmatprep.subr.mxu0 0.0
      %3440 = vmatpush1.msra.mxu0 0.0
      %3441 = vmatprep.subr.mxu0 0.0
      %3442 = vmatpush1.msra.mxu0 0.0
      %3443 = vmatprep.subr.mxu0 0.0
      %3444 = vmatpush1.msra.mxu0 0.0
      %3445 = vmatprep.subr.mxu0 0.0
      %3446 = vmatpush1.msra.mxu0 0.0
      %3447 = vmatprep.subr.mxu0 0.0
      %3448 = vmatpush1.msra.mxu0 0.0
      %3449 = vmatprep.subr.mxu0 0.0
      %3450 = vmatpush1.msra.mxu0 0.0
      %3451 = vmatprep.subr.mxu0 0.0
      %3452 = vmatpush1.msra.mxu0 0.0
      %3453 = vmatprep.subr.mxu0 0.0
      %3454 = vmatpush1.msra.mxu0 0.0
      %3455 = vmatprep.subr.mxu0 0.0
      %3456 = vmatpush1.msra.mxu0 0.0
      %3457 = vmatprep.subr.mxu0 0.0
      %3458 = vmatpush1.msra.mxu0 0.0
      %3459 = vmatprep.subr.mxu0 0.0
      %3460 = vmatpush1.msra.mxu0 0.0
      %3461 = vmatprep.subr.mxu0 0.0
      %3462 = vmatpush1.msra.mxu0 0.0
      %3463 = vmatprep.subr.mxu0 0.0
      %3464 = vmatpush1.msra.mxu0 0.0
      %3465 = vmatprep.subr.mxu0 0.0
      %3466 = vmatpush1.msra.mxu0 0.0
      %3467 = vmatprep.subr.mxu0 0.0
      %3468 = vmatpush1.msra.mxu0 0.0
      %3469 = vmatprep.subr.mxu0 0.0
      %3470 = vmatpush1.msra.mxu0 0.0
      %3471 = vmatprep.mubr.f32.mxu0 0.0
      %3472 = vmatmul.mubr.f32.gmra.mrb[0].mxu0 %v3405
      %v3473 = vpop.f32.mrb[0].mxu0
      %v3474 = vadd.f32 %v3276, %v3473
      %v3475 = vpop.f32.mrb[0].mxu0
      %v3476 = vadd.f32 %v3276, %v3475
      %3477 = vdwg.mxu0
      %3478 = vmatprep.subr.mxu0 0.0
      %3479 = vmatpush1.msra.mxu0 %v3352
      %3480 = vmatprep.subr.mxu0 0.0
      %3481 = vmatpush1.msra.mxu0 %v3355
      %3482 = vmatprep.subr.mxu0 0.0
      %3483 = vmatpush1.msra.mxu0 %v3358
      %3484 = vmatprep.subr.mxu0 0.0
      %3485 = vmatpush1.msra.mxu0 %v3361
      %3486 = vmatprep.subr.mxu0 0.0
      %3487 = vmatpush1.msra.mxu0 %v3364
      %3488 = vmatprep.subr.mxu0 0.0
      %3489 = vmatpush1.msra.mxu0 %v3367
      %3490 = vmatprep.subr.mxu0 0.0
      %3491 = vmatpush1.msra.mxu0 %v3370
      %3492 = vmatprep.subr.mxu0 0.0
      %3493 = vmatpush1.msra.mxu0 %v3373
      %3494 = vmatprep.subr.mxu0 0.0
      %3495 = vmatpush1.msra.mxu0 %v3376
      %3496 = vmatprep.subr.mxu0 0.0
      %3497 = vmatpush1.msra.mxu0 0.0
      %3498 = vmatprep.subr.mxu0 0.0
      %3499 = vmatpush1.msra.mxu0 0.0
      %3500 = vmatprep.subr.mxu0 0.0
      %3501 = vmatpush1.msra.mxu0 0.0
      %3502 = vmatprep.subr.mxu0 0.0
      %3503 = vmatpush1.msra.mxu0 0.0
      %3504 = vmatprep.subr.mxu0 0.0
      %3505 = vmatpush1.msra.mxu0 0.0
      %3506 = vmatprep.subr.mxu0 0.0
      %3507 = vmatpush1.msra.mxu0 0.0
      %3508 = vmatprep.subr.mxu0 0.0
      %3509 = vmatpush1.msra.mxu0 0.0
      %3510 = vmatprep.subr.mxu0 0.0
      %3511 = vmatpush1.msra.mxu0 0.0
      %3512 = vmatprep.subr.mxu0 0.0
      %3513 = vmatpush1.msra.mxu0 0.0
      %3514 = vmatprep.subr.mxu0 0.0
      %3515 = vmatpush1.msra.mxu0 0.0
      %3516 = vmatprep.subr.mxu0 0.0
      %3517 = vmatpush1.msra.mxu0 0.0
      %3518 = vmatprep.subr.mxu0 0.0
      %3519 = vmatpush1.msra.mxu0 0.0
      %3520 = vmatprep.subr.mxu0 0.0
      %3521 = vmatpush1.msra.mxu0 0.0
      %3522 = vmatprep.subr.mxu0 0.0
      %3523 = vmatpush1.msra.mxu0 0.0
      %3524 = vmatprep.subr.mxu0 0.0
      %3525 = vmatpush1.msra.mxu0 0.0
      %3526 = vmatprep.subr.mxu0 0.0
      %3527 = vmatpush1.msra.mxu0 0.0
      %3528 = vmatprep.subr.mxu0 0.0
      %3529 = vmatpush1.msra.mxu0 0.0
      %3530 = vmatprep.subr.mxu0 0.0
      %3531 = vmatpush1.msra.mxu0 0.0
      %3532 = vmatprep.subr.mxu0 0.0
      %3533 = vmatpush1.msra.mxu0 0.0
      %3534 = vmatprep.subr.mxu0 0.0
      %3535 = vmatpush1.msra.mxu0 0.0
      %3536 = vmatprep.subr.mxu0 0.0
      %3537 = vmatpush1.msra.mxu0 0.0
      %3538 = vmatprep.subr.mxu0 0.0
      %3539 = vmatpush1.msra.mxu0 0.0
      %3540 = vmatprep.subr.mxu0 0.0
      %3541 = vmatpush1.msra.mxu0 0.0
      %3542 = vmatprep.mubr.f32.mxu0 0.0
      %3543 = vmatmul.mubr.f32.gmra.mrb[0].mxu0 %v3405
      %v3544 = vpop.f32.mrb[0].mxu0
      %v3545 = vadd.f32 %v3276, %v3544
      %v3546 = vpop.f32.mrb[0].mxu0
      %3547 = vdwg.mxu0
      %v3548 = vmax.f32 %v3474, 0.0
      %v3549 = vmax.f32 %v3476, 0.0
      %v3550 = vmax.f32 %v3545, 0.0
      %v3551 = vsel %vm596, %v3548, 0.0
      %v3552 = vsel %vm597, %v3549, 0.0
      %v3553 = vsel %vm598, %v3550, 0.0
      %3554 = vst [vmem:[#allocation3 + $0x8] sm:$0xff] %v3551
      %3555 = vst [vmem:[#allocation3 + $0x10] sm:$0xff] %v3552
      %3556 = vst.msk [vmem:[#allocation3 + $0x18] sm:$0xff] %vm604, %v3553
      %v3557 = vld [vmem:[#allocation3] sm:$0xff]
      %v3558 = vld [vmem:[#allocation3 + $0x8] sm:$0xff]
      %v3559 = vld [vmem:[#allocation3 + $0x10] sm:$0xff]
      %v3560 = vld [vmem:[#allocation3 + $0x18] sm:$0xff]
      %3565 = vrot.lane.b32.xlu0 %v3557, 127
      %v3566 = vpop.permute.xlu0 %3565
      %3567 = vrot.lane.b32.xlu0 %v3558, 127
      %v3568 = vpop.permute.xlu0 %3567
      %3569 = vrot.lane.b32.xlu0 %v3559, 127
      %v3570 = vpop.permute.xlu0 %3569
      %3571 = vrot.lane.b32.xlu0 %v3560, 127
      %v3572 = vpop.permute.xlu0 %3571
      %v3573 = vsel %vm228, %v3566, %v3568
      %v3574 = vsel %vm228, %v3568, %v3570
      %v3575 = vsel %vm228, %v3570, %v3572
      %3576 = vrot.lane.b32.xlu0 %v3557, 126
      %v3577 = vpop.permute.xlu0 %3576
      %3578 = vrot.lane.b32.xlu0 %v3558, 126
      %v3579 = vpop.permute.xlu0 %3578
      %3580 = vrot.lane.b32.xlu0 %v3559, 126
      %v3581 = vpop.permute.xlu0 %3580
      %3582 = vrot.lane.b32.xlu0 %v3560, 126
      %v3583 = vpop.permute.xlu0 %3582
      %v3584 = vsel %vm240, %v3577, %v3579
      %v3585 = vsel %vm240, %v3579, %v3581
      %v3586 = vsel %vm240, %v3581, %v3583
      %3587 = vrot.lane.b32.xlu0 %v3557, 110
      %v3588 = vpop.permute.xlu0 %3587
      %3589 = vrot.lane.b32.xlu0 %v3558, 110
      %v3590 = vpop.permute.xlu0 %3589
      %3591 = vrot.lane.b32.xlu0 %v3559, 110
      %v3592 = vpop.permute.xlu0 %3591
      %3593 = vrot.lane.b32.xlu0 %v3560, 110
      %v3594 = vpop.permute.xlu0 %3593
      %v3595 = vsel %vm252, %v3588, %v3590
      %v3596 = vsel %vm252, %v3590, %v3592
      %v3597 = vsel %vm252, %v3592, %v3594
      %3598 = vrot.lane.b32.xlu0 %v3558, 109
      %v3599 = vpop.permute.xlu0 %3598
      %3600 = vrot.lane.b32.xlu0 %v3559, 109
      %v3601 = vpop.permute.xlu0 %3600
      %3602 = vrot.lane.b32.xlu0 %v3560, 109
      %v3603 = vpop.permute.xlu0 %3602
      %v3604 = vsel %vm262, %v3599, %v3601
      %v3605 = vsel %vm262, %v3601, %v3603
      %3606 = vrot.lane.b32.xlu0 %v3558, 108
      %v3607 = vpop.permute.xlu0 %3606
      %3608 = vrot.lane.b32.xlu0 %v3559, 108
      %v3609 = vpop.permute.xlu0 %3608
      %3610 = vrot.lane.b32.xlu0 %v3560, 108
      %v3611 = vpop.permute.xlu0 %3610
      %v3612 = vsel %vm271, %v3607, %v3609
      %v3613 = vsel %vm271, %v3609, %v3611
      %3614 = vrot.lane.b32.xlu0 %v3558, 92
      %v3615 = vpop.permute.xlu0 %3614
      %3616 = vrot.lane.b32.xlu0 %v3559, 92
      %v3617 = vpop.permute.xlu0 %3616
      %3618 = vrot.lane.b32.xlu0 %v3560, 92
      %v3619 = vpop.permute.xlu0 %3618
      %v3620 = vsel %vm280, %v3615, %v3617
      %v3621 = vsel %vm280, %v3617, %v3619
      %3622 = vrot.lane.b32.xlu0 %v3558, 91
      %v3623 = vpop.permute.xlu0 %3622
      %3624 = vrot.lane.b32.xlu0 %v3559, 91
      %v3625 = vpop.permute.xlu0 %3624
      %3626 = vrot.lane.b32.xlu0 %v3560, 91
      %v3627 = vpop.permute.xlu0 %3626
      %v3628 = vsel %vm289, %v3623, %v3625
      %v3629 = vsel %vm289, %v3625, %v3627
      %3630 = vrot.lane.b32.xlu0 %v3558, 90
      %v3631 = vpop.permute.xlu0 %3630
      %3632 = vrot.lane.b32.xlu0 %v3559, 90
      %v3633 = vpop.permute.xlu0 %3632
      %3634 = vrot.lane.b32.xlu0 %v3560, 90
      %v3635 = vpop.permute.xlu0 %3634
      %v3636 = vsel %vm298, %v3631, %v3633
      %v3637 = vsel %vm298, %v3633, %v3635
      %v3638 = vld [vmem:[%s1056] sm:$0xff]
      %v3639 = vld [vmem:[%s1058] sm:$0xff]
      %3641 = vset.pattern.permute.xlu0 0
      %3642 = vperm.xlu0 %3641, %v3639
      %v3643 = vpop.permute.xlu0 %3642
      %3645 = vrot.lane.b32.xlu0 %v3557, 19
      %v3646 = vpop.permute.xlu0 %3645
      %3647 = vrot.lane.b32.xlu0 %v3558, 19
      %v3648 = vpop.permute.xlu0 %3647
      %3649 = vrot.lane.b32.xlu0 %v3559, 19
      %v3650 = vpop.permute.xlu0 %3649
      %3651 = vrot.lane.b32.xlu0 %v3560, 19
      %v3652 = vpop.permute.xlu0 %3651
      %3653 = vrot.lane.b32.xlu0 %v3573, 19
      %v3654 = vpop.permute.xlu0 %3653
      %3655 = vrot.lane.b32.xlu0 %v3574, 19
      %v3656 = vpop.permute.xlu0 %3655
      %3657 = vrot.lane.b32.xlu0 %v3575, 19
      %v3658 = vpop.permute.xlu0 %3657
      %3659 = vrot.lane.b32.xlu0 %v3572, 19
      %v3660 = vpop.permute.xlu0 %3659
      %3661 = vrot.lane.b32.xlu0 %v3584, 19
      %v3662 = vpop.permute.xlu0 %3661
      %3663 = vrot.lane.b32.xlu0 %v3585, 19
      %v3664 = vpop.permute.xlu0 %3663
      %3665 = vrot.lane.b32.xlu0 %v3586, 19
      %v3666 = vpop.permute.xlu0 %3665
      %3667 = vrot.lane.b32.xlu0 %v3583, 19
      %v3668 = vpop.permute.xlu0 %3667
      %3669 = vrot.lane.b32.xlu0 %v3595, 19
      %v3670 = vpop.permute.xlu0 %3669
      %3671 = vrot.lane.b32.xlu0 %v3596, 19
      %v3672 = vpop.permute.xlu0 %3671
      %3673 = vrot.lane.b32.xlu0 %v3597, 19
      %v3674 = vpop.permute.xlu0 %3673
      %3675 = vrot.lane.b32.xlu0 %v3594, 19
      %v3676 = vpop.permute.xlu0 %3675
      %3677 = vrot.lane.b32.xlu0 %v3599, 19
      %v3678 = vpop.permute.xlu0 %3677
      %3679 = vrot.lane.b32.xlu0 %v3604, 19
      %v3680 = vpop.permute.xlu0 %3679
      %3681 = vrot.lane.b32.xlu0 %v3605, 19
      %v3682 = vpop.permute.xlu0 %3681
      %3683 = vrot.lane.b32.xlu0 %v3603, 19
      %v3684 = vpop.permute.xlu0 %3683
      %3685 = vrot.lane.b32.xlu0 %v3607, 19
      %v3686 = vpop.permute.xlu0 %3685
      %3687 = vrot.lane.b32.xlu0 %v3612, 19
      %v3688 = vpop.permute.xlu0 %3687
      %3689 = vrot.lane.b32.xlu0 %v3613, 19
      %v3690 = vpop.permute.xlu0 %3689
      %3691 = vrot.lane.b32.xlu0 %v3611, 19
      %v3692 = vpop.permute.xlu0 %3691
      %3693 = vrot.lane.b32.xlu0 %v3615, 19
      %v3694 = vpop.permute.xlu0 %3693
      %3695 = vrot.lane.b32.xlu0 %v3620, 19
      %v3696 = vpop.permute.xlu0 %3695
      %3697 = vrot.lane.b32.xlu0 %v3621, 19
      %v3698 = vpop.permute.xlu0 %3697
      %3699 = vrot.lane.b32.xlu0 %v3619, 19
      %v3700 = vpop.permute.xlu0 %3699
      %3701 = vrot.lane.b32.xlu0 %v3623, 19
      %v3702 = vpop.permute.xlu0 %3701
      %3703 = vrot.lane.b32.xlu0 %v3628, 19
      %v3704 = vpop.permute.xlu0 %3703
      %3705 = vrot.lane.b32.xlu0 %v3629, 19
      %v3706 = vpop.permute.xlu0 %3705
      %3707 = vrot.lane.b32.xlu0 %v3627, 19
      %v3708 = vpop.permute.xlu0 %3707
      %3709 = vrot.lane.b32.xlu0 %v3631, 19
      %v3710 = vpop.permute.xlu0 %3709
      %3711 = vrot.lane.b32.xlu0 %v3636, 19
      %v3712 = vpop.permute.xlu0 %3711
      %3713 = vrot.lane.b32.xlu0 %v3637, 19
      %v3714 = vpop.permute.xlu0 %3713
      %3715 = vrot.lane.b32.xlu0 %v3635, 19
      %v3716 = vpop.permute.xlu0 %3715
      %v3717 = vsel %vm380, %v3646, %v3648
      %v3718 = vsel %vm380, %v3648, %v3650
      %v3719 = vsel %vm380, %v3650, %v3652
      %v3720 = vsel %vm380, %v3654, %v3656
      %v3721 = vsel %vm380, %v3656, %v3658
      %v3722 = vsel %vm380, %v3658, %v3660
      %v3723 = vsel %vm380, %v3662, %v3664
      %v3724 = vsel %vm380, %v3664, %v3666
      %v3725 = vsel %vm380, %v3666, %v3668
      %v3726 = vsel %vm380, %v3670, %v3672
      %v3727 = vsel %vm380, %v3672, %v3674
      %v3728 = vsel %vm380, %v3674, %v3676
      %v3729 = vsel %vm380, %v3678, %v3680
      %v3730 = vsel %vm380, %v3680, %v3682
      %v3731 = vsel %vm380, %v3682, %v3684
      %v3732 = vsel %vm380, %v3686, %v3688
      %v3733 = vsel %vm380, %v3688, %v3690
      %v3734 = vsel %vm380, %v3690, %v3692
      %v3735 = vsel %vm380, %v3694, %v3696
      %v3736 = vsel %vm380, %v3696, %v3698
      %v3737 = vsel %vm380, %v3698, %v3700
      %v3738 = vsel %vm380, %v3702, %v3704
      %v3739 = vsel %vm380, %v3704, %v3706
      %v3740 = vsel %vm380, %v3706, %v3708
      %v3741 = vsel %vm380, %v3710, %v3712
      %v3742 = vsel %vm380, %v3712, %v3714
      %v3743 = vsel %vm380, %v3714, %v3716
      %v3772 = vsel %vm435, %v3638, 0
      %3774 = vmatprep.subr.mxu0 %v3718
      %3775 = vmatpush1.msra.mxu0 %v3717
      %3776 = vmatprep.subr.mxu0 %v3721
      %3777 = vmatpush1.msra.mxu0 %v3720
      %3778 = vmatprep.subr.mxu0 %v3724
      %3779 = vmatpush1.msra.mxu0 %v3723
      %3780 = vmatprep.subr.mxu0 %v3727
      %3781 = vmatpush1.msra.mxu0 %v3726
      %3782 = vmatprep.subr.mxu0 %v3730
      %3783 = vmatpush1.msra.mxu0 %v3729
      %3784 = vmatprep.subr.mxu0 %v3733
      %3785 = vmatpush1.msra.mxu0 %v3732
      %3786 = vmatprep.subr.mxu0 %v3736
      %3787 = vmatpush1.msra.mxu0 %v3735
      %3788 = vmatprep.subr.mxu0 %v3739
      %3789 = vmatpush1.msra.mxu0 %v3738
      %3790 = vmatprep.subr.mxu0 %v3742
      %3791 = vmatpush1.msra.mxu0 %v3741
      %3792 = vmatprep.subr.mxu0 0.0
      %3793 = vmatpush1.msra.mxu0 0.0
      %3794 = vmatprep.subr.mxu0 0.0
      %3795 = vmatpush1.msra.mxu0 0.0
      %3796 = vmatprep.subr.mxu0 0.0
      %3797 = vmatpush1.msra.mxu0 0.0
      %3798 = vmatprep.subr.mxu0 0.0
      %3799 = vmatpush1.msra.mxu0 0.0
      %3800 = vmatprep.subr.mxu0 0.0
      %3801 = vmatpush1.msra.mxu0 0.0
      %3802 = vmatprep.subr.mxu0 0.0
      %3803 = vmatpush1.msra.mxu0 0.0
      %3804 = vmatprep.subr.mxu0 0.0
      %3805 = vmatpush1.msra.mxu0 0.0
      %3806 = vmatprep.subr.mxu0 0.0
      %3807 = vmatpush1.msra.mxu0 0.0
      %3808 = vmatprep.subr.mxu0 0.0
      %3809 = vmatpush1.msra.mxu0 0.0
      %3810 = vmatprep.subr.mxu0 0.0
      %3811 = vmatpush1.msra.mxu0 0.0
      %3812 = vmatprep.subr.mxu0 0.0
      %3813 = vmatpush1.msra.mxu0 0.0
      %3814 = vmatprep.subr.mxu0 0.0
      %3815 = vmatpush1.msra.mxu0 0.0
      %3816 = vmatprep.subr.mxu0 0.0
      %3817 = vmatpush1.msra.mxu0 0.0
      %3818 = vmatprep.subr.mxu0 0.0
      %3819 = vmatpush1.msra.mxu0 0.0
      %3820 = vmatprep.subr.mxu0 0.0
      %3821 = vmatpush1.msra.mxu0 0.0
      %3822 = vmatprep.subr.mxu0 0.0
      %3823 = vmatpush1.msra.mxu0 0.0
      %3824 = vmatprep.subr.mxu0 0.0
      %3825 = vmatpush1.msra.mxu0 0.0
      %3826 = vmatprep.subr.mxu0 0.0
      %3827 = vmatpush1.msra.mxu0 0.0
      %3828 = vmatprep.subr.mxu0 0.0
      %3829 = vmatpush1.msra.mxu0 0.0
      %3830 = vmatprep.subr.mxu0 0.0
      %3831 = vmatpush1.msra.mxu0 0.0
      %3832 = vmatprep.subr.mxu0 0.0
      %3833 = vmatpush1.msra.mxu0 0.0
      %3834 = vmatprep.subr.mxu0 0.0
      %3835 = vmatpush1.msra.mxu0 0.0
      %3836 = vmatprep.subr.mxu0 0.0
      %3837 = vmatpush1.msra.mxu0 0.0
      %3838 = vmatprep.mubr.f32.mxu0 0.0
      %3839 = vmatmul.mubr.f32.gmra.mrb[0].mxu0 %v3772
      %v3840 = vpop.f32.mrb[0].mxu0
      %v3841 = vadd.f32 %v3643, %v3840
      %v3842 = vpop.f32.mrb[0].mxu0
      %v3843 = vadd.f32 %v3643, %v3842
      %3844 = vdwg.mxu0
      %3845 = vmatprep.subr.mxu0 0.0
      %3846 = vmatpush1.msra.mxu0 %v3719
      %3847 = vmatprep.subr.mxu0 0.0
      %3848 = vmatpush1.msra.mxu0 %v3722
      %3849 = vmatprep.subr.mxu0 0.0
      %3850 = vmatpush1.msra.mxu0 %v3725
      %3851 = vmatprep.subr.mxu0 0.0
      %3852 = vmatpush1.msra.mxu0 %v3728
      %3853 = vmatprep.subr.mxu0 0.0
      %3854 = vmatpush1.msra.mxu0 %v3731
      %3855 = vmatprep.subr.mxu0 0.0
      %3856 = vmatpush1.msra.mxu0 %v3734
      %3857 = vmatprep.subr.mxu0 0.0
      %3858 = vmatpush1.msra.mxu0 %v3737
      %3859 = vmatprep.subr.mxu0 0.0
      %3860 = vmatpush1.msra.mxu0 %v3740
      %3861 = vmatprep.subr.mxu0 0.0
      %3862 = vmatpush1.msra.mxu0 %v3743
      %3863 = vmatprep.subr.mxu0 0.0
      %3864 = vmatpush1.msra.mxu0 0.0
      %3865 = vmatprep.subr.mxu0 0.0
      %3866 = vmatpush1.msra.mxu0 0.0
      %3867 = vmatprep.subr.mxu0 0.0
      %3868 = vmatpush1.msra.mxu0 0.0
      %3869 = vmatprep.subr.mxu0 0.0
      %3870 = vmatpush1.msra.mxu0 0.0
      %3871 = vmatprep.subr.mxu0 0.0
      %3872 = vmatpush1.msra.mxu0 0.0
      %3873 = vmatprep.subr.mxu0 0.0
      %3874 = vmatpush1.msra.mxu0 0.0
      %3875 = vmatprep.subr.mxu0 0.0
      %3876 = vmatpush1.msra.mxu0 0.0
      %3877 = vmatprep.subr.mxu0 0.0
      %3878 = vmatpush1.msra.mxu0 0.0
      %3879 = vmatprep.subr.mxu0 0.0
      %3880 = vmatpush1.msra.mxu0 0.0
      %3881 = vmatprep.subr.mxu0 0.0
      %3882 = vmatpush1.msra.mxu0 0.0
      %3883 = vmatprep.subr.mxu0 0.0
      %3884 = vmatpush1.msra.mxu0 0.0
      %3885 = vmatprep.subr.mxu0 0.0
      %3886 = vmatpush1.msra.mxu0 0.0
      %3887 = vmatprep.subr.mxu0 0.0
      %3888 = vmatpush1.msra.mxu0 0.0
      %3889 = vmatprep.subr.mxu0 0.0
      %3890 = vmatpush1.msra.mxu0 0.0
      %3891 = vmatprep.subr.mxu0 0.0
      %3892 = vmatpush1.msra.mxu0 0.0
      %3893 = vmatprep.subr.mxu0 0.0
      %3894 = vmatpush1.msra.mxu0 0.0
      %3895 = vmatprep.subr.mxu0 0.0
      %3896 = vmatpush1.msra.mxu0 0.0
      %3897 = vmatprep.subr.mxu0 0.0
      %3898 = vmatpush1.msra.mxu0 0.0
      %3899 = vmatprep.subr.mxu0 0.0
      %3900 = vmatpush1.msra.mxu0 0.0
      %3901 = vmatprep.subr.mxu0 0.0
      %3902 = vmatpush1.msra.mxu0 0.0
      %3903 = vmatprep.subr.mxu0 0.0
      %3904 = vmatpush1.msra.mxu0 0.0
      %3905 = vmatprep.subr.mxu0 0.0
      %3906 = vmatpush1.msra.mxu0 0.0
      %3907 = vmatprep.subr.mxu0 0.0
      %3908 = vmatpush1.msra.mxu0 0.0
      %3909 = vmatprep.mubr.f32.mxu0 0.0
      %3910 = vmatmul.mubr.f32.gmra.mrb[0].mxu0 %v3772
      %v3911 = vpop.f32.mrb[0].mxu0
      %v3912 = vadd.f32 %v3643, %v3911
      %v3913 = vpop.f32.mrb[0].mxu0
      %3914 = vdwg.mxu0
      %v3915 = vld [vmem:[#allocation2 + $0x8] sm:$0xff]
      %v3916 = vld [vmem:[#allocation2 + $0x10] sm:$0xff]
      %v3917 = vld [vmem:[#allocation2 + $0x18] sm:$0xff]
      %v3918 = vadd.f32 %v3841, %v3915
      %v3919 = vadd.f32 %v3843, %v3916
      %v3920 = vadd.f32 %v3912, %v3917
      %v3921 = vsel %vm596, %v3918, 0.0
      %v3922 = vsel %vm597, %v3919, 0.0
      %v3923 = vsel %vm598, %v3920, 0.0
      %3924 = vst [vmem:[#allocation2 + $0x8] sm:$0xff] %v3921
      %3925 = vst [vmem:[#allocation2 + $0x10] sm:$0xff] %v3922
      %3926 = vst.msk [vmem:[#allocation2 + $0x18] sm:$0xff] %vm604, %v3923
      %v3927 = vld [vmem:[#allocation2] sm:$0xff]
      %v3928 = vld [vmem:[#allocation2 + $0x8] sm:$0xff]
      %v3929 = vld [vmem:[#allocation2 + $0x10] sm:$0xff]
      %v3930 = vld [vmem:[#allocation2 + $0x18] sm:$0xff]
      %3935 = vrot.lane.b32.xlu0 %v3927, 127
      %v3936 = vpop.permute.xlu0 %3935
      %3937 = vrot.lane.b32.xlu0 %v3928, 127
      %v3938 = vpop.permute.xlu0 %3937
      %3939 = vrot.lane.b32.xlu0 %v3929, 127
      %v3940 = vpop.permute.xlu0 %3939
      %3941 = vrot.lane.b32.xlu0 %v3930, 127
      %v3942 = vpop.permute.xlu0 %3941
      %v3943 = vsel %vm228, %v3936, %v3938
      %v3944 = vsel %vm228, %v3938, %v3940
      %v3945 = vsel %vm228, %v3940, %v3942
      %3946 = vrot.lane.b32.xlu0 %v3927, 126
      %v3947 = vpop.permute.xlu0 %3946
      %3948 = vrot.lane.b32.xlu0 %v3928, 126
      %v3949 = vpop.permute.xlu0 %3948
      %3950 = vrot.lane.b32.xlu0 %v3929, 126
      %v3951 = vpop.permute.xlu0 %3950
      %3952 = vrot.lane.b32.xlu0 %v3930, 126
      %v3953 = vpop.permute.xlu0 %3952
      %v3954 = vsel %vm240, %v3947, %v3949
      %v3955 = vsel %vm240, %v3949, %v3951
      %v3956 = vsel %vm240, %v3951, %v3953
      %3957 = vrot.lane.b32.xlu0 %v3927, 110
      %v3958 = vpop.permute.xlu0 %3957
      %3959 = vrot.lane.b32.xlu0 %v3928, 110
      %v3960 = vpop.permute.xlu0 %3959
      %3961 = vrot.lane.b32.xlu0 %v3929, 110
      %v3962 = vpop.permute.xlu0 %3961
      %3963 = vrot.lane.b32.xlu0 %v3930, 110
      %v3964 = vpop.permute.xlu0 %3963
      %v3965 = vsel %vm252, %v3958, %v3960
      %v3966 = vsel %vm252, %v3960, %v3962
      %v3967 = vsel %vm252, %v3962, %v3964
      %3968 = vrot.lane.b32.xlu0 %v3928, 109
      %v3969 = vpop.permute.xlu0 %3968
      %3970 = vrot.lane.b32.xlu0 %v3929, 109
      %v3971 = vpop.permute.xlu0 %3970
      %3972 = vrot.lane.b32.xlu0 %v3930, 109
      %v3973 = vpop.permute.xlu0 %3972
      %v3974 = vsel %vm262, %v3969, %v3971
      %v3975 = vsel %vm262, %v3971, %v3973
      %3976 = vrot.lane.b32.xlu0 %v3928, 108
      %v3977 = vpop.permute.xlu0 %3976
      %3978 = vrot.lane.b32.xlu0 %v3929, 108
      %v3979 = vpop.permute.xlu0 %3978
      %3980 = vrot.lane.b32.xlu0 %v3930, 108
      %v3981 = vpop.permute.xlu0 %3980
      %v3982 = vsel %vm271, %v3977, %v3979
      %v3983 = vsel %vm271, %v3979, %v3981
      %3984 = vrot.lane.b32.xlu0 %v3928, 92
      %v3985 = vpop.permute.xlu0 %3984
      %3986 = vrot.lane.b32.xlu0 %v3929, 92
      %v3987 = vpop.permute.xlu0 %3986
      %3988 = vrot.lane.b32.xlu0 %v3930, 92
      %v3989 = vpop.permute.xlu0 %3988
      %v3990 = vsel %vm280, %v3985, %v3987
      %v3991 = vsel %vm280, %v3987, %v3989
      %3992 = vrot.lane.b32.xlu0 %v3928, 91
      %v3993 = vpop.permute.xlu0 %3992
      %3994 = vrot.lane.b32.xlu0 %v3929, 91
      %v3995 = vpop.permute.xlu0 %3994
      %3996 = vrot.lane.b32.xlu0 %v3930, 91
      %v3997 = vpop.permute.xlu0 %3996
      %v3998 = vsel %vm289, %v3993, %v3995
      %v3999 = vsel %vm289, %v3995, %v3997
      %4000 = vrot.lane.b32.xlu0 %v3928, 90
      %v4001 = vpop.permute.xlu0 %4000
      %4002 = vrot.lane.b32.xlu0 %v3929, 90
      %v4003 = vpop.permute.xlu0 %4002
      %4004 = vrot.lane.b32.xlu0 %v3930, 90
      %v4005 = vpop.permute.xlu0 %4004
      %v4006 = vsel %vm298, %v4001, %v4003
      %v4007 = vsel %vm298, %v4003, %v4005
      %s4008 = scalar_lea.vmem %s1, 32
      %v4009 = vld [vmem:[%s4008] sm:$0xff]
      %s4010 = scalar_lea.vmem %s2, 32
      %v4011 = vld [vmem:[%s4010] sm:$0xff]
      %4013 = vset.pattern.permute.xlu0 0
      %4014 = vperm.xlu0 %4013, %v4011
      %v4015 = vpop.permute.xlu0 %4014
      %4017 = vrot.lane.b32.xlu0 %v3927, 19
      %v4018 = vpop.permute.xlu0 %4017
      %4019 = vrot.lane.b32.xlu0 %v3928, 19
      %v4020 = vpop.permute.xlu0 %4019
      %4021 = vrot.lane.b32.xlu0 %v3929, 19
      %v4022 = vpop.permute.xlu0 %4021
      %4023 = vrot.lane.b32.xlu0 %v3930, 19
      %v4024 = vpop.permute.xlu0 %4023
      %4025 = vrot.lane.b32.xlu0 %v3943, 19
      %v4026 = vpop.permute.xlu0 %4025
      %4027 = vrot.lane.b32.xlu0 %v3944, 19
      %v4028 = vpop.permute.xlu0 %4027
      %4029 = vrot.lane.b32.xlu0 %v3945, 19
      %v4030 = vpop.permute.xlu0 %4029
      %4031 = vrot.lane.b32.xlu0 %v3942, 19
      %v4032 = vpop.permute.xlu0 %4031
      %4033 = vrot.lane.b32.xlu0 %v3954, 19
      %v4034 = vpop.permute.xlu0 %4033
      %4035 = vrot.lane.b32.xlu0 %v3955, 19
      %v4036 = vpop.permute.xlu0 %4035
      %4037 = vrot.lane.b32.xlu0 %v3956, 19
      %v4038 = vpop.permute.xlu0 %4037
      %4039 = vrot.lane.b32.xlu0 %v3953, 19
      %v4040 = vpop.permute.xlu0 %4039
      %4041 = vrot.lane.b32.xlu0 %v3965, 19
      %v4042 = vpop.permute.xlu0 %4041
      %4043 = vrot.lane.b32.xlu0 %v3966, 19
      %v4044 = vpop.permute.xlu0 %4043
      %4045 = vrot.lane.b32.xlu0 %v3967, 19
      %v4046 = vpop.permute.xlu0 %4045
      %4047 = vrot.lane.b32.xlu0 %v3964, 19
      %v4048 = vpop.permute.xlu0 %4047
      %4049 = vrot.lane.b32.xlu0 %v3969, 19
      %v4050 = vpop.permute.xlu0 %4049
      %4051 = vrot.lane.b32.xlu0 %v3974, 19
      %v4052 = vpop.permute.xlu0 %4051
      %4053 = vrot.lane.b32.xlu0 %v3975, 19
      %v4054 = vpop.permute.xlu0 %4053
      %4055 = vrot.lane.b32.xlu0 %v3973, 19
      %v4056 = vpop.permute.xlu0 %4055
      %4057 = vrot.lane.b32.xlu0 %v3977, 19
      %v4058 = vpop.permute.xlu0 %4057
      %4059 = vrot.lane.b32.xlu0 %v3982, 19
      %v4060 = vpop.permute.xlu0 %4059
      %4061 = vrot.lane.b32.xlu0 %v3983, 19
      %v4062 = vpop.permute.xlu0 %4061
      %4063 = vrot.lane.b32.xlu0 %v3981, 19
      %v4064 = vpop.permute.xlu0 %4063
      %4065 = vrot.lane.b32.xlu0 %v3985, 19
      %v4066 = vpop.permute.xlu0 %4065
      %4067 = vrot.lane.b32.xlu0 %v3990, 19
      %v4068 = vpop.permute.xlu0 %4067
      %4069 = vrot.lane.b32.xlu0 %v3991, 19
      %v4070 = vpop.permute.xlu0 %4069
      %4071 = vrot.lane.b32.xlu0 %v3989, 19
      %v4072 = vpop.permute.xlu0 %4071
      %4073 = vrot.lane.b32.xlu0 %v3993, 19
      %v4074 = vpop.permute.xlu0 %4073
      %4075 = vrot.lane.b32.xlu0 %v3998, 19
      %v4076 = vpop.permute.xlu0 %4075
      %4077 = vrot.lane.b32.xlu0 %v3999, 19
      %v4078 = vpop.permute.xlu0 %4077
      %4079 = vrot.lane.b32.xlu0 %v3997, 19
      %v4080 = vpop.permute.xlu0 %4079
      %4081 = vrot.lane.b32.xlu0 %v4001, 19
      %v4082 = vpop.permute.xlu0 %4081
      %4083 = vrot.lane.b32.xlu0 %v4006, 19
      %v4084 = vpop.permute.xlu0 %4083
      %4085 = vrot.lane.b32.xlu0 %v4007, 19
      %v4086 = vpop.permute.xlu0 %4085
      %4087 = vrot.lane.b32.xlu0 %v4005, 19
      %v4088 = vpop.permute.xlu0 %4087
      %v4089 = vsel %vm380, %v4018, %v4020
      %v4090 = vsel %vm380, %v4020, %v4022
      %v4091 = vsel %vm380, %v4022, %v4024
      %v4092 = vsel %vm380, %v4026, %v4028
      %v4093 = vsel %vm380, %v4028, %v4030
      %v4094 = vsel %vm380, %v4030, %v4032
      %v4095 = vsel %vm380, %v4034, %v4036
      %v4096 = vsel %vm380, %v4036, %v4038
      %v4097 = vsel %vm380, %v4038, %v4040
      %v4098 = vsel %vm380, %v4042, %v4044
      %v4099 = vsel %vm380, %v4044, %v4046
      %v4100 = vsel %vm380, %v4046, %v4048
      %v4101 = vsel %vm380, %v4050, %v4052
      %v4102 = vsel %vm380, %v4052, %v4054
      %v4103 = vsel %vm380, %v4054, %v4056
      %v4104 = vsel %vm380, %v4058, %v4060
      %v4105 = vsel %vm380, %v4060, %v4062
      %v4106 = vsel %vm380, %v4062, %v4064
      %v4107 = vsel %vm380, %v4066, %v4068
      %v4108 = vsel %vm380, %v4068, %v4070
      %v4109 = vsel %vm380, %v4070, %v4072
      %v4110 = vsel %vm380, %v4074, %v4076
      %v4111 = vsel %vm380, %v4076, %v4078
      %v4112 = vsel %vm380, %v4078, %v4080
      %v4113 = vsel %vm380, %v4082, %v4084
      %v4114 = vsel %vm380, %v4084, %v4086
      %v4115 = vsel %vm380, %v4086, %v4088
      %v4144 = vsel %vm435, %v4009, 0
      %4146 = vmatprep.subr.mxu0 %v4090
      %4147 = vmatpush1.msra.mxu0 %v4089
      %4148 = vmatprep.subr.mxu0 %v4093
      %4149 = vmatpush1.msra.mxu0 %v4092
      %4150 = vmatprep.subr.mxu0 %v4096
      %4151 = vmatpush1.msra.mxu0 %v4095
      %4152 = vmatprep.subr.mxu0 %v4099
      %4153 = vmatpush1.msra.mxu0 %v4098
      %4154 = vmatprep.subr.mxu0 %v4102
      %4155 = vmatpush1.msra.mxu0 %v4101
      %4156 = vmatprep.subr.mxu0 %v4105
      %4157 = vmatpush1.msra.mxu0 %v4104
      %4158 = vmatprep.subr.mxu0 %v4108
      %4159 = vmatpush1.msra.mxu0 %v4107
      %4160 = vmatprep.subr.mxu0 %v4111
      %4161 = vmatpush1.msra.mxu0 %v4110
      %4162 = vmatprep.subr.mxu0 %v4114
      %4163 = vmatpush1.msra.mxu0 %v4113
      %4164 = vmatprep.subr.mxu0 0.0
      %4165 = vmatpush1.msra.mxu0 0.0
      %4166 = vmatprep.subr.mxu0 0.0
      %4167 = vmatpush1.msra.mxu0 0.0
      %4168 = vmatprep.subr.mxu0 0.0
      %4169 = vmatpush1.msra.mxu0 0.0
      %4170 = vmatprep.subr.mxu0 0.0
      %4171 = vmatpush1.msra.mxu0 0.0
      %4172 = vmatprep.subr.mxu0 0.0
      %4173 = vmatpush1.msra.mxu0 0.0
      %4174 = vmatprep.subr.mxu0 0.0
      %4175 = vmatpush1.msra.mxu0 0.0
      %4176 = vmatprep.subr.mxu0 0.0
      %4177 = vmatpush1.msra.mxu0 0.0
      %4178 = vmatprep.subr.mxu0 0.0
      %4179 = vmatpush1.msra.mxu0 0.0
      %4180 = vmatprep.subr.mxu0 0.0
      %4181 = vmatpush1.msra.mxu0 0.0
      %4182 = vmatprep.subr.mxu0 0.0
      %4183 = vmatpush1.msra.mxu0 0.0
      %4184 = vmatprep.subr.mxu0 0.0
      %4185 = vmatpush1.msra.mxu0 0.0
      %4186 = vmatprep.subr.mxu0 0.0
      %4187 = vmatpush1.msra.mxu0 0.0
      %4188 = vmatprep.subr.mxu0 0.0
      %4189 = vmatpush1.msra.mxu0 0.0
      %4190 = vmatprep.subr.mxu0 0.0
      %4191 = vmatpush1.msra.mxu0 0.0
      %4192 = vmatprep.subr.mxu0 0.0
      %4193 = vmatpush1.msra.mxu0 0.0
      %4194 = vmatprep.subr.mxu0 0.0
      %4195 = vmatpush1.msra.mxu0 0.0
      %4196 = vmatprep.subr.mxu0 0.0
      %4197 = vmatpush1.msra.mxu0 0.0
      %4198 = vmatprep.subr.mxu0 0.0
      %4199 = vmatpush1.msra.mxu0 0.0
      %4200 = vmatprep.subr.mxu0 0.0
      %4201 = vmatpush1.msra.mxu0 0.0
      %4202 = vmatprep.subr.mxu0 0.0
      %4203 = vmatpush1.msra.mxu0 0.0
      %4204 = vmatprep.subr.mxu0 0.0
      %4205 = vmatpush1.msra.mxu0 0.0
      %4206 = vmatprep.subr.mxu0 0.0
      %4207 = vmatpush1.msra.mxu0 0.0
      %4208 = vmatprep.subr.mxu0 0.0
      %4209 = vmatpush1.msra.mxu0 0.0
      %4210 = vmatprep.mubr.f32.mxu0 0.0
      %4211 = vmatmul.mubr.f32.gmra.mrb[0].mxu0 %v4144
      %v4212 = vpop.f32.mrb[0].mxu0
      %v4213 = vadd.f32 %v4015, %v4212
      %v4214 = vpop.f32.mrb[0].mxu0
      %v4215 = vadd.f32 %v4015, %v4214
      %4216 = vdwg.mxu0
      %4217 = vmatprep.subr.mxu0 0.0
      %4218 = vmatpush1.msra.mxu0 %v4091
      %4219 = vmatprep.subr.mxu0 0.0
      %4220 = vmatpush1.msra.mxu0 %v4094
      %4221 = vmatprep.subr.mxu0 0.0
      %4222 = vmatpush1.msra.mxu0 %v4097
      %4223 = vmatprep.subr.mxu0 0.0
      %4224 = vmatpush1.msra.mxu0 %v4100
      %4225 = vmatprep.subr.mxu0 0.0
      %4226 = vmatpush1.msra.mxu0 %v4103
      %4227 = vmatprep.subr.mxu0 0.0
      %4228 = vmatpush1.msra.mxu0 %v4106
      %4229 = vmatprep.subr.mxu0 0.0
      %4230 = vmatpush1.msra.mxu0 %v4109
      %4231 = vmatprep.subr.mxu0 0.0
      %4232 = vmatpush1.msra.mxu0 %v4112
      %4233 = vmatprep.subr.mxu0 0.0
      %4234 = vmatpush1.msra.mxu0 %v4115
      %4235 = vmatprep.subr.mxu0 0.0
      %4236 = vmatpush1.msra.mxu0 0.0
      %4237 = vmatprep.subr.mxu0 0.0
      %4238 = vmatpush1.msra.mxu0 0.0
      %4239 = vmatprep.subr.mxu0 0.0
      %4240 = vmatpush1.msra.mxu0 0.0
      %4241 = vmatprep.subr.mxu0 0.0
      %4242 = vmatpush1.msra.mxu0 0.0
      %4243 = vmatprep.subr.mxu0 0.0
      %4244 = vmatpush1.msra.mxu0 0.0
      %4245 = vmatprep.subr.mxu0 0.0
      %4246 = vmatpush1.msra.mxu0 0.0
      %4247 = vmatprep.subr.mxu0 0.0
      %4248 = vmatpush1.msra.mxu0 0.0
      %4249 = vmatprep.subr.mxu0 0.0
      %4250 = vmatpush1.msra.mxu0 0.0
      %4251 = vmatprep.subr.mxu0 0.0
      %4252 = vmatpush1.msra.mxu0 0.0
      %4253 = vmatprep.subr.mxu0 0.0
      %4254 = vmatpush1.msra.mxu0 0.0
      %4255 = vmatprep.subr.mxu0 0.0
      %4256 = vmatpush1.msra.mxu0 0.0
      %4257 = vmatprep.subr.mxu0 0.0
      %4258 = vmatpush1.msra.mxu0 0.0
      %4259 = vmatprep.subr.mxu0 0.0
      %4260 = vmatpush1.msra.mxu0 0.0
      %4261 = vmatprep.subr.mxu0 0.0
      %4262 = vmatpush1.msra.mxu0 0.0
      %4263 = vmatprep.subr.mxu0 0.0
      %4264 = vmatpush1.msra.mxu0 0.0
      %4265 = vmatprep.subr.mxu0 0.0
      %4266 = vmatpush1.msra.mxu0 0.0
      %4267 = vmatprep.subr.mxu0 0.0
      %4268 = vmatpush1.msra.mxu0 0.0
      %4269 = vmatprep.subr.mxu0 0.0
      %4270 = vmatpush1.msra.mxu0 0.0
      %4271 = vmatprep.subr.mxu0 0.0
      %4272 = vmatpush1.msra.mxu0 0.0
      %4273 = vmatprep.subr.mxu0 0.0
      %4274 = vmatpush1.msra.mxu0 0.0
      %4275 = vmatprep.subr.mxu0 0.0
      %4276 = vmatpush1.msra.mxu0 0.0
      %4277 = vmatprep.subr.mxu0 0.0
      %4278 = vmatpush1.msra.mxu0 0.0
      %4279 = vmatprep.subr.mxu0 0.0
      %4280 = vmatpush1.msra.mxu0 0.0
      %4281 = vmatprep.mubr.f32.mxu0 0.0
      %4282 = vmatmul.mubr.f32.gmra.mrb[0].mxu0 %v4144
      %v4283 = vpop.f32.mrb[0].mxu0
      %v4284 = vadd.f32 %v4015, %v4283
      %v4285 = vpop.f32.mrb[0].mxu0
      %4286 = vdwg.mxu0
      %v4287 = vsel %vm596, %v4213, 0.0
      %v4288 = vsel %vm597, %v4215, 0.0
      %v4289 = vsel %vm598, %v4284, 0.0
      %4290 = vst [vmem:[#allocation3 + $0x8] sm:$0xff] %v4287
      %4291 = vst [vmem:[#allocation3 + $0x10] sm:$0xff] %v4288
      %4292 = vst.msk [vmem:[#allocation3 + $0x18] sm:$0xff] %vm604, %v4289
      %v4293 = vld [vmem:[#allocation3] sm:$0xff]
      %v4294 = vld [vmem:[#allocation3 + $0x8] sm:$0xff]
      %v4295 = vld [vmem:[#allocation3 + $0x10] sm:$0xff]
      %v4296 = vld [vmem:[#allocation3 + $0x18] sm:$0xff]
      %4297 = vst [vmem:[%s197] sm:$0xff] %v4293
      %4298 = vst [vmem:[%s197 + $0x8] sm:$0xff] %v4294
      %4299 = vst [vmem:[%s197 + $0x10] sm:$0xff] %v4295
      %4300 = vst [vmem:[%s197 + $0x18] sm:$0xff] %v4296
      %p4301 = scmp.lt.s32.totalorder %s15, 1
      %s4302 = scalar_select %p4301, %s15, 1
      %s4303 = smul.addr %s4302, 4
      %s4304 = smul.addr %s4303, 8
      %s4305 = scalar_lea.vmem %s4, %s4304
      // Predicated region
      $region37: #{drrn_forward.1} parent=35 // pred_check
        %p4306 = pneg %p122
      $region38: #{drrn_forward.1} parent=35 // pred_check_branch
        %4308 = sbr.rel (%p4306) target = $region40
      $region39: #{drrn_forward.1} parent=35 // pred_region
        _
      $region40: #{drrn_forward.1} parent=35 // pred_fallthru
        _
    $region36: #{drrn_forward.1} parent=5 // pred_fallthru
      _
    %p4309 = scmp.le.s32.totalorder 2, %s10
    // Predicated region
    $region41: #{drrn_forward.1} parent=5 // pred_check
      %p4310 = pneg %p4309
    $region42: #{drrn_forward.1} parent=5 // pred_check_branch
      %4312 = sbr.rel (%p4310) target = $region44
    $region43: #{drrn_forward.1} parent=5 // pred_region
      %s4313 = ssub.s32 %s10, 2
      // Predicated region
      $region45: #{drrn_forward.1} parent=43 // pred_check
        %p4314 = pneg %p128
      $region46: #{drrn_forward.1} parent=43 // pred_check_branch
        %4316 = sbr.rel (%p4314) target = $region48
      $region47: #{drrn_forward.1} parent=43 // pred_region
        %p4317 = scmp.lt.s32.totalorder %s16, 1
        %s4318 = scalar_select %p4317, %s16, 1
        %s4319 = smul.addr %s4318, 4
        %s4320 = smul.addr %s4319, 8
        %s4321 = scalar_lea.vmem %s4, %s4320
      $region48: #{drrn_forward.1} parent=43 // pred_fallthru
        _
    $region44: #{drrn_forward.1} parent=5 // pred_fallthru
      _
  $region6: #{drrn_forward.1} parent=0 // loop_footer
    %s14 = sadd.s32 1, %s10
  $region7: #{drrn_forward.1} parent=0 // loop_footer_branch
    %9 = sbr.rel target = $region3
  $region8: #{drrn_forward.1} parent=0 // loop_exit
    _

</llo_original>
